<compile_context>
chip_gen: v7x
topology: tpu7x:2x2x1
jax: 0.10.0
libtpu: 0.0.40
codegen_flags: <defaults>
</compile_context>

<pallas_src>
import functools

import jax
import jax.numpy as jnp
from jax.experimental import pallas as pl
from jax.experimental.pallas import tpu as pltpu

BN_EPS = 1e-5
LANE = 128                            # lane width: channel dims padded to this
TARGET_BLOCK_PIXELS = 4096            # rows*W per grid step (~10-12 MiB working set)
VMEM_LIMIT_BYTES = 32 * 1024 * 1024   # raise v5e's 16 MiB scoped default


def _round_up(x, m):
    return ((x + m - 1) // m) * m


def _pick_block_h(h, w):
    """Largest multiple-of-8 divisor of h with block_h * w <= TARGET_BLOCK_PIXELS."""
    best = 8
    for bh in range(8, h + 1, 8):
        if h % bh == 0 and bh * w <= TARGET_BLOCK_PIXELS:
            best = bh
    return best


# ----------------------------------------------------------------------------
# Pass A: row-tiled implicit-GEMM conv (3 dots, K=3*Cin_pad) + partial BN stats
# ----------------------------------------------------------------------------
def _conv_stats_kernel(cur_ref, prev_ref, next_ref, w_ref, conv_ref, stats_ref,
                       *, bh, w, cin_p, cout_p):
    # cur_ref  : (1, bh, W+2, Cin_p)  bf16 current row block (width zero-padded)
    # prev_ref : (1, 8,  W+2, Cin_p)  bf16 block ending at row i*bh   (last row = top halo)
    # next_ref : (1, 8,  W+2, Cin_p)  bf16 block starting at (i+1)*bh (first row = bottom halo)
    # w_ref    : (3, 3*Cin_p, Cout_p) bf16 weights, dy-major, (dx, cin) folded into K
    # conv_ref : (1, bh, W, Cout_p)   bf16 conv output rows
    # stats_ref: (1, 1, 8, Cout_p)    f32  row0 = per-channel sum, row1 = sum of squares
    i = pl.program_id(1)
    n_blk = pl.num_programs(1)

    cur = cur_ref[0]
    top_scale = jnp.where(i == 0, 0.0, 1.0).astype(cur.dtype)        # zero halo at image top
    bot_scale = jnp.where(i == n_blk - 1, 0.0, 1.0).astype(cur.dtype)  # zero halo at bottom
    top = prev_ref[0, 7] * top_scale
    bot = next_ref[0, 0] * bot_scale
    win = jnp.concatenate([top[None], cur, bot[None]], axis=0)       # (bh+2, W+2, Cin_p)

    acc = jnp.zeros((bh * w, cout_p), jnp.float32)
    for dy in range(3):       # 3 MXU dots with K = 3*Cin_p (dx folded into contraction)
        rows = win[dy:dy + bh]                                       # (bh, W+2, Cin_p)
        patch = jnp.concatenate(
            [rows[:, 0:w], rows[:, 1:w + 1], rows[:, 2:w + 2]], axis=-1)
        acc = acc + jnp.dot(patch.reshape(bh * w, 3 * cin_p), w_ref[dy],
                            preferred_element_type=jnp.float32)

    conv_ref[0] = acc.reshape(bh, w, cout_p).astype(conv_ref.dtype)

    s = jnp.sum(acc, axis=0, keepdims=True)
    q = jnp.sum(acc * acc, axis=0, keepdims=True)
    stats_ref[0, 0] = jnp.concatenate(
        [s, q, jnp.zeros((6, cout_p), jnp.float32)], axis=0)


def conv_stats(x_pad, w3, *, bh):
    n, h, wp2, cin_p = x_pad.shape
    w = wp2 - 2
    cout_p = w3.shape[-1]
    hb = h // bh
    h8 = h // 8
    kernel = functools.partial(_conv_stats_kernel, bh=bh, w=w, cin_p=cin_p, cout_p=cout_p)
    flops = 2 * n * h * w * 9 * cin_p * cout_p
    bytes_acc = 2 * (x_pad.size + w3.size + n * h * w * cout_p) + 4 * n * hb * 8 * cout_p
    return pl.pallas_call(
        kernel,
        out_shape=(jax.ShapeDtypeStruct((n, h, w, cout_p), jnp.bfloat16),
                   jax.ShapeDtypeStruct((n, hb, 8, cout_p), jnp.float32)),
        grid=(n, hb),
        in_specs=[
            pl.BlockSpec((1, bh, wp2, cin_p), lambda ni, bi: (ni, bi, 0, 0)),
            pl.BlockSpec((1, 8, wp2, cin_p),
                         lambda ni, bi: (ni, jnp.maximum(bi * (bh // 8) - 1, 0), 0, 0)),
            pl.BlockSpec((1, 8, wp2, cin_p),
                         lambda ni, bi: (ni, jnp.minimum((bi + 1) * (bh // 8), h8 - 1), 0, 0)),
            pl.BlockSpec((3, 3 * cin_p, cout_p), lambda ni, bi: (0, 0, 0)),   # VMEM resident
        ],
        out_specs=(
            pl.BlockSpec((1, bh, w, cout_p), lambda ni, bi: (ni, bi, 0, 0)),
            pl.BlockSpec((1, 1, 8, cout_p), lambda ni, bi: (ni, bi, 0, 0)),
        ),
        compiler_params=pltpu.CompilerParams(
            dimension_semantics=("parallel", "parallel"),
            vmem_limit_bytes=VMEM_LIMIT_BYTES),
        cost_estimate=pl.CostEstimate(flops=flops, transcendentals=0,
                                      bytes_accessed=bytes_acc),
    )(x_pad, x_pad, x_pad, w3)


# ----------------------------------------------------------------------------
# Pass B: precomputed BN scale/shift + ReLU, writes width-padded bf16 layout
# ----------------------------------------------------------------------------
def _bn_relu_kernel(conv_ref, scale_ref, shift_ref, out_ref):
    y = conv_ref[0].astype(jnp.float32) * scale_ref[...] + shift_ref[...]
    y = jnp.maximum(y, 0.0).astype(out_ref.dtype)                    # (bh, W, Cout_p)
    zcol = jnp.zeros((y.shape[0], 1, y.shape[-1]), out_ref.dtype)
    out_ref[0] = jnp.concatenate([zcol, y, zcol], axis=1)            # zero W border for next stage


def bn_relu(conv, scale, shift, *, bh):
    n, h, w, cout_p = conv.shape
    hb = h // bh
    wp2 = w + 2
    return pl.pallas_call(
        _bn_relu_kernel,
        out_shape=jax.ShapeDtypeStruct((n, h, wp2, cout_p), jnp.bfloat16),
        grid=(n, hb),
        in_specs=[
            pl.BlockSpec((1, bh, w, cout_p), lambda ni, bi: (ni, bi, 0, 0)),
            pl.BlockSpec((1, cout_p), lambda ni, bi: (0, 0)),        # VMEM resident
            pl.BlockSpec((1, cout_p), lambda ni, bi: (0, 0)),        # VMEM resident
        ],
        out_specs=pl.BlockSpec((1, bh, wp2, cout_p), lambda ni, bi: (ni, bi, 0, 0)),
        compiler_params=pltpu.CompilerParams(
            dimension_semantics=("parallel", "parallel"),
            vmem_limit_bytes=VMEM_LIMIT_BYTES),
        cost_estimate=pl.CostEstimate(flops=3 * n * h * w * cout_p, transcendentals=0,
                                      bytes_accessed=2 * (conv.size + n * h * wp2 * cout_p)),
    )(conv, scale, shift)


# ----------------------------------------------------------------------------
# One conv + BN(train batch stats) + ReLU stage
# ----------------------------------------------------------------------------
def conv_bn_relu_stage(x_pad, w3, gamma_p, beta_p, *, bh):
    n, h, wp2, _ = x_pad.shape
    w = wp2 - 2
    conv, pstats = conv_stats(x_pad, w3, bh=bh)
    stats = jnp.sum(pstats, axis=(0, 1))                             # (8, Cout_p) f32
    m = float(n * h * w)
    mean = stats[0:1] / m
    var = jnp.maximum(stats[1:2] / m - mean * mean, 0.0)
    # TODO(synk): one-pass E[x^2]-mean^2 can lose precision for large-mean /
    # tiny-variance channels vs PyTorch's two-pass BN; Welford would fix it.
    scale = gamma_p * jax.lax.rsqrt(var + BN_EPS)                    # (1, Cout_p)
    shift = beta_p - mean * scale
    return bn_relu(conv, scale, shift, bh=bh)


# ----------------------------------------------------------------------------
# Parameter preparation (PyTorch layouts -> kernel layouts, zero channel pad)
# ----------------------------------------------------------------------------
def prep_conv_weight(w_oihw, cin_p, cout_p):
    cout, cin, _, _ = w_oihw.shape
    w = jnp.transpose(w_oihw, (2, 3, 1, 0))                          # (ky, kx, cin, cout)
    w = jnp.pad(w, ((0, 0), (0, 0), (0, cin_p - cin), (0, cout_p - cout)))
    return w.reshape(3, 3 * cin_p, cout_p).astype(jnp.bfloat16)      # K index = dx*Cin_p + c


def prep_bn_param(p, cout_p):
    return jnp.pad(p.reshape(1, -1), ((0, 0), (0, cout_p - p.shape[0]))).astype(jnp.float32)


# ----------------------------------------------------------------------------
# DoubleConv forward (NCHW in, NCHW out — matches the PyTorch module)
# ----------------------------------------------------------------------------
def double_conv_forward(x_nchw, w1, g1, b1, w2, g2, b2, *, cout, block_h=None):
    n, cin, h, w = x_nchw.shape
    cin_p = w1.shape[1] // 3
    # TODO(synk): H/W not multiples of 8 would need a masked tail; UNet shapes satisfy this.
    assert h % 8 == 0 and w % 8 == 0
    bh = block_h if block_h is not None else _pick_block_h(h, w)
    assert bh % 8 == 0 and h % bh == 0

    # NCHW f32 -> width-zero-padded, channel-lane-padded NHWC bf16.
    # TODO(synk): for tiny real channel counts (4-8) the 128-lane channel pad is
    # wasteful (spatial-in-lanes would be better); >=64-channel UNet stages are
    # the intended regime for this layout.
    x = jnp.transpose(x_nchw, (0, 2, 3, 1)).astype(jnp.bfloat16)
    x = jnp.pad(x, ((0, 0), (0, 0), (1, 1), (0, cin_p - cin)))

    y1 = conv_bn_relu_stage(x, w1, g1, b1, bh=bh)     # (N, H, W+2, 128) bf16, zero W border
    y2 = conv_bn_relu_stage(y1, w2, g2, b2, bh=bh)

    out = y2[:, :, 1:w + 1, :cout]
    return jnp.transpose(out, (0, 3, 1, 2)).astype(jnp.float32)
    # TODO(synk): BatchNorm running_mean/running_var momentum updates (training
    # side effects) are not produced; they do not affect the returned tensor.


# ----------------------------------------------------------------------------
# Pure-JAX reference (Conv2d + train-mode BatchNorm2d + ReLU, f32)
# ----------------------------------------------------------------------------
def reference_forward(x_nchw, w1_oihw, g1, b1, w2_oihw, g2, b2):
    def conv(x, w):
        return jax.lax.conv_general_dilated(
            x, w, window_strides=(1, 1), padding=((1, 1), (1, 1)),
            dimension_numbers=("NCHW", "OIHW", "NCHW"))

    def bn_relu_ref(x, g, b):
        mean = jnp.mean(x, axis=(0, 2, 3), keepdims=True)
        var = jnp.mean((x - mean) ** 2, axis=(0, 2, 3), keepdims=True)
        y = (x - mean) * jax.lax.rsqrt(var + BN_EPS)
        y = y * g.reshape(1, -1, 1, 1) + b.reshape(1, -1, 1, 1)
        return jnp.maximum(y, 0.0)

    x = bn_relu_ref(conv(x_nchw, w1_oihw), g1, b1)
    x = bn_relu_ref(conv(x, w2_oihw), g2, b2)
    return x


if __name__ == "__main__":
    # DoubleConv(in_features=4, out_features=8) at a small spatial size.
    N, C_IN, C_OUT, H, W = 2, 4, 8, 16, 16
    CIN_PAD = _round_up(C_IN, LANE)
    COUT_PAD = _round_up(C_OUT, LANE)

    key = jax.random.PRNGKey(0)
    k_x, k_w1, k_w2, k_g1, k_b1, k_g2, k_b2 = jax.random.split(key, 7)

    x = jax.random.normal(k_x, (N, C_IN, H, W), dtype=jnp.float32)
    w1_oihw = jax.random.normal(k_w1, (C_OUT, C_IN, 3, 3), dtype=jnp.float32) * 0.1
    w2_oihw = jax.random.normal(k_w2, (C_OUT, C_OUT, 3, 3), dtype=jnp.float32) * 0.1
    g1 = 1.0 + 0.1 * jax.random.normal(k_g1, (C_OUT,), dtype=jnp.float32)
    b1 = 0.1 * jax.random.normal(k_b1, (C_OUT,), dtype=jnp.float32)
    g2 = 1.0 + 0.1 * jax.random.normal(k_g2, (C_OUT,), dtype=jnp.float32)
    b2 = 0.1 * jax.random.normal(k_b2, (C_OUT,), dtype=jnp.float32)

    w1 = prep_conv_weight(w1_oihw, CIN_PAD, COUT_PAD)
    w2 = prep_conv_weight(w2_oihw, COUT_PAD, COUT_PAD)
    g1p, b1p = prep_bn_param(g1, COUT_PAD), prep_bn_param(b1, COUT_PAD)
    g2p, b2p = prep_bn_param(g2, COUT_PAD), prep_bn_param(b2, COUT_PAD)

    fwd = jax.jit(double_conv_forward, static_argnames=("cout", "block_h"))

    ref = jax.block_until_ready(reference_forward(x, w1_oihw, g1, b1, w2_oihw, g2, b2))

    # Default block size (block_h == H here): exercises the image-boundary zero-halo path.
    out = jax.block_until_ready(fwd(x, w1, g1p, b1p, w2, g2p, b2p, cout=C_OUT))
    assert out.shape == (N, C_OUT, H, W), out.shape
    err = float(jnp.max(jnp.abs(out - ref)))
    assert err < 5e-2, f"max abs err {err}"          # bf16 MXU / bf16 activation tolerance

    # Forced 8-row blocks: exercises the cross-block halo path (prev/next row views).
    out8 = jax.block_until_ready(fwd(x, w1, g1p, b1p, w2, g2p, b2p, cout=C_OUT, block_h=8))
    err8 = float(jnp.max(jnp.abs(out8 - ref)))
    assert err8 < 5e-2, f"max abs err {err8}"

    print("KERNEL_OK")
</pallas_src>

<mosaic_0001>
module attributes {stable_mosaic.version = 11 : i64} {
  func.func @_conv_stats_kernel(%arg0: i32, %arg1: i32, %arg2: memref<1x16x18x128xbf16, #tpu.memory_space<vmem>>, %arg3: memref<1x8x18x128xbf16, #tpu.memory_space<vmem>>, %arg4: memref<1x8x18x128xbf16, #tpu.memory_space<vmem>>, %arg5: memref<3x384x128xbf16, #tpu.memory_space<vmem>>, %arg6: memref<1x16x16x128xbf16, #tpu.memory_space<vmem>>, %arg7: memref<1x1x8x128xf32, #tpu.memory_space<vmem>>) attributes {dimension_semantics = [#tpu.dimension_semantics<parallel>, #tpu.dimension_semantics<parallel>], iteration_bounds = array<i64: 2, 1>, scalar_prefetch = 0 : i64, scratch_operands = 0 : i64, tpu.core_type = #tpu.core_type<tc>, window_params = [{transform_indices = @transform_0, window_bounds = array<i64: 1, 16, 18, 128>}, {transform_indices = @transform_1, window_bounds = array<i64: 1, 8, 18, 128>}, {transform_indices = @transform_2, window_bounds = array<i64: 1, 8, 18, 128>}, {pipeline_mode = #tpu.pipeline_mode<synchronous>, transform_indices = @transform_3, window_bounds = array<i64: 3, 384, 128>}, {transform_indices = @transform_4, window_bounds = array<i64: 1, 16, 16, 128>}, {transform_indices = @transform_5, window_bounds = array<i64: 1, 1, 8, 128>}]} {
    %c0 = arith.constant 0 : index
    %c0_0 = arith.constant 0 : index
    %c0_1 = arith.constant 0 : index
    %c0_2 = arith.constant 0 : index
    %0 = vector.load %arg2[%c0, %c0_0, %c0_1, %c0_2] : memref<1x16x18x128xbf16, #tpu.memory_space<vmem>>, vector<1x16x18x128xbf16>
    %1 = vector.shape_cast %0 : vector<1x16x18x128xbf16> to vector<16x18x128xbf16>
    %c0_i32 = arith.constant 0 : i32
    %2 = arith.cmpi eq, %arg1, %c0_i32 : i32
    %cst = arith.constant 0.000000e+00 : f32
    %cst_3 = arith.constant 1.000000e+00 : f32
    %3 = arith.select %2, %cst, %cst_3 : f32
    %4 = arith.truncf %3 : f32 to bf16
    %c0_i32_4 = arith.constant 0 : i32
    %5 = arith.cmpi eq, %arg1, %c0_i32_4 : i32
    %cst_5 = arith.constant 0.000000e+00 : f32
    %cst_6 = arith.constant 1.000000e+00 : f32
    %6 = arith.select %5, %cst_5, %cst_6 : f32
    %7 = arith.truncf %6 : f32 to bf16
    %c0_7 = arith.constant 0 : index
    %c7 = arith.constant 7 : index
    %c0_8 = arith.constant 0 : index
    %c0_9 = arith.constant 0 : index
    %8 = vector.load %arg3[%c0_7, %c7, %c0_8, %c0_9] : memref<1x8x18x128xbf16, #tpu.memory_space<vmem>>, vector<1x1x18x128xbf16>
    %9 = vector.shape_cast %8 : vector<1x1x18x128xbf16> to vector<18x128xbf16>
    %10 = vector.broadcast %4 : bf16 to vector<18x128xbf16>
    %11 = arith.mulf %9, %10 : vector<18x128xbf16>
    %c0_10 = arith.constant 0 : index
    %c0_11 = arith.constant 0 : index
    %c0_12 = arith.constant 0 : index
    %c0_13 = arith.constant 0 : index
    %12 = vector.load %arg4[%c0_10, %c0_11, %c0_12, %c0_13] : memref<1x8x18x128xbf16, #tpu.memory_space<vmem>>, vector<1x1x18x128xbf16>
    %13 = vector.shape_cast %12 : vector<1x1x18x128xbf16> to vector<18x128xbf16>
    %14 = vector.broadcast %7 : bf16 to vector<18x128xbf16>
    %15 = arith.mulf %13, %14 : vector<18x128xbf16>
    %16 = vector.shape_cast %11 : vector<18x128xbf16> to vector<1x18x128xbf16>
    %17 = vector.shape_cast %15 : vector<18x128xbf16> to vector<1x18x128xbf16>
    %18 = tpu.concatenate %16, %1, %17 in 0 : vector<1x18x128xbf16>, vector<16x18x128xbf16>, vector<1x18x128xbf16> -> vector<18x18x128xbf16>
    %cst_14 = arith.constant 0.000000e+00 : f32
    %19 = vector.broadcast %cst_14 : f32 to vector<256x128xf32>
    %20 = vector.extract_strided_slice %18 {offsets = [0, 0, 0], sizes = [16, 18, 128], strides = [1, 1, 1]} : vector<18x18x128xbf16> to vector<16x18x128xbf16>
    %21 = vector.extract_strided_slice %20 {offsets = [0, 0, 0], sizes = [16, 16, 128], strides = [1, 1, 1]} : vector<16x18x128xbf16> to vector<16x16x128xbf16>
    %22 = vector.extract_strided_slice %20 {offsets = [0, 1, 0], sizes = [16, 16, 128], strides = [1, 1, 1]} : vector<16x18x128xbf16> to vector<16x16x128xbf16>
    %23 = vector.extract_strided_slice %20 {offsets = [0, 2, 0], sizes = [16, 16, 128], strides = [1, 1, 1]} : vector<16x18x128xbf16> to vector<16x16x128xbf16>
    %24 = tpu.concatenate %21, %22, %23 in 2 : vector<16x16x128xbf16>, vector<16x16x128xbf16>, vector<16x16x128xbf16> -> vector<16x16x384xbf16>
    %25 = vector.shape_cast %24 : vector<16x16x384xbf16> to vector<256x384xbf16>
    %c0_15 = arith.constant 0 : index
    %c0_16 = arith.constant 0 : index
    %c0_17 = arith.constant 0 : index
    %26 = vector.load %arg5[%c0_15, %c0_16, %c0_17] : memref<3x384x128xbf16, #tpu.memory_space<vmem>>, vector<1x384x128xbf16>
    %27 = vector.shape_cast %26 : vector<1x384x128xbf16> to vector<384x128xbf16>
    %cst_18 = arith.constant dense<0.000000e+00> : vector<256x128xf32>
    %28 = tpu.matmul %25, %27, %cst_18 {dimension_numbers = #tpu.dot_dimension_numbers<[1], [0], [0], [1], [0, 0, 1, 1], [], []>} : vector<256x384xbf16>, vector<384x128xbf16>, vector<256x128xf32> -> vector<256x128xf32>
    %29 = arith.addf %19, %28 : vector<256x128xf32>
    %30 = vector.extract_strided_slice %18 {offsets = [1, 0, 0], sizes = [16, 18, 128], strides = [1, 1, 1]} : vector<18x18x128xbf16> to vector<16x18x128xbf16>
    %31 = vector.extract_strided_slice %30 {offsets = [0, 0, 0], sizes = [16, 16, 128], strides = [1, 1, 1]} : vector<16x18x128xbf16> to vector<16x16x128xbf16>
    %32 = vector.extract_strided_slice %30 {offsets = [0, 1, 0], sizes = [16, 16, 128], strides = [1, 1, 1]} : vector<16x18x128xbf16> to vector<16x16x128xbf16>
    %33 = vector.extract_strided_slice %30 {offsets = [0, 2, 0], sizes = [16, 16, 128], strides = [1, 1, 1]} : vector<16x18x128xbf16> to vector<16x16x128xbf16>
    %34 = tpu.concatenate %31, %32, %33 in 2 : vector<16x16x128xbf16>, vector<16x16x128xbf16>, vector<16x16x128xbf16> -> vector<16x16x384xbf16>
    %35 = vector.shape_cast %34 : vector<16x16x384xbf16> to vector<256x384xbf16>
    %c1 = arith.constant 1 : index
    %c0_19 = arith.constant 0 : index
    %c0_20 = arith.constant 0 : index
    %36 = vector.load %arg5[%c1, %c0_19, %c0_20] : memref<3x384x128xbf16, #tpu.memory_space<vmem>>, vector<1x384x128xbf16>
    %37 = vector.shape_cast %36 : vector<1x384x128xbf16> to vector<384x128xbf16>
    %cst_21 = arith.constant dense<0.000000e+00> : vector<256x128xf32>
    %38 = tpu.matmul %35, %37, %cst_21 {dimension_numbers = #tpu.dot_dimension_numbers<[1], [0], [0], [1], [0, 0, 1, 1], [], []>} : vector<256x384xbf16>, vector<384x128xbf16>, vector<256x128xf32> -> vector<256x128xf32>
    %39 = arith.addf %29, %38 : vector<256x128xf32>
    %40 = vector.extract_strided_slice %18 {offsets = [2, 0, 0], sizes = [16, 18, 128], strides = [1, 1, 1]} : vector<18x18x128xbf16> to vector<16x18x128xbf16>
    %41 = vector.extract_strided_slice %40 {offsets = [0, 0, 0], sizes = [16, 16, 128], strides = [1, 1, 1]} : vector<16x18x128xbf16> to vector<16x16x128xbf16>
    %42 = vector.extract_strided_slice %40 {offsets = [0, 1, 0], sizes = [16, 16, 128], strides = [1, 1, 1]} : vector<16x18x128xbf16> to vector<16x16x128xbf16>
    %43 = vector.extract_strided_slice %40 {offsets = [0, 2, 0], sizes = [16, 16, 128], strides = [1, 1, 1]} : vector<16x18x128xbf16> to vector<16x16x128xbf16>
    %44 = tpu.concatenate %41, %42, %43 in 2 : vector<16x16x128xbf16>, vector<16x16x128xbf16>, vector<16x16x128xbf16> -> vector<16x16x384xbf16>
    %45 = vector.shape_cast %44 : vector<16x16x384xbf16> to vector<256x384xbf16>
    %c2 = arith.constant 2 : index
    %c0_22 = arith.constant 0 : index
    %c0_23 = arith.constant 0 : index
    %46 = vector.load %arg5[%c2, %c0_22, %c0_23] : memref<3x384x128xbf16, #tpu.memory_space<vmem>>, vector<1x384x128xbf16>
    %47 = vector.shape_cast %46 : vector<1x384x128xbf16> to vector<384x128xbf16>
    %cst_24 = arith.constant dense<0.000000e+00> : vector<256x128xf32>
    %48 = tpu.matmul %45, %47, %cst_24 {dimension_numbers = #tpu.dot_dimension_numbers<[1], [0], [0], [1], [0, 0, 1, 1], [], []>} : vector<256x384xbf16>, vector<384x128xbf16>, vector<256x128xf32> -> vector<256x128xf32>
    %49 = arith.addf %39, %48 : vector<256x128xf32>
    %50 = vector.shape_cast %49 : vector<256x128xf32> to vector<16x16x128xf32>
    %51 = arith.truncf %50 : vector<16x16x128xf32> to vector<16x16x128xbf16>
    %c0_25 = arith.constant 0 : index
    %c0_26 = arith.constant 0 : index
    %c0_27 = arith.constant 0 : index
    %c0_28 = arith.constant 0 : index
    %52 = vector.load %arg6[%c0_25, %c0_26, %c0_27, %c0_28] : memref<1x16x16x128xbf16, #tpu.memory_space<vmem>>, vector<1x16x16x128xbf16>
    %53 = vector.shape_cast %52 : vector<1x16x16x128xbf16> to vector<16x16x128xbf16>
    %54 = vector.shape_cast %51 : vector<16x16x128xbf16> to vector<1x16x16x128xbf16>
    tpu.vector_store %arg6[%c0_25, %c0_26, %c0_27, %c0_28], %54 {strides = array<i32>} : memref<1x16x16x128xbf16, #tpu.memory_space<vmem>>, vector<1x16x16x128xbf16>,
    %cst_29 = arith.constant dense<0.000000e+00> : vector<128xf32>
    %55 = vector.multi_reduction <add>, %49, %cst_29 [0] : vector<256x128xf32> to vector<128xf32>
    %56 = vector.shape_cast %55 : vector<128xf32> to vector<1x128xf32>
    %57 = arith.mulf %49, %49 : vector<256x128xf32>
    %cst_30 = arith.constant dense<0.000000e+00> : vector<128xf32>
    %58 = vector.multi_reduction <add>, %57, %cst_30 [0] : vector<256x128xf32> to vector<128xf32>
    %59 = vector.shape_cast %58 : vector<128xf32> to vector<1x128xf32>
    %cst_31 = arith.constant 0.000000e+00 : f32
    %60 = vector.broadcast %cst_31 : f32 to vector<6x128xf32>
    %61 = tpu.concatenate %56, %59, %60 in 0 : vector<1x128xf32>, vector<1x128xf32>, vector<6x128xf32> -> vector<8x128xf32>
    %c0_32 = arith.constant 0 : index
    %c0_33 = arith.constant 0 : index
    %c0_34 = arith.constant 0 : index
    %c0_35 = arith.constant 0 : index
    %62 = vector.load %arg7[%c0_32, %c0_33, %c0_34, %c0_35] : memref<1x1x8x128xf32, #tpu.memory_space<vmem>>, vector<1x1x8x128xf32>
    %63 = vector.shape_cast %62 : vector<1x1x8x128xf32> to vector<8x128xf32>
    %64 = vector.shape_cast %61 : vector<8x128xf32> to vector<1x1x8x128xf32>
    tpu.vector_store %arg7[%c0_32, %c0_33, %c0_34, %c0_35], %64 {strides = array<i32>} : memref<1x1x8x128xf32, #tpu.memory_space<vmem>>, vector<1x1x8x128xf32>,
    return
  }
  func.func @transform_0(%arg0: i32, %arg1: i32) -> (i32, i32, i32, i32) {
    %c0_i32 = arith.constant 0 : i32
    %c0_i32_0 = arith.constant 0 : i32
    %c0_i32_1 = arith.constant 0 : i32
    return %arg0, %arg1, %c0_i32, %c0_i32_0 : i32, i32, i32, i32
  }
  func.func @transform_1(%arg0: i32, %arg1: i32) -> (i32, i32, i32, i32) {
    %c2_i32 = arith.constant 2 : i32
    %0 = arith.muli %arg1, %c2_i32 : i32
    %c1_i32 = arith.constant 1 : i32
    %1 = arith.subi %0, %c1_i32 : i32
    %c0_i32 = arith.constant 0 : i32
    %2 = arith.maxsi %1, %c0_i32 : i32
    %c0_i32_0 = arith.constant 0 : i32
    %c0_i32_1 = arith.constant 0 : i32
    %c0_i32_2 = arith.constant 0 : i32
    return %arg0, %2, %c0_i32_0, %c0_i32_1 : i32, i32, i32, i32
  }
  func.func @transform_2(%arg0: i32, %arg1: i32) -> (i32, i32, i32, i32) {
    %c1_i32 = arith.constant 1 : i32
    %0 = arith.addi %arg1, %c1_i32 : i32
    %c2_i32 = arith.constant 2 : i32
    %1 = arith.muli %0, %c2_i32 : i32
    %c1_i32_0 = arith.constant 1 : i32
    %2 = arith.minsi %1, %c1_i32_0 : i32
    %c0_i32 = arith.constant 0 : i32
    %c0_i32_1 = arith.constant 0 : i32
    %c0_i32_2 = arith.constant 0 : i32
    return %arg0, %2, %c0_i32, %c0_i32_1 : i32, i32, i32, i32
  }
  func.func @transform_3(%arg0: i32, %arg1: i32) -> (i32, i32, i32) {
    %c0_i32 = arith.constant 0 : i32
    %c0_i32_0 = arith.constant 0 : i32
    %c0_i32_1 = arith.constant 0 : i32
    %c0_i32_2 = arith.constant 0 : i32
    return %c0_i32, %c0_i32_0, %c0_i32_1 : i32, i32, i32
  }
  func.func @transform_4(%arg0: i32, %arg1: i32) -> (i32, i32, i32, i32) {
    %c0_i32 = arith.constant 0 : i32
    %c0_i32_0 = arith.constant 0 : i32
    %c0_i32_1 = arith.constant 0 : i32
    return %arg0, %arg1, %c0_i32, %c0_i32_0 : i32, i32, i32, i32
  }
  func.func @transform_5(%arg0: i32, %arg1: i32) -> (i32, i32, i32, i32) {
    %c0_i32 = arith.constant 0 : i32
    %c0_i32_0 = arith.constant 0 : i32
    %c0_i32_1 = arith.constant 0 : i32
    return %arg0, %arg1, %c0_i32, %c0_i32_0 : i32, i32, i32, i32
  }
}

module attributes {stable_mosaic.version = 11 : i64} {
  func.func @_bn_relu_kernel(%arg0: i32, %arg1: i32, %arg2: memref<1x16x16x128xbf16, #tpu.memory_space<vmem>>, %arg3: memref<1x128xf32, #tpu.memory_space<vmem>>, %arg4: memref<1x128xf32, #tpu.memory_space<vmem>>, %arg5: memref<1x16x18x128xbf16, #tpu.memory_space<vmem>>) attributes {dimension_semantics = [#tpu.dimension_semantics<parallel>, #tpu.dimension_semantics<parallel>], iteration_bounds = array<i64: 2, 1>, scalar_prefetch = 0 : i64, scratch_operands = 0 : i64, tpu.core_type = #tpu.core_type<tc>, window_params = [{transform_indices = @transform_0, window_bounds = array<i64: 1, 16, 16, 128>}, {pipeline_mode = #tpu.pipeline_mode<synchronous>, transform_indices = @transform_1, window_bounds = array<i64: 1, 128>}, {pipeline_mode = #tpu.pipeline_mode<synchronous>, transform_indices = @transform_2, window_bounds = array<i64: 1, 128>}, {transform_indices = @transform_3, window_bounds = array<i64: 1, 16, 18, 128>}]} {
    %c0 = arith.constant 0 : index
    %c0_0 = arith.constant 0 : index
    %c0_1 = arith.constant 0 : index
    %c0_2 = arith.constant 0 : index
    %0 = vector.load %arg2[%c0, %c0_0, %c0_1, %c0_2] : memref<1x16x16x128xbf16, #tpu.memory_space<vmem>>, vector<1x16x16x128xbf16>
    %1 = vector.shape_cast %0 : vector<1x16x16x128xbf16> to vector<16x16x128xbf16>
    %2 = arith.extf %1 : vector<16x16x128xbf16> to vector<16x16x128xf32>
    %c0_3 = arith.constant 0 : index
    %c0_4 = arith.constant 0 : index
    %3 = vector.load %arg3[%c0_3, %c0_4] : memref<1x128xf32, #tpu.memory_space<vmem>>, vector<1x128xf32>
    %4 = vector.shape_cast %3 : vector<1x128xf32> to vector<1x1x128xf32>
    %5 = vector.broadcast %4 : vector<1x1x128xf32> to vector<16x16x128xf32>
    %6 = arith.mulf %2, %5 : vector<16x16x128xf32>
    %c0_5 = arith.constant 0 : index
    %c0_6 = arith.constant 0 : index
    %7 = vector.load %arg4[%c0_5, %c0_6] : memref<1x128xf32, #tpu.memory_space<vmem>>, vector<1x128xf32>
    %8 = vector.shape_cast %7 : vector<1x128xf32> to vector<1x1x128xf32>
    %9 = vector.broadcast %8 : vector<1x1x128xf32> to vector<16x16x128xf32>
    %10 = arith.addf %6, %9 : vector<16x16x128xf32>
    %cst = arith.constant 0.000000e+00 : f32
    %11 = vector.broadcast %cst : f32 to vector<16x16x128xf32>
    %12 = arith.maximumf %10, %11 : vector<16x16x128xf32>
    %13 = arith.truncf %12 : vector<16x16x128xf32> to vector<16x16x128xbf16>
    %cst_7 = arith.constant 0.000000e+00 : bf16
    %14 = vector.broadcast %cst_7 : bf16 to vector<16x1x128xbf16>
    %15 = tpu.concatenate %14, %13, %14 in 1 : vector<16x1x128xbf16>, vector<16x16x128xbf16>, vector<16x1x128xbf16> -> vector<16x18x128xbf16>
    %c0_8 = arith.constant 0 : index
    %c0_9 = arith.constant 0 : index
    %c0_10 = arith.constant 0 : index
    %c0_11 = arith.constant 0 : index
    %16 = vector.load %arg5[%c0_8, %c0_9, %c0_10, %c0_11] : memref<1x16x18x128xbf16, #tpu.memory_space<vmem>>, vector<1x16x18x128xbf16>
    %17 = vector.shape_cast %16 : vector<1x16x18x128xbf16> to vector<16x18x128xbf16>
    %18 = vector.shape_cast %15 : vector<16x18x128xbf16> to vector<1x16x18x128xbf16>
    tpu.vector_store %arg5[%c0_8, %c0_9, %c0_10, %c0_11], %18 {strides = array<i32>} : memref<1x16x18x128xbf16, #tpu.memory_space<vmem>>, vector<1x16x18x128xbf16>,
    return
  }
  func.func @transform_0(%arg0: i32, %arg1: i32) -> (i32, i32, i32, i32) {
    %c0_i32 = arith.constant 0 : i32
    %c0_i32_0 = arith.constant 0 : i32
    %c0_i32_1 = arith.constant 0 : i32
    return %arg0, %arg1, %c0_i32, %c0_i32_0 : i32, i32, i32, i32
  }
  func.func @transform_1(%arg0: i32, %arg1: i32) -> (i32, i32) {
    %c0_i32 = arith.constant 0 : i32
    %c0_i32_0 = arith.constant 0 : i32
    %c0_i32_1 = arith.constant 0 : i32
    return %c0_i32, %c0_i32_0 : i32, i32
  }
  func.func @transform_2(%arg0: i32, %arg1: i32) -> (i32, i32) {
    %c0_i32 = arith.constant 0 : i32
    %c0_i32_0 = arith.constant 0 : i32
    %c0_i32_1 = arith.constant 0 : i32
    return %c0_i32, %c0_i32_0 : i32, i32
  }
  func.func @transform_3(%arg0: i32, %arg1: i32) -> (i32, i32, i32, i32) {
    %c0_i32 = arith.constant 0 : i32
    %c0_i32_0 = arith.constant 0 : i32
    %c0_i32_1 = arith.constant 0 : i32
    return %arg0, %arg1, %c0_i32, %c0_i32_0 : i32, i32, i32, i32
  }
}

</mosaic_0001>

<llo_original>
// kernel: double_conv_forward.5
$region0: #{double_conv_forward.5}
  #allocation0 [shape = 'u32[]', space=smem, size = 0x4, offset = 0x4, fixed_abs, tag = 'smem constant byte address 0x4 - core index']
  #allocation1 [shape = 'u32[144,128]{1,0:T(1,128)}', space=vmem, size = 0x12000, scoped, tag = 'internal scratch']
  %s0 = inlined_call_operand.vmem [shape: bf16[2,16,16,128], index: 0, kind: input, shape index: {}]
  %s1 = inlined_call_operand.vmem [shape: f32[1,128], index: 1, kind: input, shape index: {}]
  %s2 = inlined_call_operand.vmem [shape: f32[1,128], index: 2, kind: input, shape index: {}]
  %s3 = inlined_call_operand.vmem [shape: bf16[2,16,18,128], index: 3, kind: output, shape index: {}]
  %s4 = sld [smem:[#allocation0]]
  $region45: #{double_conv_forward.5} parent=0
    _
  %s6 = ssub.s32 1, %s4
  %s7 = scalar_select 0, %s6, %s4
  loop: start=0, step=1, limit=4
  $region2: #{double_conv_forward.5} parent=0 // loop_pre_header
    _
  $region3: #{double_conv_forward.5} parent=0 // loop_header
    %s9 = sphi 0, %s13
    %p10 = scmp.ge.s32.totalorder %s9, 4
    %s16 = sphi 0, %s28
    %s17 = sphi 0, %s24
    %s18 = sphi 0, %s16
    %s19 = sphi 0, %s17
    %s20 = sphi 0, %s18
    %s21 = sphi 0, %s19
    %s33 = sphi 0, %s35
    %s36 = sphi 0, %s33
    %s37 = sphi 0, %s36
    %s53 = sphi 0, %s37
    %s57 = sphi 0, %s57
    %s59 = sphi 0, %s57
    %s60 = sphi 0, %s59
    %s74 = sphi 0, %s60
    %s78 = sphi 0, %s78
    %s80 = sphi 0, %s78
    %s81 = sphi 0, %s80
    %s95 = sphi 0, %s81
    %s103 = sphi 0, %s105
    %s106 = sphi 0, %s103
    %s107 = sphi 0, %s106
    %s123 = sphi 0, %s107
  $region4: #{double_conv_forward.5} parent=0 // loop_header_branch
    %12 = sbr.rel (%p10) target = $region8
  $region5: #{double_conv_forward.5} parent=0 // loop_body
    %s14 = ssub.s32 %s9, 1
    %s15 = ssub.s32 %s9, 2
    %s22 = sadd.s32 1, %s17
    %p23 = scmp.ge.s32.totalorder %s22, 1
    %s24 = scalar_select %p23, 0, %s22
    %s25 = sadd.s32 1, %s16
    %s26 = scalar_select %p23, %s25, %s16
    %p27 = scmp.ge.s32.totalorder %s26, 2
    %s28 = scalar_select %p27, 0, %s26
    %s29 = ssub.s32 %s16, %s28
    %s30 = ssub.s32 %s17, %s24
    %s31 = sor.u32 %s29, %s30
    %p32 = scmp.eq.s32.totalorder %s31, 0
    %s34 = sadd.s32 %s33, 1
    %s35 = scalar_select %p32, %s33, %s34
    %p38 = pneg %p32
    %p39 = scmp.eq.s32.totalorder %s9, 1
    %p40 = por %p38, %p39
    %p41 = scmp.ne.s32.totalorder %s33, %s36
    %p42 = scmp.eq.s32.totalorder %s9, 0
    %p43 = por %p41, %p42
    %p44 = scmp.ne.s32.totalorder %s33, %s36
    %p45 = scmp.eq.s32.totalorder %s14, 1
    %p46 = por %p44, %p45
    %p47 = scmp.ne.s32.totalorder %s36, %s37
    %p48 = scmp.eq.s32.totalorder %s14, 0
    %p49 = por %p47, %p48
    %p50 = scmp.ne.s32.totalorder %s36, %s37
    %p51 = scmp.eq.s32.totalorder %s15, 1
    %p52 = por %p50, %p51
    %p54 = scmp.ne.s32.totalorder %s37, %s53
    %p55 = scmp.eq.s32.totalorder %s15, 0
    %p56 = por %p54, %p55
    %s58 = sadd.s32 %s57, 1
    %p61 = scmp.eq.s32.totalorder %s9, 1
    %p62 = scmp.ne.s32.totalorder %s57, %s59
    %p63 = scmp.eq.s32.totalorder %s9, 0
    %p64 = por %p62, %p63
    %p65 = scmp.ne.s32.totalorder %s57, %s59
    %p66 = scmp.eq.s32.totalorder %s14, 1
    %p67 = por %p65, %p66
    %p68 = scmp.ne.s32.totalorder %s59, %s60
    %p69 = scmp.eq.s32.totalorder %s14, 0
    %p70 = por %p68, %p69
    %p71 = scmp.ne.s32.totalorder %s59, %s60
    %p72 = scmp.eq.s32.totalorder %s15, 1
    %p73 = por %p71, %p72
    %p75 = scmp.ne.s32.totalorder %s60, %s74
    %p76 = scmp.eq.s32.totalorder %s15, 0
    %p77 = por %p75, %p76
    %s79 = sadd.s32 %s78, 1
    %p82 = scmp.eq.s32.totalorder %s9, 1
    %p83 = scmp.ne.s32.totalorder %s78, %s80
    %p84 = scmp.eq.s32.totalorder %s9, 0
    %p85 = por %p83, %p84
    %p86 = scmp.ne.s32.totalorder %s78, %s80
    %p87 = scmp.eq.s32.totalorder %s14, 1
    %p88 = por %p86, %p87
    %p89 = scmp.ne.s32.totalorder %s80, %s81
    %p90 = scmp.eq.s32.totalorder %s14, 0
    %p91 = por %p89, %p90
    %p92 = scmp.ne.s32.totalorder %s80, %s81
    %p93 = scmp.eq.s32.totalorder %s15, 1
    %p94 = por %p92, %p93
    %p96 = scmp.ne.s32.totalorder %s81, %s95
    %p97 = scmp.eq.s32.totalorder %s15, 0
    %p98 = por %p96, %p97
    %s99 = ssub.s32 %s16, %s28
    %s100 = ssub.s32 %s17, %s24
    %s101 = sor.u32 %s99, %s100
    %p102 = scmp.eq.s32.totalorder %s101, 0
    %s104 = sadd.s32 %s103, 1
    %s105 = scalar_select %p102, %s103, %s104
    %p108 = pneg %p102
    %p109 = scmp.eq.s32.totalorder %s9, 1
    %p110 = por %p108, %p109
    %p111 = scmp.ne.s32.totalorder %s103, %s106
    %p112 = scmp.eq.s32.totalorder %s9, 0
    %p113 = por %p111, %p112
    %p114 = scmp.ne.s32.totalorder %s103, %s106
    %p115 = scmp.eq.s32.totalorder %s14, 1
    %p116 = por %p114, %p115
    %p117 = scmp.ne.s32.totalorder %s106, %s107
    %p118 = scmp.eq.s32.totalorder %s14, 0
    %p119 = por %p117, %p118
    %p120 = scmp.ne.s32.totalorder %s106, %s107
    %p121 = scmp.eq.s32.totalorder %s15, 1
    %p122 = por %p120, %p121
    %p124 = scmp.ne.s32.totalorder %s107, %s123
    %p125 = scmp.eq.s32.totalorder %s15, 0
    %p126 = por %p124, %p125
    %p127 = scmp.le.s32.totalorder 1, %s9
    %p128 = scmp.lt.s32.totalorder %s9, 3
    %p129 = pnand %p127, %p128
    %p130 = pneg %p129
    // Predicated region
    $region9: #{double_conv_forward.5} parent=5 // pred_check
      _
    $region10: #{double_conv_forward.5} parent=5 // pred_check_branch
      %132 = sbr.rel (%p129) target = $region12
    $region11: #{double_conv_forward.5} parent=5 // pred_region
      %s133 = ssub.s32 %s9, 1
      // Predicated region
      $region13: #{double_conv_forward.5} parent=11 // pred_check
        %p134 = pneg %p70
      $region14: #{double_conv_forward.5} parent=11 // pred_check_branch
        %136 = sbr.rel (%p134) target = $region16
      $region15: #{double_conv_forward.5} parent=11 // pred_region
        _
      $region16: #{double_conv_forward.5} parent=11 // pred_fallthru
        _
      // Predicated region
      $region17: #{double_conv_forward.5} parent=11 // pred_check
        %p137 = pneg %p91
      $region18: #{double_conv_forward.5} parent=11 // pred_check_branch
        %139 = sbr.rel (%p137) target = $region20
      $region19: #{double_conv_forward.5} parent=11 // pred_region
        _
      $region20: #{double_conv_forward.5} parent=11 // pred_fallthru
        _
    $region12: #{double_conv_forward.5} parent=5 // pred_fallthru
      _
    %p140 = scmp.lt.s32.totalorder %s9, 2
    // Predicated region
    $region21: #{double_conv_forward.5} parent=5 // pred_check
      %p141 = pneg %p140
    $region22: #{double_conv_forward.5} parent=5 // pred_check_branch
      %143 = sbr.rel (%p141) target = $region24
    $region23: #{double_conv_forward.5} parent=5 // pred_region
      // Predicated region
      $region25: #{double_conv_forward.5} parent=23 // pred_check
        %p144 = pneg %p43
      $region26: #{double_conv_forward.5} parent=23 // pred_check_branch
        %146 = sbr.rel (%p144) target = $region28
      $region27: #{double_conv_forward.5} parent=23 // pred_region
        %s147 = smul.u32 16, %s17
        %p148 = scmp.lt.s32.totalorder %s16, 1
        %s149 = scalar_select %p148, %s16, 1
        %p150 = scmp.lt.s32.totalorder %s147, 15
        %s151 = scalar_select %p150, %s147, 15
        %s152 = smul.addr %s151, 2
        %s153 = smul.addr %s149, 32
        %s154 = sadd.s32 %s152, %s153
        %s155 = smul.addr %s154, 4
        %s156 = scalar_lea.vmem %s0, %s155
        %s157 = smul.u32 16, %s17
      $region28: #{double_conv_forward.5} parent=23 // pred_fallthru
        _
    $region24: #{double_conv_forward.5} parent=5 // pred_fallthru
      _
    %p158 = scmp.le.s32.totalorder 1, %s9
    %p159 = scmp.lt.s32.totalorder %s9, 3
    %p160 = pnand %p158, %p159
    %p161 = pneg %p160
    // Predicated region
    $region29: #{double_conv_forward.5} parent=5 // pred_check
      _
    $region30: #{double_conv_forward.5} parent=5 // pred_check_branch
      %163 = sbr.rel (%p160) target = $region32
    $region31: #{double_conv_forward.5} parent=5 // pred_region
      %s164 = ssub.s32 %s9, 1
      %s165 = smul.u32 16, %s19
      %p166 = scmp.lt.s32.totalorder %s18, 1
      %s167 = scalar_select %p166, %s18, 1
      %p168 = scmp.lt.s32.totalorder %s165, 15
      %s169 = scalar_select %p168, %s165, 15
      %s170 = smul.addr %s169, 2
      %s171 = smul.addr %s167, 32
      %s172 = sadd.s32 %s170, %s171
      %s173 = smul.addr %s172, 4
      %s174 = scalar_lea.vmem %s0, %s173
      %p175 = pneg %p49
      %p176 = pneg %p46
      %p177 = pneg %p70
      %p178 = pneg %p67
      %p179 = pneg %p91
      %p180 = pneg %p88
      %p181 = pneg %p119
      %p182 = pneg %p116
      %s183 = smul.u32 16, %s19
      %p184 = scmp.lt.s32.totalorder %s18, 1
      %s185 = scalar_select %p184, %s18, 1
      %p186 = scmp.lt.s32.totalorder %s183, 15
      %s187 = scalar_select %p186, %s183, 15
      %s188 = smul.addr %s187, 3
      %s189 = smul.addr %s185, 48
      %s190 = sadd.s32 %s188, %s189
      %s191 = smul.addr %s190, 4
      %s192 = scalar_lea.vmem %s3, %s191
      %s193 = smul.u32 16, %s19
      %p194 = scmp.lt.s32.totalorder %s18, 1
      %s195 = scalar_select %p194, %s18, 1
      %p196 = scmp.lt.s32.totalorder %s193, 15
      %s197 = scalar_select %p196, %s193, 15
      %s198 = smul.addr %s197, 2
      %s199 = smul.addr %s195, 32
      %s200 = sadd.s32 %s198, %s199
      %s201 = smul.addr %s200, 4
      %s202 = scalar_lea.vmem %s0, %s201
      %s203 = smul.u32 16, %s19
      %s204 = smul.u32 16, %s19
      %p205 = scmp.lt.s32.totalorder %s18, 1
      %s206 = scalar_select %p205, %s18, 1
      %p207 = scmp.lt.s32.totalorder %s204, 15
      %s208 = scalar_select %p207, %s204, 15
      %s209 = smul.addr %s208, 3
      %s210 = smul.addr %s206, 48
      %s211 = sadd.s32 %s209, %s210
      %s212 = smul.addr %s211, 4
      %s213 = scalar_lea.vmem %s3, %s212
      %s214 = smul.u32 16, %s19
      %v216 = vld [vmem:[%s202] sm:$0xf]
      %v217 = vld [vmem:[%s202 + $0x4] sm:$0xf]
      %v218 = vld [vmem:[%s202 + $0x8] sm:$0xf]
      %v219 = vld [vmem:[%s202 + $0xc] sm:$0xf]
      %v220 = vld [vmem:[%s202 + $0x10] sm:$0xf]
      %v221 = vld [vmem:[%s202 + $0x14] sm:$0xf]
      %v222 = vld [vmem:[%s202 + $0x18] sm:$0xf]
      %v223 = vld [vmem:[%s202 + $0x1c] sm:$0xf]
      %v224 = vld [vmem:[%s202 + $0x20] sm:$0xf]
      %v225 = vld [vmem:[%s202 + $0x24] sm:$0xf]
      %v226 = vld [vmem:[%s202 + $0x28] sm:$0xf]
      %v227 = vld [vmem:[%s202 + $0x2c] sm:$0xf]
      %v228 = vld [vmem:[%s202 + $0x30] sm:$0xf]
      %v229 = vld [vmem:[%s202 + $0x34] sm:$0xf]
      %v230 = vld [vmem:[%s202 + $0x38] sm:$0xf]
      %v231 = vld [vmem:[%s202 + $0x3c] sm:$0xf]
      %v232 = vld [vmem:[%s202 + $0x40] sm:$0xf]
      %v233 = vld [vmem:[%s202 + $0x44] sm:$0xf]
      %v234 = vld [vmem:[%s202 + $0x48] sm:$0xf]
      %v235 = vld [vmem:[%s202 + $0x4c] sm:$0xf]
      %v236 = vld [vmem:[%s202 + $0x50] sm:$0xf]
      %v237 = vld [vmem:[%s202 + $0x54] sm:$0xf]
      %v238 = vld [vmem:[%s202 + $0x58] sm:$0xf]
      %v239 = vld [vmem:[%s202 + $0x5c] sm:$0xf]
      %v240 = vld [vmem:[%s202 + $0x60] sm:$0xf]
      %v241 = vld [vmem:[%s202 + $0x64] sm:$0xf]
      %v242 = vld [vmem:[%s202 + $0x68] sm:$0xf]
      %v243 = vld [vmem:[%s202 + $0x6c] sm:$0xf]
      %v244 = vld [vmem:[%s202 + $0x70] sm:$0xf]
      %v245 = vld [vmem:[%s202 + $0x74] sm:$0xf]
      %v246 = vld [vmem:[%s202 + $0x78] sm:$0xf]
      %v247 = vld [vmem:[%s202 + $0x7c] sm:$0xf]
      %v248 = vunpack.c.l.bf16 %v216
      %v249 = vunpack.c.l.bf16 %v217
      %v250 = vunpack.c.l.bf16 %v218
      %v251 = vunpack.c.l.bf16 %v219
      %v252 = vunpack.c.l.bf16 %v220
      %v253 = vunpack.c.l.bf16 %v221
      %v254 = vunpack.c.l.bf16 %v222
      %v255 = vunpack.c.l.bf16 %v223
      %v256 = vunpack.c.l.bf16 %v224
      %v257 = vunpack.c.l.bf16 %v225
      %v258 = vunpack.c.l.bf16 %v226
      %v259 = vunpack.c.l.bf16 %v227
      %v260 = vunpack.c.l.bf16 %v228
      %v261 = vunpack.c.l.bf16 %v229
      %v262 = vunpack.c.l.bf16 %v230
      %v263 = vunpack.c.l.bf16 %v231
      %v264 = vunpack.c.l.bf16 %v232
      %v265 = vunpack.c.l.bf16 %v233
      %v266 = vunpack.c.l.bf16 %v234
      %v267 = vunpack.c.l.bf16 %v235
      %v268 = vunpack.c.l.bf16 %v236
      %v269 = vunpack.c.l.bf16 %v237
      %v270 = vunpack.c.l.bf16 %v238
      %v271 = vunpack.c.l.bf16 %v239
      %v272 = vunpack.c.l.bf16 %v240
      %v273 = vunpack.c.l.bf16 %v241
      %v274 = vunpack.c.l.bf16 %v242
      %v275 = vunpack.c.l.bf16 %v243
      %v276 = vunpack.c.l.bf16 %v244
      %v277 = vunpack.c.l.bf16 %v245
      %v278 = vunpack.c.l.bf16 %v246
      %v279 = vunpack.c.l.bf16 %v247
      %v280 = vld [vmem:[%s1] sm:$0x1]
      %v282 = vlaneseq
      %v283 = vshrl.u32 %v282, 7
      %v284 = vsub.s32 0, %v283
      %v285 = vrot.slane %v280, %v284
      %v287 = vmul.f32 %v248, %v285
      %v288 = vmul.f32 %v249, %v285
      %v289 = vmul.f32 %v250, %v285
      %v290 = vmul.f32 %v251, %v285
      %v291 = vmul.f32 %v252, %v285
      %v292 = vmul.f32 %v253, %v285
      %v293 = vmul.f32 %v254, %v285
      %v294 = vmul.f32 %v255, %v285
      %v295 = vmul.f32 %v256, %v285
      %v296 = vmul.f32 %v257, %v285
      %v297 = vmul.f32 %v258, %v285
      %v298 = vmul.f32 %v259, %v285
      %v299 = vmul.f32 %v260, %v285
      %v300 = vmul.f32 %v261, %v285
      %v301 = vmul.f32 %v262, %v285
      %v302 = vmul.f32 %v263, %v285
      %v303 = vmul.f32 %v264, %v285
      %v304 = vmul.f32 %v265, %v285
      %v305 = vmul.f32 %v266, %v285
      %v306 = vmul.f32 %v267, %v285
      %v307 = vmul.f32 %v268, %v285
      %v308 = vmul.f32 %v269, %v285
      %v309 = vmul.f32 %v270, %v285
      %v310 = vmul.f32 %v271, %v285
      %v311 = vmul.f32 %v272, %v285
      %v312 = vmul.f32 %v273, %v285
      %v313 = vmul.f32 %v274, %v285
      %v314 = vmul.f32 %v275, %v285
      %v315 = vmul.f32 %v276, %v285
      %v316 = vmul.f32 %v277, %v285
      %v317 = vmul.f32 %v278, %v285
      %v318 = vmul.f32 %v279, %v285
      %v319 = vld [vmem:[%s2] sm:$0x1]
      %v321 = vlaneseq
      %v322 = vshrl.u32 %v321, 7
      %v323 = vsub.s32 0, %v322
      %v324 = vrot.slane %v319, %v323
      %v326 = vadd.f32 %v287, %v324
      %v327 = vadd.f32 %v288, %v324
      %v328 = vadd.f32 %v289, %v324
      %v329 = vadd.f32 %v290, %v324
      %v330 = vadd.f32 %v291, %v324
      %v331 = vadd.f32 %v292, %v324
      %v332 = vadd.f32 %v293, %v324
      %v333 = vadd.f32 %v294, %v324
      %v334 = vadd.f32 %v295, %v324
      %v335 = vadd.f32 %v296, %v324
      %v336 = vadd.f32 %v297, %v324
      %v337 = vadd.f32 %v298, %v324
      %v338 = vadd.f32 %v299, %v324
      %v339 = vadd.f32 %v300, %v324
      %v340 = vadd.f32 %v301, %v324
      %v341 = vadd.f32 %v302, %v324
      %v342 = vadd.f32 %v303, %v324
      %v343 = vadd.f32 %v304, %v324
      %v344 = vadd.f32 %v305, %v324
      %v345 = vadd.f32 %v306, %v324
      %v346 = vadd.f32 %v307, %v324
      %v347 = vadd.f32 %v308, %v324
      %v348 = vadd.f32 %v309, %v324
      %v349 = vadd.f32 %v310, %v324
      %v350 = vadd.f32 %v311, %v324
      %v351 = vadd.f32 %v312, %v324
      %v352 = vadd.f32 %v313, %v324
      %v353 = vadd.f32 %v314, %v324
      %v354 = vadd.f32 %v315, %v324
      %v355 = vadd.f32 %v316, %v324
      %v356 = vadd.f32 %v317, %v324
      %v357 = vadd.f32 %v318, %v324
      %v358 = vmax.f32 %v326, 0.0
      %v359 = vmax.f32 %v327, 0.0
      %v360 = vmax.f32 %v328, 0.0
      %v361 = vmax.f32 %v329, 0.0
      %v362 = vmax.f32 %v330, 0.0
      %v363 = vmax.f32 %v331, 0.0
      %v364 = vmax.f32 %v332, 0.0
      %v365 = vmax.f32 %v333, 0.0
      %v366 = vmax.f32 %v334, 0.0
      %v367 = vmax.f32 %v335, 0.0
      %v368 = vmax.f32 %v336, 0.0
      %v369 = vmax.f32 %v337, 0.0
      %v370 = vmax.f32 %v338, 0.0
      %v371 = vmax.f32 %v339, 0.0
      %v372 = vmax.f32 %v340, 0.0
      %v373 = vmax.f32 %v341, 0.0
      %v374 = vmax.f32 %v342, 0.0
      %v375 = vmax.f32 %v343, 0.0
      %v376 = vmax.f32 %v344, 0.0
      %v377 = vmax.f32 %v345, 0.0
      %v378 = vmax.f32 %v346, 0.0
      %v379 = vmax.f32 %v347, 0.0
      %v380 = vmax.f32 %v348, 0.0
      %v381 = vmax.f32 %v349, 0.0
      %v382 = vmax.f32 %v350, 0.0
      %v383 = vmax.f32 %v351, 0.0
      %v384 = vmax.f32 %v352, 0.0
      %v385 = vmax.f32 %v353, 0.0
      %v386 = vmax.f32 %v354, 0.0
      %v387 = vmax.f32 %v355, 0.0
      %v388 = vmax.f32 %v356, 0.0
      %v389 = vmax.f32 %v357, 0.0
      %v390 = vpack.c.bf16 %v359, %v358
      %v391 = vpack.c.bf16 %v361, %v360
      %v392 = vpack.c.bf16 %v363, %v362
      %v393 = vpack.c.bf16 %v365, %v364
      %v394 = vpack.c.bf16 %v367, %v366
      %v395 = vpack.c.bf16 %v369, %v368
      %v396 = vpack.c.bf16 %v371, %v370
      %v397 = vpack.c.bf16 %v373, %v372
      %v398 = vpack.c.bf16 %v375, %v374
      %v399 = vpack.c.bf16 %v377, %v376
      %v400 = vpack.c.bf16 %v379, %v378
      %v401 = vpack.c.bf16 %v381, %v380
      %v402 = vpack.c.bf16 %v383, %v382
      %v403 = vpack.c.bf16 %v385, %v384
      %v404 = vpack.c.bf16 %v387, %v386
      %v405 = vpack.c.bf16 %v389, %v388
      %v407 = vshrl.u32 %v390, 16
      %v409 = vrot.slane %v407, 7
      %v410 = vshll.u32 %v390, 16
      %v412 = vor.u32 %v409, %v410
      %v414 = vshrl.u32 %v391, 16
      %v416 = vrot.slane %v414, 7
      %v417 = vshll.u32 %v391, 16
      %v419 = vor.u32 %v416, %v417
      %v421 = vshrl.u32 %v392, 16
      %v423 = vrot.slane %v421, 7
      %v424 = vshll.u32 %v392, 16
      %v426 = vor.u32 %v423, %v424
      %v428 = vshrl.u32 %v393, 16
      %v430 = vrot.slane %v428, 7
      %v431 = vshll.u32 %v393, 16
      %v433 = vor.u32 %v430, %v431
      %v435 = vshrl.u32 %v394, 16
      %v437 = vrot.slane %v435, 7
      %v438 = vshll.u32 %v394, 16
      %v440 = vor.u32 %v437, %v438
      %v442 = vshrl.u32 %v395, 16
      %v444 = vrot.slane %v442, 7
      %v445 = vshll.u32 %v395, 16
      %v447 = vor.u32 %v444, %v445
      %v449 = vshrl.u32 %v396, 16
      %v451 = vrot.slane %v449, 7
      %v452 = vshll.u32 %v396, 16
      %v454 = vor.u32 %v451, %v452
      %v456 = vshrl.u32 %v397, 16
      %v458 = vrot.slane %v456, 7
      %v459 = vshll.u32 %v397, 16
      %v461 = vor.u32 %v458, %v459
      %v463 = vshrl.u32 %v398, 16
      %v465 = vrot.slane %v463, 7
      %v466 = vshll.u32 %v398, 16
      %v468 = vor.u32 %v465, %v466
      %v470 = vshrl.u32 %v399, 16
      %v472 = vrot.slane %v470, 7
      %v473 = vshll.u32 %v399, 16
      %v475 = vor.u32 %v472, %v473
      %v477 = vshrl.u32 %v400, 16
      %v479 = vrot.slane %v477, 7
      %v480 = vshll.u32 %v400, 16
      %v482 = vor.u32 %v479, %v480
      %v484 = vshrl.u32 %v401, 16
      %v486 = vrot.slane %v484, 7
      %v487 = vshll.u32 %v401, 16
      %v489 = vor.u32 %v486, %v487
      %v491 = vshrl.u32 %v402, 16
      %v493 = vrot.slane %v491, 7
      %v494 = vshll.u32 %v402, 16
      %v496 = vor.u32 %v493, %v494
      %v498 = vshrl.u32 %v403, 16
      %v500 = vrot.slane %v498, 7
      %v501 = vshll.u32 %v403, 16
      %v503 = vor.u32 %v500, %v501
      %v505 = vshrl.u32 %v404, 16
      %v507 = vrot.slane %v505, 7
      %v508 = vshll.u32 %v404, 16
      %v510 = vor.u32 %v507, %v508
      %v512 = vshrl.u32 %v405, 16
      %v514 = vrot.slane %v512, 7
      %v515 = vshll.u32 %v405, 16
      %v517 = vor.u32 %v514, %v515
      %vm550 = vcmask 1040384
      %vm551 = vsmask.f32 256
      %vm552 = vmand %vm550, %vm551
      %v553 = vsel %vm552, 0, %v412
      %v554 = vsel %vm552, 0, %v419
      %v555 = vsel %vm552, 0, %v426
      %v556 = vsel %vm552, 0, %v433
      %v557 = vsel %vm552, 0, %v440
      %v558 = vsel %vm552, 0, %v447
      %v559 = vsel %vm552, 0, %v454
      %v560 = vsel %vm552, 0, %v461
      %v561 = vsel %vm552, 0, %v468
      %v562 = vsel %vm552, 0, %v475
      %v563 = vsel %vm552, 0, %v482
      %v564 = vsel %vm552, 0, %v489
      %v565 = vsel %vm552, 0, %v496
      %v566 = vsel %vm552, 0, %v503
      %v567 = vsel %vm552, 0, %v510
      %v568 = vsel %vm552, 0, %v517
      %v569 = vsel %vm552, %v409, 0
      %v570 = vsel %vm552, %v416, 0
      %v571 = vsel %vm552, %v423, 0
      %v572 = vsel %vm552, %v430, 0
      %v573 = vsel %vm552, %v437, 0
      %v574 = vsel %vm552, %v444, 0
      %v575 = vsel %vm552, %v451, 0
      %v576 = vsel %vm552, %v458, 0
      %v577 = vsel %vm552, %v465, 0
      %v578 = vsel %vm552, %v472, 0
      %v579 = vsel %vm552, %v479, 0
      %v580 = vsel %vm552, %v486, 0
      %v581 = vsel %vm552, %v493, 0
      %v582 = vsel %vm552, %v500, 0
      %v583 = vsel %vm552, %v507, 0
      %v584 = vsel %vm552, %v514, 0
      %v617 = vunpack.c.l.b16 %v553
      %v618 = vunpack.c.h.b16 %v553
      %v619 = vunpack.c.l.b16 %v569
      %v620 = vunpack.c.l.b16 %v554
      %v621 = vunpack.c.h.b16 %v554
      %v622 = vunpack.c.l.b16 %v570
      %v623 = vunpack.c.l.b16 %v555
      %v624 = vunpack.c.h.b16 %v555
      %v625 = vunpack.c.l.b16 %v571
      %v626 = vunpack.c.l.b16 %v556
      %v627 = vunpack.c.h.b16 %v556
      %v628 = vunpack.c.l.b16 %v572
      %v629 = vunpack.c.l.b16 %v557
      %v630 = vunpack.c.h.b16 %v557
      %v631 = vunpack.c.l.b16 %v573
      %v632 = vunpack.c.l.b16 %v558
      %v633 = vunpack.c.h.b16 %v558
      %v634 = vunpack.c.l.b16 %v574
      %v635 = vunpack.c.l.b16 %v559
      %v636 = vunpack.c.h.b16 %v559
      %v637 = vunpack.c.l.b16 %v575
      %v638 = vunpack.c.l.b16 %v560
      %v639 = vunpack.c.h.b16 %v560
      %v640 = vunpack.c.l.b16 %v576
      %v641 = vunpack.c.l.b16 %v561
      %v642 = vunpack.c.h.b16 %v561
      %v643 = vunpack.c.l.b16 %v577
      %v644 = vunpack.c.l.b16 %v562
      %v645 = vunpack.c.h.b16 %v562
      %v646 = vunpack.c.l.b16 %v578
      %v647 = vunpack.c.l.b16 %v563
      %v648 = vunpack.c.h.b16 %v563
      %v649 = vunpack.c.l.b16 %v579
      %v650 = vunpack.c.l.b16 %v564
      %v651 = vunpack.c.h.b16 %v564
      %v652 = vunpack.c.l.b16 %v580
      %v653 = vunpack.c.l.b16 %v565
      %v654 = vunpack.c.h.b16 %v565
      %v655 = vunpack.c.l.b16 %v581
      %v656 = vunpack.c.l.b16 %v566
      %v657 = vunpack.c.h.b16 %v566
      %v658 = vunpack.c.l.b16 %v582
      %v659 = vunpack.c.l.b16 %v567
      %v660 = vunpack.c.h.b16 %v567
      %v661 = vunpack.c.l.b16 %v583
      %v662 = vunpack.c.l.b16 %v568
      %v663 = vunpack.c.h.b16 %v568
      %v664 = vunpack.c.l.b16 %v584
      %v665 = vpack.c.b16 %v617, %v617
      %v666 = vpack.c.b16 %v618, %v618
      %v667 = vpack.c.b16 %v619, %v619
      %v668 = vpack.c.b16 %v620, %v620
      %v669 = vpack.c.b16 %v621, %v621
      %v670 = vpack.c.b16 %v622, %v622
      %v671 = vpack.c.b16 %v623, %v623
      %v672 = vpack.c.b16 %v624, %v624
      %v673 = vpack.c.b16 %v625, %v625
      %v674 = vpack.c.b16 %v626, %v626
      %v675 = vpack.c.b16 %v627, %v627
      %v676 = vpack.c.b16 %v628, %v628
      %v677 = vpack.c.b16 %v629, %v629
      %v678 = vpack.c.b16 %v630, %v630
      %v679 = vpack.c.b16 %v631, %v631
      %v680 = vpack.c.b16 %v632, %v632
      %v681 = vpack.c.b16 %v633, %v633
      %v682 = vpack.c.b16 %v634, %v634
      %v683 = vpack.c.b16 %v635, %v635
      %v684 = vpack.c.b16 %v636, %v636
      %v685 = vpack.c.b16 %v637, %v637
      %v686 = vpack.c.b16 %v638, %v638
      %v687 = vpack.c.b16 %v639, %v639
      %v688 = vpack.c.b16 %v640, %v640
      %v689 = vpack.c.b16 %v641, %v641
      %v690 = vpack.c.b16 %v642, %v642
      %v691 = vpack.c.b16 %v643, %v643
      %v692 = vpack.c.b16 %v644, %v644
      %v693 = vpack.c.b16 %v645, %v645
      %v694 = vpack.c.b16 %v646, %v646
      %v695 = vpack.c.b16 %v647, %v647
      %v696 = vpack.c.b16 %v648, %v648
      %v697 = vpack.c.b16 %v649, %v649
      %v698 = vpack.c.b16 %v650, %v650
      %v699 = vpack.c.b16 %v651, %v651
      %v700 = vpack.c.b16 %v652, %v652
      %v701 = vpack.c.b16 %v653, %v653
      %v702 = vpack.c.b16 %v654, %v654
      %v703 = vpack.c.b16 %v655, %v655
      %v704 = vpack.c.b16 %v656, %v656
      %v705 = vpack.c.b16 %v657, %v657
      %v706 = vpack.c.b16 %v658, %v658
      %v707 = vpack.c.b16 %v659, %v659
      %v708 = vpack.c.b16 %v660, %v660
      %v709 = vpack.c.b16 %v661, %v661
      %v710 = vpack.c.b16 %v662, %v662
      %v711 = vpack.c.b16 %v663, %v663
      %v712 = vpack.c.b16 %v664, %v664
      %761 = vst [vmem:[%s213] sm:$0xf] %v665
      %762 = vst [vmem:[%s213 + $0x4] sm:$0xf] %v666
      %763 = vst [vmem:[%s213 + $0x8] sm:$0x1] %v667
      %764 = vst [vmem:[%s213 + $0xc] sm:$0xf] %v668
      %765 = vst [vmem:[%s213 + $0x10] sm:$0xf] %v669
      %766 = vst [vmem:[%s213 + $0x14] sm:$0x1] %v670
      %767 = vst [vmem:[%s213 + $0x18] sm:$0xf] %v671
      %768 = vst [vmem:[%s213 + $0x1c] sm:$0xf] %v672
      %769 = vst [vmem:[%s213 + $0x20] sm:$0x1] %v673
      %770 = vst [vmem:[%s213 + $0x24] sm:$0xf] %v674
      %771 = vst [vmem:[%s213 + $0x28] sm:$0xf] %v675
      %772 = vst [vmem:[%s213 + $0x2c] sm:$0x1] %v676
      %773 = vst [vmem:[%s213 + $0x30] sm:$0xf] %v677
      %774 = vst [vmem:[%s213 + $0x34] sm:$0xf] %v678
      %775 = vst [vmem:[%s213 + $0x38] sm:$0x1] %v679
      %776 = vst [vmem:[%s213 + $0x3c] sm:$0xf] %v680
      %777 = vst [vmem:[%s213 + $0x40] sm:$0xf] %v681
      %778 = vst [vmem:[%s213 + $0x44] sm:$0x1] %v682
      %779 = vst [vmem:[%s213 + $0x48] sm:$0xf] %v683
      %780 = vst [vmem:[%s213 + $0x4c] sm:$0xf] %v684
      %781 = vst [vmem:[%s213 + $0x50] sm:$0x1] %v685
      %782 = vst [vmem:[%s213 + $0x54] sm:$0xf] %v686
      %783 = vst [vmem:[%s213 + $0x58] sm:$0xf] %v687
      %784 = vst [vmem:[%s213 + $0x5c] sm:$0x1] %v688
      %785 = vst [vmem:[%s213 + $0x60] sm:$0xf] %v689
      %786 = vst [vmem:[%s213 + $0x64] sm:$0xf] %v690
      %787 = vst [vmem:[%s213 + $0x68] sm:$0x1] %v691
      %788 = vst [vmem:[%s213 + $0x6c] sm:$0xf] %v692
      %789 = vst [vmem:[%s213 + $0x70] sm:$0xf] %v693
      %790 = vst [vmem:[%s213 + $0x74] sm:$0x1] %v694
      %791 = vst [vmem:[%s213 + $0x78] sm:$0xf] %v695
      %792 = vst [vmem:[%s213 + $0x7c] sm:$0xf] %v696
      %793 = vst [vmem:[%s213 + $0x80] sm:$0x1] %v697
      %794 = vst [vmem:[%s213 + $0x84] sm:$0xf] %v698
      %795 = vst [vmem:[%s213 + $0x88] sm:$0xf] %v699
      %796 = vst [vmem:[%s213 + $0x8c] sm:$0x1] %v700
      %797 = vst [vmem:[%s213 + $0x90] sm:$0xf] %v701
      %798 = vst [vmem:[%s213 + $0x94] sm:$0xf] %v702
      %799 = vst [vmem:[%s213 + $0x98] sm:$0x1] %v703
      %800 = vst [vmem:[%s213 + $0x9c] sm:$0xf] %v704
      %801 = vst [vmem:[%s213 + $0xa0] sm:$0xf] %v705
      %802 = vst [vmem:[%s213 + $0xa4] sm:$0x1] %v706
      %803 = vst [vmem:[%s213 + $0xa8] sm:$0xf] %v707
      %804 = vst [vmem:[%s213 + $0xac] sm:$0xf] %v708
      %805 = vst [vmem:[%s213 + $0xb0] sm:$0x1] %v709
      %806 = vst [vmem:[%s213 + $0xb4] sm:$0xf] %v710
      %807 = vst [vmem:[%s213 + $0xb8] sm:$0xf] %v711
      %808 = vst [vmem:[%s213 + $0xbc] sm:$0x1] %v712
      %s809 = smul.u32 16, %s19
      %p810 = scmp.lt.s32.totalorder %s18, 1
      %s811 = scalar_select %p810, %s18, 1
      %p812 = scmp.lt.s32.totalorder %s809, 15
      %s813 = scalar_select %p812, %s809, 15
      %s814 = smul.addr %s813, 3
      %s815 = smul.addr %s811, 48
      %s816 = sadd.s32 %s814, %s815
      %s817 = smul.addr %s816, 4
      %s818 = scalar_lea.vmem %s3, %s817
      // Predicated region
      $region33: #{double_conv_forward.5} parent=31 // pred_check
        %p819 = pneg %p116
      $region34: #{double_conv_forward.5} parent=31 // pred_check_branch
        %821 = sbr.rel (%p819) target = $region36
      $region35: #{double_conv_forward.5} parent=31 // pred_region
        %s822 = smul.u32 16, %s19
      $region36: #{double_conv_forward.5} parent=31 // pred_fallthru
        _
    $region32: #{double_conv_forward.5} parent=5 // pred_fallthru
      _
    %p823 = scmp.le.s32.totalorder 2, %s9
    // Predicated region
    $region37: #{double_conv_forward.5} parent=5 // pred_check
      %p824 = pneg %p823
    $region38: #{double_conv_forward.5} parent=5 // pred_check_branch
      %826 = sbr.rel (%p824) target = $region40
    $region39: #{double_conv_forward.5} parent=5 // pred_region
      %s827 = ssub.s32 %s9, 2
      // Predicated region
      $region41: #{double_conv_forward.5} parent=39 // pred_check
        %p828 = pneg %p122
      $region42: #{double_conv_forward.5} parent=39 // pred_check_branch
        %830 = sbr.rel (%p828) target = $region44
      $region43: #{double_conv_forward.5} parent=39 // pred_region
        %s831 = smul.u32 16, %s21
        %p832 = scmp.lt.s32.totalorder %s20, 1
        %s833 = scalar_select %p832, %s20, 1
        %p834 = scmp.lt.s32.totalorder %s831, 15
        %s835 = scalar_select %p834, %s831, 15
        %s836 = smul.addr %s835, 3
        %s837 = smul.addr %s833, 48
        %s838 = sadd.s32 %s836, %s837
        %s839 = smul.addr %s838, 4
        %s840 = scalar_lea.vmem %s3, %s839
      $region44: #{double_conv_forward.5} parent=39 // pred_fallthru
        _
    $region40: #{double_conv_forward.5} parent=5 // pred_fallthru
      _
  $region6: #{double_conv_forward.5} parent=0 // loop_footer
    %s13 = sadd.s32 1, %s9
  $region7: #{double_conv_forward.5} parent=0 // loop_footer_branch
    %8 = sbr.rel target = $region3
  $region8: #{double_conv_forward.5} parent=0 // loop_exit
    _

// kernel: double_conv_forward.4
$region0: #{double_conv_forward.4}
  #allocation0 [shape = 'u32[]', space=smem, size = 0x4, offset = 0x4, fixed_abs, tag = 'smem constant byte address 0x4 - core index']
  #allocation1 [shape = 'u32[144,128]{1,0:T(1,128)}', space=vmem, size = 0x12000, scoped, tag = 'internal scratch']
  %s0 = inlined_call_operand.vmem [shape: bf16[2,16,18,128], index: 0, kind: input, shape index: {}, may-alias: {0,1,2}]
  %s1 = inlined_call_operand.vmem [shape: bf16[2,16,18,128], index: 1, kind: input, shape index: {}, may-alias: {0,1,2}]
  %s2 = inlined_call_operand.vmem [shape: bf16[2,16,18,128], index: 2, kind: input, shape index: {}, may-alias: {0,1,2}]
  %s3 = inlined_call_operand.vmem [shape: bf16[3,384,128], index: 3, kind: input, shape index: {}]
  %s4 = inlined_call_operand.vmem [shape: bf16[2,16,16,128], index: 4, kind: output, shape index: {0}]
  %s5 = inlined_call_operand.vmem [shape: f32[2,1,8,128], index: 5, kind: output, shape index: {1}]
  %6 = xla_tuple %s4, %s5
  %s7 = sld [smem:[#allocation0]]
  $region57: #{double_conv_forward.4} parent=0
    _
  %s9 = ssub.s32 1, %s7
  %s10 = scalar_select 0, %s9, %s7
  loop: start=0, step=1, limit=4
  $region2: #{double_conv_forward.4} parent=0 // loop_pre_header
    _
  $region3: #{double_conv_forward.4} parent=0 // loop_header
    %s12 = sphi 0, %s16
    %p13 = scmp.ge.s32.totalorder %s12, 4
    %s19 = sphi 0, %s31
    %s20 = sphi 0, %s27
    %s21 = sphi 0, %s19
    %s22 = sphi 0, %s20
    %s23 = sphi 0, %s21
    %s24 = sphi 0, %s22
    %s36 = sphi 0, %s38
    %s39 = sphi 0, %s36
    %s40 = sphi 0, %s39
    %s56 = sphi 0, %s40
    %s72 = sphi 0, %s74
    %s75 = sphi 0, %s72
    %s76 = sphi 0, %s75
    %s92 = sphi 0, %s76
    %s108 = sphi 0, %s110
    %s111 = sphi 0, %s108
    %s112 = sphi 0, %s111
    %s128 = sphi 0, %s112
    %s132 = sphi 0, %s132
    %s134 = sphi 0, %s132
    %s135 = sphi 0, %s134
    %s149 = sphi 0, %s135
    %s157 = sphi 0, %s159
    %s160 = sphi 0, %s157
    %s161 = sphi 0, %s160
    %s177 = sphi 0, %s161
    %s185 = sphi 0, %s187
    %s188 = sphi 0, %s185
    %s189 = sphi 0, %s188
    %s205 = sphi 0, %s189
  $region4: #{double_conv_forward.4} parent=0 // loop_header_branch
    %15 = sbr.rel (%p13) target = $region8
  $region5: #{double_conv_forward.4} parent=0 // loop_body
    %s17 = ssub.s32 %s12, 1
    %s18 = ssub.s32 %s12, 2
    %s25 = sadd.s32 1, %s20
    %p26 = scmp.ge.s32.totalorder %s25, 1
    %s27 = scalar_select %p26, 0, %s25
    %s28 = sadd.s32 1, %s19
    %s29 = scalar_select %p26, %s28, %s19
    %p30 = scmp.ge.s32.totalorder %s29, 2
    %s31 = scalar_select %p30, 0, %s29
    %s32 = ssub.s32 %s19, %s31
    %s33 = ssub.s32 %s20, %s27
    %s34 = sor.u32 %s32, %s33
    %p35 = scmp.eq.s32.totalorder %s34, 0
    %s37 = sadd.s32 %s36, 1
    %s38 = scalar_select %p35, %s36, %s37
    %p41 = pneg %p35
    %p42 = scmp.eq.s32.totalorder %s12, 1
    %p43 = por %p41, %p42
    %p44 = scmp.ne.s32.totalorder %s36, %s39
    %p45 = scmp.eq.s32.totalorder %s12, 0
    %p46 = por %p44, %p45
    %p47 = scmp.ne.s32.totalorder %s36, %s39
    %p48 = scmp.eq.s32.totalorder %s17, 1
    %p49 = por %p47, %p48
    %p50 = scmp.ne.s32.totalorder %s39, %s40
    %p51 = scmp.eq.s32.totalorder %s17, 0
    %p52 = por %p50, %p51
    %p53 = scmp.ne.s32.totalorder %s39, %s40
    %p54 = scmp.eq.s32.totalorder %s18, 1
    %p55 = por %p53, %p54
    %p57 = scmp.ne.s32.totalorder %s40, %s56
    %p58 = scmp.eq.s32.totalorder %s18, 0
    %p59 = por %p57, %p58
    %s60 = smul.u32 %s20, 2
    %s61 = ssub.s32 %s60, 1
    %p62 = scmp.gt.s32.totalorder %s61, 0
    %s63 = scalar_select %p62, %s61, 0
    %s64 = smul.u32 %s27, 2
    %s65 = ssub.s32 %s64, 1
    %p66 = scmp.gt.s32.totalorder %s65, 0
    %s67 = scalar_select %p66, %s65, 0
    %s68 = ssub.s32 %s19, %s31
    %s69 = ssub.s32 %s63, %s67
    %s70 = sor.u32 %s68, %s69
    %p71 = scmp.eq.s32.totalorder %s70, 0
    %s73 = sadd.s32 %s72, 1
    %s74 = scalar_select %p71, %s72, %s73
    %p77 = pneg %p71
    %p78 = scmp.eq.s32.totalorder %s12, 1
    %p79 = por %p77, %p78
    %p80 = scmp.ne.s32.totalorder %s72, %s75
    %p81 = scmp.eq.s32.totalorder %s12, 0
    %p82 = por %p80, %p81
    %p83 = scmp.ne.s32.totalorder %s72, %s75
    %p84 = scmp.eq.s32.totalorder %s17, 1
    %p85 = por %p83, %p84
    %p86 = scmp.ne.s32.totalorder %s75, %s76
    %p87 = scmp.eq.s32.totalorder %s17, 0
    %p88 = por %p86, %p87
    %p89 = scmp.ne.s32.totalorder %s75, %s76
    %p90 = scmp.eq.s32.totalorder %s18, 1
    %p91 = por %p89, %p90
    %p93 = scmp.ne.s32.totalorder %s76, %s92
    %p94 = scmp.eq.s32.totalorder %s18, 0
    %p95 = por %p93, %p94
    %s96 = sadd.s32 %s20, 1
    %s97 = smul.u32 %s96, 2
    %p98 = scmp.lt.s32.totalorder %s97, 1
    %s99 = scalar_select %p98, %s97, 1
    %s100 = sadd.s32 %s27, 1
    %s101 = smul.u32 %s100, 2
    %p102 = scmp.lt.s32.totalorder %s101, 1
    %s103 = scalar_select %p102, %s101, 1
    %s104 = ssub.s32 %s19, %s31
    %s105 = ssub.s32 %s99, %s103
    %s106 = sor.u32 %s104, %s105
    %p107 = scmp.eq.s32.totalorder %s106, 0
    %s109 = sadd.s32 %s108, 1
    %s110 = scalar_select %p107, %s108, %s109
    %p113 = pneg %p107
    %p114 = scmp.eq.s32.totalorder %s12, 1
    %p115 = por %p113, %p114
    %p116 = scmp.ne.s32.totalorder %s108, %s111
    %p117 = scmp.eq.s32.totalorder %s12, 0
    %p118 = por %p116, %p117
    %p119 = scmp.ne.s32.totalorder %s108, %s111
    %p120 = scmp.eq.s32.totalorder %s17, 1
    %p121 = por %p119, %p120
    %p122 = scmp.ne.s32.totalorder %s111, %s112
    %p123 = scmp.eq.s32.totalorder %s17, 0
    %p124 = por %p122, %p123
    %p125 = scmp.ne.s32.totalorder %s111, %s112
    %p126 = scmp.eq.s32.totalorder %s18, 1
    %p127 = por %p125, %p126
    %p129 = scmp.ne.s32.totalorder %s112, %s128
    %p130 = scmp.eq.s32.totalorder %s18, 0
    %p131 = por %p129, %p130
    %s133 = sadd.s32 %s132, 1
    %p136 = scmp.eq.s32.totalorder %s12, 1
    %p137 = scmp.ne.s32.totalorder %s132, %s134
    %p138 = scmp.eq.s32.totalorder %s12, 0
    %p139 = por %p137, %p138
    %p140 = scmp.ne.s32.totalorder %s132, %s134
    %p141 = scmp.eq.s32.totalorder %s17, 1
    %p142 = por %p140, %p141
    %p143 = scmp.ne.s32.totalorder %s134, %s135
    %p144 = scmp.eq.s32.totalorder %s17, 0
    %p145 = por %p143, %p144
    %p146 = scmp.ne.s32.totalorder %s134, %s135
    %p147 = scmp.eq.s32.totalorder %s18, 1
    %p148 = por %p146, %p147
    %p150 = scmp.ne.s32.totalorder %s135, %s149
    %p151 = scmp.eq.s32.totalorder %s18, 0
    %p152 = por %p150, %p151
    %s153 = ssub.s32 %s19, %s31
    %s154 = ssub.s32 %s20, %s27
    %s155 = sor.u32 %s153, %s154
    %p156 = scmp.eq.s32.totalorder %s155, 0
    %s158 = sadd.s32 %s157, 1
    %s159 = scalar_select %p156, %s157, %s158
    %p162 = pneg %p156
    %p163 = scmp.eq.s32.totalorder %s12, 1
    %p164 = por %p162, %p163
    %p165 = scmp.ne.s32.totalorder %s157, %s160
    %p166 = scmp.eq.s32.totalorder %s12, 0
    %p167 = por %p165, %p166
    %p168 = scmp.ne.s32.totalorder %s157, %s160
    %p169 = scmp.eq.s32.totalorder %s17, 1
    %p170 = por %p168, %p169
    %p171 = scmp.ne.s32.totalorder %s160, %s161
    %p172 = scmp.eq.s32.totalorder %s17, 0
    %p173 = por %p171, %p172
    %p174 = scmp.ne.s32.totalorder %s160, %s161
    %p175 = scmp.eq.s32.totalorder %s18, 1
    %p176 = por %p174, %p175
    %p178 = scmp.ne.s32.totalorder %s161, %s177
    %p179 = scmp.eq.s32.totalorder %s18, 0
    %p180 = por %p178, %p179
    %s181 = ssub.s32 %s19, %s31
    %s182 = ssub.s32 %s20, %s27
    %s183 = sor.u32 %s181, %s182
    %p184 = scmp.eq.s32.totalorder %s183, 0
    %s186 = sadd.s32 %s185, 1
    %s187 = scalar_select %p184, %s185, %s186
    %p190 = pneg %p184
    %p191 = scmp.eq.s32.totalorder %s12, 1
    %p192 = por %p190, %p191
    %p193 = scmp.ne.s32.totalorder %s185, %s188
    %p194 = scmp.eq.s32.totalorder %s12, 0
    %p195 = por %p193, %p194
    %p196 = scmp.ne.s32.totalorder %s185, %s188
    %p197 = scmp.eq.s32.totalorder %s17, 1
    %p198 = por %p196, %p197
    %p199 = scmp.ne.s32.totalorder %s188, %s189
    %p200 = scmp.eq.s32.totalorder %s17, 0
    %p201 = por %p199, %p200
    %p202 = scmp.ne.s32.totalorder %s188, %s189
    %p203 = scmp.eq.s32.totalorder %s18, 1
    %p204 = por %p202, %p203
    %p206 = scmp.ne.s32.totalorder %s189, %s205
    %p207 = scmp.eq.s32.totalorder %s18, 0
    %p208 = por %p206, %p207
    %p209 = scmp.le.s32.totalorder 1, %s12
    %p210 = scmp.lt.s32.totalorder %s12, 3
    %p211 = pnand %p209, %p210
    %p212 = pneg %p211
    // Predicated region
    $region9: #{double_conv_forward.4} parent=5 // pred_check
      _
    $region10: #{double_conv_forward.4} parent=5 // pred_check_branch
      %214 = sbr.rel (%p211) target = $region12
    $region11: #{double_conv_forward.4} parent=5 // pred_region
      %s215 = ssub.s32 %s12, 1
      // Predicated region
      $region13: #{double_conv_forward.4} parent=11 // pred_check
        %p216 = pneg %p145
      $region14: #{double_conv_forward.4} parent=11 // pred_check_branch
        %218 = sbr.rel (%p216) target = $region16
      $region15: #{double_conv_forward.4} parent=11 // pred_region
        _
      $region16: #{double_conv_forward.4} parent=11 // pred_fallthru
        _
    $region12: #{double_conv_forward.4} parent=5 // pred_fallthru
      _
    %p219 = scmp.lt.s32.totalorder %s12, 2
    // Predicated region
    $region17: #{double_conv_forward.4} parent=5 // pred_check
      %p220 = pneg %p219
    $region18: #{double_conv_forward.4} parent=5 // pred_check_branch
      %222 = sbr.rel (%p220) target = $region20
    $region19: #{double_conv_forward.4} parent=5 // pred_region
      // Predicated region
      $region21: #{double_conv_forward.4} parent=19 // pred_check
        %p223 = pneg %p46
      $region22: #{double_conv_forward.4} parent=19 // pred_check_branch
        %225 = sbr.rel (%p223) target = $region24
      $region23: #{double_conv_forward.4} parent=19 // pred_region
        %s226 = smul.u32 16, %s20
        %p227 = scmp.lt.s32.totalorder %s19, 1
        %s228 = scalar_select %p227, %s19, 1
        %p229 = scmp.lt.s32.totalorder %s226, 15
        %s230 = scalar_select %p229, %s226, 15
        %s231 = smul.addr %s230, 3
        %s232 = smul.addr %s228, 48
        %s233 = sadd.s32 %s231, %s232
        %s234 = smul.addr %s233, 4
        %s235 = scalar_lea.vmem %s0, %s234
        %s236 = smul.u32 16, %s20
      $region24: #{double_conv_forward.4} parent=19 // pred_fallthru
        _
      // Predicated region
      $region25: #{double_conv_forward.4} parent=19 // pred_check
        %p237 = pneg %p82
      $region26: #{double_conv_forward.4} parent=19 // pred_check_branch
        %239 = sbr.rel (%p237) target = $region28
      $region27: #{double_conv_forward.4} parent=19 // pred_region
        %s240 = smul.u32 %s20, 2
        %s241 = ssub.s32 %s240, 1
        %p242 = scmp.gt.s32.totalorder %s241, 0
        %s243 = scalar_select %p242, %s241, 0
        %s244 = smul.u32 8, %s243
        %p245 = scmp.lt.s32.totalorder %s19, 1
        %s246 = scalar_select %p245, %s19, 1
        %p247 = scmp.lt.s32.totalorder %s244, 15
        %s248 = scalar_select %p247, %s244, 15
        %s249 = smul.addr %s248, 3
        %s250 = smul.addr %s246, 48
        %s251 = sadd.s32 %s249, %s250
        %s252 = smul.addr %s251, 4
        %s253 = scalar_lea.vmem %s1, %s252
        %s254 = smul.u32 %s20, 2
        %s255 = ssub.s32 %s254, 1
        %p256 = scmp.gt.s32.totalorder %s255, 0
        %s257 = scalar_select %p256, %s255, 0
        %s258 = smul.u32 8, %s257
      $region28: #{double_conv_forward.4} parent=19 // pred_fallthru
        _
      // Predicated region
      $region29: #{double_conv_forward.4} parent=19 // pred_check
        %p259 = pneg %p118
      $region30: #{double_conv_forward.4} parent=19 // pred_check_branch
        %261 = sbr.rel (%p259) target = $region32
      $region31: #{double_conv_forward.4} parent=19 // pred_region
        %s262 = sadd.s32 %s20, 1
        %s263 = smul.u32 %s262, 2
        %p264 = scmp.lt.s32.totalorder %s263, 1
        %s265 = scalar_select %p264, %s263, 1
        %s266 = smul.u32 8, %s265
        %p267 = scmp.lt.s32.totalorder %s19, 1
        %s268 = scalar_select %p267, %s19, 1
        %p269 = scmp.lt.s32.totalorder %s266, 15
        %s270 = scalar_select %p269, %s266, 15
        %s271 = smul.addr %s270, 3
        %s272 = smul.addr %s268, 48
        %s273 = sadd.s32 %s271, %s272
        %s274 = smul.addr %s273, 4
        %s275 = scalar_lea.vmem %s2, %s274
        %s276 = sadd.s32 %s20, 1
        %s277 = smul.u32 %s276, 2
        %p278 = scmp.lt.s32.totalorder %s277, 1
        %s279 = scalar_select %p278, %s277, 1
        %s280 = smul.u32 8, %s279
      $region32: #{double_conv_forward.4} parent=19 // pred_fallthru
        _
    $region20: #{double_conv_forward.4} parent=5 // pred_fallthru
      _
    %p281 = scmp.le.s32.totalorder 1, %s12
    %p282 = scmp.lt.s32.totalorder %s12, 3
    %p283 = pnand %p281, %p282
    %p284 = pneg %p283
    // Predicated region
    $region33: #{double_conv_forward.4} parent=5 // pred_check
      _
    $region34: #{double_conv_forward.4} parent=5 // pred_check_branch
      %286 = sbr.rel (%p283) target = $region36
    $region35: #{double_conv_forward.4} parent=5 // pred_region
      %s287 = ssub.s32 %s12, 1
      %s288 = smul.u32 16, %s22
      %p289 = scmp.lt.s32.totalorder %s21, 1
      %s290 = scalar_select %p289, %s21, 1
      %p291 = scmp.lt.s32.totalorder %s288, 15
      %s292 = scalar_select %p291, %s288, 15
      %s293 = smul.addr %s292, 3
      %s294 = smul.addr %s290, 48
      %s295 = sadd.s32 %s293, %s294
      %s296 = smul.addr %s295, 4
      %s297 = scalar_lea.vmem %s0, %s296
      %p298 = pneg %p52
      %p299 = pneg %p49
      %s300 = smul.u32 %s22, 2
      %s301 = ssub.s32 %s300, 1
      %p302 = scmp.gt.s32.totalorder %s301, 0
      %s303 = scalar_select %p302, %s301, 0
      %s304 = smul.u32 8, %s303
      %p305 = scmp.lt.s32.totalorder %s21, 1
      %s306 = scalar_select %p305, %s21, 1
      %p307 = scmp.lt.s32.totalorder %s304, 15
      %s308 = scalar_select %p307, %s304, 15
      %s309 = smul.addr %s308, 3
      %s310 = smul.addr %s306, 48
      %s311 = sadd.s32 %s309, %s310
      %s312 = smul.addr %s311, 4
      %s313 = scalar_lea.vmem %s1, %s312
      %p314 = pneg %p88
      %p315 = pneg %p85
      %s316 = sadd.s32 %s22, 1
      %s317 = smul.u32 %s316, 2
      %p318 = scmp.lt.s32.totalorder %s317, 1
      %s319 = scalar_select %p318, %s317, 1
      %s320 = smul.u32 8, %s319
      %p321 = scmp.lt.s32.totalorder %s21, 1
      %s322 = scalar_select %p321, %s21, 1
      %p323 = scmp.lt.s32.totalorder %s320, 15
      %s324 = scalar_select %p323, %s320, 15
      %s325 = smul.addr %s324, 3
      %s326 = smul.addr %s322, 48
      %s327 = sadd.s32 %s325, %s326
      %s328 = smul.addr %s327, 4
      %s329 = scalar_lea.vmem %s2, %s328
      %p330 = pneg %p124
      %p331 = pneg %p121
      %p332 = pneg %p145
      %p333 = pneg %p142
      %p334 = pneg %p173
      %p335 = pneg %p170
      %s336 = smul.u32 16, %s22
      %p337 = scmp.lt.s32.totalorder %s21, 1
      %s338 = scalar_select %p337, %s21, 1
      %p339 = scmp.lt.s32.totalorder %s336, 15
      %s340 = scalar_select %p339, %s336, 15
      %s341 = smul.addr %s340, 2
      %s342 = smul.addr %s338, 32
      %s343 = sadd.s32 %s341, %s342
      %s344 = smul.addr %s343, 4
      %s345 = scalar_lea.vmem %s4, %s344
      %p346 = pneg %p201
      %p347 = pneg %p198
      %p348 = scmp.lt.s32.totalorder %s21, 1
      %s349 = scalar_select %p348, %s21, 1
      %p350 = scmp.lt.s32.totalorder %s22, 0
      %s351 = scalar_select %p350, %s22, 0
      %s352 = sadd.s32 %s351, %s349
      %s353 = smul.addr %s352, 8
      %s354 = scalar_lea.vmem %s5, %s353
      %s355 = smul.u32 16, %s22
      %p356 = scmp.lt.s32.totalorder %s21, 1
      %s357 = scalar_select %p356, %s21, 1
      %p358 = scmp.lt.s32.totalorder %s355, 15
      %s359 = scalar_select %p358, %s355, 15
      %s360 = smul.addr %s359, 3
      %s361 = smul.addr %s357, 48
      %s362 = sadd.s32 %s360, %s361
      %s363 = smul.addr %s362, 4
      %s364 = scalar_lea.vmem %s0, %s363
      %s365 = smul.u32 16, %s22
      %s366 = smul.u32 %s22, 2
      %s367 = ssub.s32 %s366, 1
      %p368 = scmp.gt.s32.totalorder %s367, 0
      %s369 = scalar_select %p368, %s367, 0
      %s370 = smul.u32 8, %s369
      %p371 = scmp.lt.s32.totalorder %s21, 1
      %s372 = scalar_select %p371, %s21, 1
      %p373 = scmp.lt.s32.totalorder %s370, 15
      %s374 = scalar_select %p373, %s370, 15
      %s375 = smul.addr %s374, 3
      %s376 = smul.addr %s372, 48
      %s377 = sadd.s32 %s375, %s376
      %s378 = smul.addr %s377, 4
      %s379 = scalar_lea.vmem %s1, %s378
      %s380 = smul.u32 %s22, 2
      %s381 = ssub.s32 %s380, 1
      %p382 = scmp.gt.s32.totalorder %s381, 0
      %s383 = scalar_select %p382, %s381, 0
      %s384 = smul.u32 8, %s383
      %s385 = sadd.s32 %s22, 1
      %s386 = smul.u32 %s385, 2
      %p387 = scmp.lt.s32.totalorder %s386, 1
      %s388 = scalar_select %p387, %s386, 1
      %s389 = smul.u32 8, %s388
      %p390 = scmp.lt.s32.totalorder %s21, 1
      %s391 = scalar_select %p390, %s21, 1
      %p392 = scmp.lt.s32.totalorder %s389, 15
      %s393 = scalar_select %p392, %s389, 15
      %s394 = smul.addr %s393, 3
      %s395 = smul.addr %s391, 48
      %s396 = sadd.s32 %s394, %s395
      %s397 = smul.addr %s396, 4
      %s398 = scalar_lea.vmem %s2, %s397
      %s399 = sadd.s32 %s22, 1
      %s400 = smul.u32 %s399, 2
      %p401 = scmp.lt.s32.totalorder %s400, 1
      %s402 = scalar_select %p401, %s400, 1
      %s403 = smul.u32 8, %s402
      %s404 = smul.u32 16, %s22
      %p405 = scmp.lt.s32.totalorder %s21, 1
      %s406 = scalar_select %p405, %s21, 1
      %p407 = scmp.lt.s32.totalorder %s404, 15
      %s408 = scalar_select %p407, %s404, 15
      %s409 = smul.addr %s408, 2
      %s410 = smul.addr %s406, 32
      %s411 = sadd.s32 %s409, %s410
      %s412 = smul.addr %s411, 4
      %s413 = scalar_lea.vmem %s4, %s412
      %s414 = smul.u32 16, %s22
      %p415 = scmp.lt.s32.totalorder %s21, 1
      %s416 = scalar_select %p415, %s21, 1
      %p417 = scmp.lt.s32.totalorder %s22, 0
      %s418 = scalar_select %p417, %s22, 0
      %s419 = sadd.s32 %s418, %s416
      %s420 = smul.addr %s419, 8
      %s421 = scalar_lea.vmem %s5, %s420
      %v423 = vld [vmem:[%s364] sm:$0xf]
      %v424 = vld [vmem:[%s364 + $0x4] sm:$0xf]
      %v425 = vld [vmem:[%s364 + $0x8] sm:$0x1]
      %v426 = vld [vmem:[%s364 + $0xc] sm:$0xf]
      %v427 = vld [vmem:[%s364 + $0x10] sm:$0xf]
      %v428 = vld [vmem:[%s364 + $0x14] sm:$0x1]
      %v429 = vld [vmem:[%s364 + $0x18] sm:$0xf]
      %v430 = vld [vmem:[%s364 + $0x1c] sm:$0xf]
      %v431 = vld [vmem:[%s364 + $0x20] sm:$0x1]
      %v432 = vld [vmem:[%s364 + $0x24] sm:$0xf]
      %v433 = vld [vmem:[%s364 + $0x28] sm:$0xf]
      %v434 = vld [vmem:[%s364 + $0x2c] sm:$0x1]
      %v435 = vld [vmem:[%s364 + $0x30] sm:$0xf]
      %v436 = vld [vmem:[%s364 + $0x34] sm:$0xf]
      %v437 = vld [vmem:[%s364 + $0x38] sm:$0x1]
      %v438 = vld [vmem:[%s364 + $0x3c] sm:$0xf]
      %v439 = vld [vmem:[%s364 + $0x40] sm:$0xf]
      %v440 = vld [vmem:[%s364 + $0x44] sm:$0x1]
      %v441 = vld [vmem:[%s364 + $0x48] sm:$0xf]
      %v442 = vld [vmem:[%s364 + $0x4c] sm:$0xf]
      %v443 = vld [vmem:[%s364 + $0x50] sm:$0x1]
      %v444 = vld [vmem:[%s364 + $0x54] sm:$0xf]
      %v445 = vld [vmem:[%s364 + $0x58] sm:$0xf]
      %v446 = vld [vmem:[%s364 + $0x5c] sm:$0x1]
      %v447 = vld [vmem:[%s364 + $0x60] sm:$0xf]
      %v448 = vld [vmem:[%s364 + $0x64] sm:$0xf]
      %v449 = vld [vmem:[%s364 + $0x68] sm:$0x1]
      %v450 = vld [vmem:[%s364 + $0x6c] sm:$0xf]
      %v451 = vld [vmem:[%s364 + $0x70] sm:$0xf]
      %v452 = vld [vmem:[%s364 + $0x74] sm:$0x1]
      %v453 = vld [vmem:[%s364 + $0x78] sm:$0xf]
      %v454 = vld [vmem:[%s364 + $0x7c] sm:$0xf]
      %v455 = vld [vmem:[%s364 + $0x80] sm:$0x1]
      %v456 = vld [vmem:[%s364 + $0x84] sm:$0xf]
      %v457 = vld [vmem:[%s364 + $0x88] sm:$0xf]
      %v458 = vld [vmem:[%s364 + $0x8c] sm:$0x1]
      %v459 = vld [vmem:[%s364 + $0x90] sm:$0xf]
      %v460 = vld [vmem:[%s364 + $0x94] sm:$0xf]
      %v461 = vld [vmem:[%s364 + $0x98] sm:$0x1]
      %v462 = vld [vmem:[%s364 + $0x9c] sm:$0xf]
      %v463 = vld [vmem:[%s364 + $0xa0] sm:$0xf]
      %v464 = vld [vmem:[%s364 + $0xa4] sm:$0x1]
      %v465 = vld [vmem:[%s364 + $0xa8] sm:$0xf]
      %v466 = vld [vmem:[%s364 + $0xac] sm:$0xf]
      %v467 = vld [vmem:[%s364 + $0xb0] sm:$0x1]
      %v468 = vld [vmem:[%s364 + $0xb4] sm:$0xf]
      %v469 = vld [vmem:[%s364 + $0xb8] sm:$0xf]
      %v470 = vld [vmem:[%s364 + $0xbc] sm:$0x1]
      %p471 = scmp.eq.s32.totalorder %s22, 0
      %s472 = scalar_select %p471, 0.0, 1.0
      %p474 = scmp.ne.f32.partialorder %s472, %s472
      %s475 = sshrl.u32 %s472, 16
      %s476 = sand.u32 %s475, 1
      %s477 = sadd.s32 32767, %s476
      %s478 = sadd.s32 %s472, %s477
      %s479 = sand.u32 %s478, 4294901760
      %s480 = scalar_select %p474, 2143289344, %s479
      %s482 = sshrl.u32 %s480, 16
      %s483 = scalar_lea.vmem %s379, 84
      %v484 = vld [vmem:[%s483] sm:$0xf]
      %v485 = vld [vmem:[%s483 + $0x4] sm:$0xf]
      %v486 = vld [vmem:[%s483 + $0x8] sm:$0x1]
      %s487 = sshll.u32 %s482, 16
      %s488 = sor.u32 %s482, %s487
      %v489 = vstv %s488
      %v491 = vmul.bf16 %v484, %v489
      %v492 = vmul.bf16 %v485, %v489
      %v493 = vmul.bf16 %v486, %v489
      %v494 = vld [vmem:[%s398] sm:$0xf]
      %v495 = vld [vmem:[%s398 + $0x4] sm:$0xf]
      %v496 = vld [vmem:[%s398 + $0x8] sm:$0x1]
      %v497 = vmul.bf16 %v494, %v489
      %v498 = vmul.bf16 %v495, %v489
      %v499 = vmul.bf16 %v496, %v489
      %v532 = vunpack.c.l.b16 %v491
      %v533 = vunpack.c.l.b16 %v492
      %v534 = vunpack.c.l.b16 %v423
      %v535 = vunpack.c.l.b16 %v424
      %v536 = vunpack.c.l.b16 %v426
      %v537 = vunpack.c.l.b16 %v427
      %v538 = vunpack.c.l.b16 %v429
      %v539 = vunpack.c.l.b16 %v430
      %v540 = vunpack.c.l.b16 %v432
      %v541 = vunpack.c.l.b16 %v433
      %v542 = vunpack.c.l.b16 %v435
      %v543 = vunpack.c.l.b16 %v436
      %v544 = vunpack.c.l.b16 %v438
      %v545 = vunpack.c.l.b16 %v439
      %v546 = vunpack.c.l.b16 %v441
      %v547 = vunpack.c.l.b16 %v442
      %v548 = vunpack.c.l.b16 %v444
      %v549 = vunpack.c.l.b16 %v445
      %v550 = vunpack.c.l.b16 %v447
      %v551 = vunpack.c.l.b16 %v448
      %v552 = vunpack.c.l.b16 %v450
      %v553 = vunpack.c.l.b16 %v451
      %v554 = vunpack.c.l.b16 %v453
      %v555 = vunpack.c.l.b16 %v454
      %v556 = vunpack.c.l.b16 %v456
      %v557 = vunpack.c.l.b16 %v457
      %v558 = vunpack.c.l.b16 %v459
      %v559 = vunpack.c.l.b16 %v460
      %v560 = vunpack.c.l.b16 %v462
      %v561 = vunpack.c.l.b16 %v463
      %v562 = vunpack.c.l.b16 %v465
      %v563 = vunpack.c.l.b16 %v466
      %v564 = vpack.c.b16 %v533, %v532
      %v565 = vpack.c.b16 %v535, %v534
      %v566 = vpack.c.b16 %v537, %v536
      %v567 = vpack.c.b16 %v539, %v538
      %v568 = vpack.c.b16 %v541, %v540
      %v569 = vpack.c.b16 %v543, %v542
      %v570 = vpack.c.b16 %v545, %v544
      %v571 = vpack.c.b16 %v547, %v546
      %v572 = vpack.c.b16 %v549, %v548
      %v573 = vpack.c.b16 %v551, %v550
      %v574 = vpack.c.b16 %v553, %v552
      %v575 = vpack.c.b16 %v555, %v554
      %v576 = vpack.c.b16 %v557, %v556
      %v577 = vpack.c.b16 %v559, %v558
      %v578 = vpack.c.b16 %v561, %v560
      %v579 = vpack.c.b16 %v563, %v562
      %v612 = vunpack.c.l.b16 %v493
      %v613 = vunpack.c.l.b16 %v425
      %v614 = vunpack.c.l.b16 %v428
      %v615 = vunpack.c.l.b16 %v431
      %v616 = vunpack.c.l.b16 %v434
      %v617 = vunpack.c.l.b16 %v437
      %v618 = vunpack.c.l.b16 %v440
      %v619 = vunpack.c.l.b16 %v443
      %v620 = vunpack.c.l.b16 %v446
      %v621 = vunpack.c.l.b16 %v449
      %v622 = vunpack.c.l.b16 %v452
      %v623 = vunpack.c.l.b16 %v455
      %v624 = vunpack.c.l.b16 %v458
      %v625 = vunpack.c.l.b16 %v461
      %v626 = vunpack.c.l.b16 %v464
      %v627 = vunpack.c.l.b16 %v467
      %v628 = vpack.c.b16 %v612, %v612
      %v629 = vpack.c.b16 %v613, %v613
      %v630 = vpack.c.b16 %v614, %v614
      %v631 = vpack.c.b16 %v615, %v615
      %v632 = vpack.c.b16 %v616, %v616
      %v633 = vpack.c.b16 %v617, %v617
      %v634 = vpack.c.b16 %v618, %v618
      %v635 = vpack.c.b16 %v619, %v619
      %v636 = vpack.c.b16 %v620, %v620
      %v637 = vpack.c.b16 %v621, %v621
      %v638 = vpack.c.b16 %v622, %v622
      %v639 = vpack.c.b16 %v623, %v623
      %v640 = vpack.c.b16 %v624, %v624
      %v641 = vpack.c.b16 %v625, %v625
      %v642 = vpack.c.b16 %v626, %v626
      %v643 = vpack.c.b16 %v627, %v627
      %vm644 = vsmask.f32 7424
      %v646 = vshrl.u32 %v564, 16
      %v648 = vshll.u32 %v564, 16
      %v650 = vrot.slane %v648, 1
      %v651 = vor.u32 %v646, %v650
      %v653 = vshll.u32 %v628, 16
      %v655 = vrot.slane %v653, 1
      %v656 = vsel %vm644, %v651, %v655
      %v658 = vshrl.u32 %v565, 16
      %v660 = vshll.u32 %v565, 16
      %v662 = vrot.slane %v660, 1
      %v663 = vor.u32 %v658, %v662
      %v665 = vshll.u32 %v629, 16
      %v667 = vrot.slane %v665, 1
      %v668 = vsel %vm644, %v663, %v667
      %v670 = vshrl.u32 %v566, 16
      %v672 = vshll.u32 %v566, 16
      %v674 = vrot.slane %v672, 1
      %v675 = vor.u32 %v670, %v674
      %v677 = vshll.u32 %v630, 16
      %v679 = vrot.slane %v677, 1
      %v680 = vsel %vm644, %v675, %v679
      %v682 = vshrl.u32 %v567, 16
      %v684 = vshll.u32 %v567, 16
      %v686 = vrot.slane %v684, 1
      %v687 = vor.u32 %v682, %v686
      %v689 = vshll.u32 %v631, 16
      %v691 = vrot.slane %v689, 1
      %v692 = vsel %vm644, %v687, %v691
      %v694 = vshrl.u32 %v568, 16
      %v696 = vshll.u32 %v568, 16
      %v698 = vrot.slane %v696, 1
      %v699 = vor.u32 %v694, %v698
      %v701 = vshll.u32 %v632, 16
      %v703 = vrot.slane %v701, 1
      %v704 = vsel %vm644, %v699, %v703
      %v706 = vshrl.u32 %v569, 16
      %v708 = vshll.u32 %v569, 16
      %v710 = vrot.slane %v708, 1
      %v711 = vor.u32 %v706, %v710
      %v713 = vshll.u32 %v633, 16
      %v715 = vrot.slane %v713, 1
      %v716 = vsel %vm644, %v711, %v715
      %v718 = vshrl.u32 %v570, 16
      %v720 = vshll.u32 %v570, 16
      %v722 = vrot.slane %v720, 1
      %v723 = vor.u32 %v718, %v722
      %v725 = vshll.u32 %v634, 16
      %v727 = vrot.slane %v725, 1
      %v728 = vsel %vm644, %v723, %v727
      %v730 = vshrl.u32 %v571, 16
      %v732 = vshll.u32 %v571, 16
      %v734 = vrot.slane %v732, 1
      %v735 = vor.u32 %v730, %v734
      %v737 = vshll.u32 %v635, 16
      %v739 = vrot.slane %v737, 1
      %v740 = vsel %vm644, %v735, %v739
      %v742 = vshrl.u32 %v572, 16
      %v744 = vshll.u32 %v572, 16
      %v746 = vrot.slane %v744, 1
      %v747 = vor.u32 %v742, %v746
      %v749 = vshll.u32 %v636, 16
      %v751 = vrot.slane %v749, 1
      %v752 = vsel %vm644, %v747, %v751
      %v754 = vshrl.u32 %v573, 16
      %v756 = vshll.u32 %v573, 16
      %v758 = vrot.slane %v756, 1
      %v759 = vor.u32 %v754, %v758
      %v761 = vshll.u32 %v637, 16
      %v763 = vrot.slane %v761, 1
      %v764 = vsel %vm644, %v759, %v763
      %v766 = vshrl.u32 %v574, 16
      %v768 = vshll.u32 %v574, 16
      %v770 = vrot.slane %v768, 1
      %v771 = vor.u32 %v766, %v770
      %v773 = vshll.u32 %v638, 16
      %v775 = vrot.slane %v773, 1
      %v776 = vsel %vm644, %v771, %v775
      %v778 = vshrl.u32 %v575, 16
      %v780 = vshll.u32 %v575, 16
      %v782 = vrot.slane %v780, 1
      %v783 = vor.u32 %v778, %v782
      %v785 = vshll.u32 %v639, 16
      %v787 = vrot.slane %v785, 1
      %v788 = vsel %vm644, %v783, %v787
      %v790 = vshrl.u32 %v576, 16
      %v792 = vshll.u32 %v576, 16
      %v794 = vrot.slane %v792, 1
      %v795 = vor.u32 %v790, %v794
      %v797 = vshll.u32 %v640, 16
      %v799 = vrot.slane %v797, 1
      %v800 = vsel %vm644, %v795, %v799
      %v802 = vshrl.u32 %v577, 16
      %v804 = vshll.u32 %v577, 16
      %v806 = vrot.slane %v804, 1
      %v807 = vor.u32 %v802, %v806
      %v809 = vshll.u32 %v641, 16
      %v811 = vrot.slane %v809, 1
      %v812 = vsel %vm644, %v807, %v811
      %v814 = vshrl.u32 %v578, 16
      %v816 = vshll.u32 %v578, 16
      %v818 = vrot.slane %v816, 1
      %v819 = vor.u32 %v814, %v818
      %v821 = vshll.u32 %v642, 16
      %v823 = vrot.slane %v821, 1
      %v824 = vsel %vm644, %v819, %v823
      %v826 = vshrl.u32 %v579, 16
      %v828 = vshll.u32 %v579, 16
      %v830 = vrot.slane %v828, 1
      %v831 = vor.u32 %v826, %v830
      %v833 = vshll.u32 %v643, 16
      %v835 = vrot.slane %v833, 1
      %v836 = vsel %vm644, %v831, %v835
      %vm853 = vcmask 1046528
      %v854 = vrot.slane %v564, 1
      %v855 = vrot.slane %v628, 1
      %v856 = vsel %vm853, %v854, %v855
      %v857 = vrot.slane %v565, 1
      %v858 = vrot.slane %v629, 1
      %v859 = vsel %vm853, %v857, %v858
      %v860 = vrot.slane %v566, 1
      %v861 = vrot.slane %v630, 1
      %v862 = vsel %vm853, %v860, %v861
      %v863 = vrot.slane %v567, 1
      %v864 = vrot.slane %v631, 1
      %v865 = vsel %vm853, %v863, %v864
      %v866 = vrot.slane %v568, 1
      %v867 = vrot.slane %v632, 1
      %v868 = vsel %vm853, %v866, %v867
      %v869 = vrot.slane %v569, 1
      %v870 = vrot.slane %v633, 1
      %v871 = vsel %vm853, %v869, %v870
      %v872 = vrot.slane %v570, 1
      %v873 = vrot.slane %v634, 1
      %v874 = vsel %vm853, %v872, %v873
      %v875 = vrot.slane %v571, 1
      %v876 = vrot.slane %v635, 1
      %v877 = vsel %vm853, %v875, %v876
      %v878 = vrot.slane %v572, 1
      %v879 = vrot.slane %v636, 1
      %v880 = vsel %vm853, %v878, %v879
      %v881 = vrot.slane %v573, 1
      %v882 = vrot.slane %v637, 1
      %v883 = vsel %vm853, %v881, %v882
      %v884 = vrot.slane %v574, 1
      %v885 = vrot.slane %v638, 1
      %v886 = vsel %vm853, %v884, %v885
      %v887 = vrot.slane %v575, 1
      %v888 = vrot.slane %v639, 1
      %v889 = vsel %vm853, %v887, %v888
      %v890 = vrot.slane %v576, 1
      %v891 = vrot.slane %v640, 1
      %v892 = vsel %vm853, %v890, %v891
      %v893 = vrot.slane %v577, 1
      %v894 = vrot.slane %v641, 1
      %v895 = vsel %vm853, %v893, %v894
      %v896 = vrot.slane %v578, 1
      %v897 = vrot.slane %v642, 1
      %v898 = vsel %vm853, %v896, %v897
      %v899 = vrot.slane %v579, 1
      %v900 = vrot.slane %v643, 1
      %v901 = vsel %vm853, %v899, %v900
      %v918 = vld [vmem:[%s3] sm:$0xf]
      %v919 = vld [vmem:[%s3 + $0x4] sm:$0xf]
      %v920 = vld [vmem:[%s3 + $0x8] sm:$0xf]
      %v921 = vld [vmem:[%s3 + $0xc] sm:$0xf]
      %v922 = vld [vmem:[%s3 + $0x10] sm:$0xf]
      %v923 = vld [vmem:[%s3 + $0x14] sm:$0xf]
      %v924 = vld [vmem:[%s3 + $0x18] sm:$0xf]
      %v925 = vld [vmem:[%s3 + $0x1c] sm:$0xf]
      %v926 = vld [vmem:[%s3 + $0x20] sm:$0xf]
      %v927 = vld [vmem:[%s3 + $0x24] sm:$0xf]
      %v928 = vld [vmem:[%s3 + $0x28] sm:$0xf]
      %v929 = vld [vmem:[%s3 + $0x2c] sm:$0xf]
      %v930 = vld [vmem:[%s3 + $0x30] sm:$0xf]
      %v931 = vld [vmem:[%s3 + $0x34] sm:$0xf]
      %v932 = vld [vmem:[%s3 + $0x38] sm:$0xf]
      %v933 = vld [vmem:[%s3 + $0x3c] sm:$0xf]
      %v934 = vld [vmem:[%s3 + $0x40] sm:$0xf]
      %v935 = vld [vmem:[%s3 + $0x44] sm:$0xf]
      %v936 = vld [vmem:[%s3 + $0x48] sm:$0xf]
      %v937 = vld [vmem:[%s3 + $0x4c] sm:$0xf]
      %v938 = vld [vmem:[%s3 + $0x50] sm:$0xf]
      %v939 = vld [vmem:[%s3 + $0x54] sm:$0xf]
      %v940 = vld [vmem:[%s3 + $0x58] sm:$0xf]
      %v941 = vld [vmem:[%s3 + $0x5c] sm:$0xf]
      %v942 = vld [vmem:[%s3 + $0x60] sm:$0xf]
      %v943 = vld [vmem:[%s3 + $0x64] sm:$0xf]
      %v944 = vld [vmem:[%s3 + $0x68] sm:$0xf]
      %v945 = vld [vmem:[%s3 + $0x6c] sm:$0xf]
      %v946 = vld [vmem:[%s3 + $0x70] sm:$0xf]
      %v947 = vld [vmem:[%s3 + $0x74] sm:$0xf]
      %v948 = vld [vmem:[%s3 + $0x78] sm:$0xf]
      %v949 = vld [vmem:[%s3 + $0x7c] sm:$0xf]
      %v950 = vld [vmem:[%s3 + $0x80] sm:$0xf]
      %v951 = vld [vmem:[%s3 + $0x84] sm:$0xf]
      %v952 = vld [vmem:[%s3 + $0x88] sm:$0xf]
      %v953 = vld [vmem:[%s3 + $0x8c] sm:$0xf]
      %v954 = vld [vmem:[%s3 + $0x90] sm:$0xf]
      %v955 = vld [vmem:[%s3 + $0x94] sm:$0xf]
      %v956 = vld [vmem:[%s3 + $0x98] sm:$0xf]
      %v957 = vld [vmem:[%s3 + $0x9c] sm:$0xf]
      %v958 = vld [vmem:[%s3 + $0xa0] sm:$0xf]
      %v959 = vld [vmem:[%s3 + $0xa4] sm:$0xf]
      %v960 = vld [vmem:[%s3 + $0xa8] sm:$0xf]
      %v961 = vld [vmem:[%s3 + $0xac] sm:$0xf]
      %v962 = vld [vmem:[%s3 + $0xb0] sm:$0xf]
      %v963 = vld [vmem:[%s3 + $0xb4] sm:$0xf]
      %v964 = vld [vmem:[%s3 + $0xb8] sm:$0xf]
      %v965 = vld [vmem:[%s3 + $0xbc] sm:$0xf]
      %v968 = vunpack.c.l.b16 %v468
      %v969 = vunpack.c.l.b16 %v469
      %v970 = vpack.c.b16 %v969, %v968
      %v973 = vunpack.c.l.b16 %v470
      %v974 = vpack.c.b16 %v973, %v973
      %v976 = vshrl.u32 %v970, 16
      %v978 = vshll.u32 %v970, 16
      %v980 = vrot.slane %v978, 1
      %v981 = vor.u32 %v976, %v980
      %v983 = vshll.u32 %v974, 16
      %v985 = vrot.slane %v983, 1
      %v986 = vsel %vm644, %v981, %v985
      %v988 = vrot.slane %v970, 1
      %v989 = vrot.slane %v974, 1
      %v990 = vsel %vm853, %v988, %v989
      %s992 = scalar_lea.vmem %s3, 192
      %v993 = vld [vmem:[%s992] sm:$0xf]
      %v994 = vld [vmem:[%s992 + $0x4] sm:$0xf]
      %v995 = vld [vmem:[%s992 + $0x8] sm:$0xf]
      %v996 = vld [vmem:[%s992 + $0xc] sm:$0xf]
      %v997 = vld [vmem:[%s992 + $0x10] sm:$0xf]
      %v998 = vld [vmem:[%s992 + $0x14] sm:$0xf]
      %v999 = vld [vmem:[%s992 + $0x18] sm:$0xf]
      %v1000 = vld [vmem:[%s992 + $0x1c] sm:$0xf]
      %v1001 = vld [vmem:[%s992 + $0x20] sm:$0xf]
      %v1002 = vld [vmem:[%s992 + $0x24] sm:$0xf]
      %v1003 = vld [vmem:[%s992 + $0x28] sm:$0xf]
      %v1004 = vld [vmem:[%s992 + $0x2c] sm:$0xf]
      %v1005 = vld [vmem:[%s992 + $0x30] sm:$0xf]
      %v1006 = vld [vmem:[%s992 + $0x34] sm:$0xf]
      %v1007 = vld [vmem:[%s992 + $0x38] sm:$0xf]
      %v1008 = vld [vmem:[%s992 + $0x3c] sm:$0xf]
      %v1009 = vld [vmem:[%s992 + $0x40] sm:$0xf]
      %v1010 = vld [vmem:[%s992 + $0x44] sm:$0xf]
      %v1011 = vld [vmem:[%s992 + $0x48] sm:$0xf]
      %v1012 = vld [vmem:[%s992 + $0x4c] sm:$0xf]
      %v1013 = vld [vmem:[%s992 + $0x50] sm:$0xf]
      %v1014 = vld [vmem:[%s992 + $0x54] sm:$0xf]
      %v1015 = vld [vmem:[%s992 + $0x58] sm:$0xf]
      %v1016 = vld [vmem:[%s992 + $0x5c] sm:$0xf]
      %v1017 = vld [vmem:[%s992 + $0x60] sm:$0xf]
      %v1018 = vld [vmem:[%s992 + $0x64] sm:$0xf]
      %v1019 = vld [vmem:[%s992 + $0x68] sm:$0xf]
      %v1020 = vld [vmem:[%s992 + $0x6c] sm:$0xf]
      %v1021 = vld [vmem:[%s992 + $0x70] sm:$0xf]
      %v1022 = vld [vmem:[%s992 + $0x74] sm:$0xf]
      %v1023 = vld [vmem:[%s992 + $0x78] sm:$0xf]
      %v1024 = vld [vmem:[%s992 + $0x7c] sm:$0xf]
      %v1025 = vld [vmem:[%s992 + $0x80] sm:$0xf]
      %v1026 = vld [vmem:[%s992 + $0x84] sm:$0xf]
      %v1027 = vld [vmem:[%s992 + $0x88] sm:$0xf]
      %v1028 = vld [vmem:[%s992 + $0x8c] sm:$0xf]
      %v1029 = vld [vmem:[%s992 + $0x90] sm:$0xf]
      %v1030 = vld [vmem:[%s992 + $0x94] sm:$0xf]
      %v1031 = vld [vmem:[%s992 + $0x98] sm:$0xf]
      %v1032 = vld [vmem:[%s992 + $0x9c] sm:$0xf]
      %v1033 = vld [vmem:[%s992 + $0xa0] sm:$0xf]
      %v1034 = vld [vmem:[%s992 + $0xa4] sm:$0xf]
      %v1035 = vld [vmem:[%s992 + $0xa8] sm:$0xf]
      %v1036 = vld [vmem:[%s992 + $0xac] sm:$0xf]
      %v1037 = vld [vmem:[%s992 + $0xb0] sm:$0xf]
      %v1038 = vld [vmem:[%s992 + $0xb4] sm:$0xf]
      %v1039 = vld [vmem:[%s992 + $0xb8] sm:$0xf]
      %v1040 = vld [vmem:[%s992 + $0xbc] sm:$0xf]
      %v1089 = vunpack.c.l.b16 %v993
      %v1090 = vunpack.c.l.b16 %v994
      %v1091 = vunpack.c.l.b16 %v995
      %v1092 = vunpack.c.l.b16 %v996
      %v1093 = vunpack.c.l.b16 %v997
      %v1094 = vunpack.c.l.b16 %v998
      %v1095 = vunpack.c.l.b16 %v999
      %v1096 = vunpack.c.l.b16 %v1000
      %v1097 = vunpack.c.l.b16 %v1001
      %v1098 = vunpack.c.l.b16 %v1002
      %v1099 = vunpack.c.l.b16 %v1003
      %v1100 = vunpack.c.l.b16 %v1004
      %v1101 = vunpack.c.l.b16 %v1005
      %v1102 = vunpack.c.l.b16 %v1006
      %v1103 = vunpack.c.l.b16 %v1007
      %v1104 = vunpack.c.l.b16 %v1008
      %v1105 = vunpack.c.l.b16 %v1009
      %v1106 = vunpack.c.l.b16 %v1010
      %v1107 = vunpack.c.l.b16 %v1011
      %v1108 = vunpack.c.l.b16 %v1012
      %v1109 = vunpack.c.l.b16 %v1013
      %v1110 = vunpack.c.l.b16 %v1014
      %v1111 = vunpack.c.l.b16 %v1015
      %v1112 = vunpack.c.l.b16 %v1016
      %v1113 = vunpack.c.l.b16 %v1017
      %v1114 = vunpack.c.l.b16 %v1018
      %v1115 = vunpack.c.l.b16 %v1019
      %v1116 = vunpack.c.l.b16 %v1020
      %v1117 = vunpack.c.l.b16 %v1021
      %v1118 = vunpack.c.l.b16 %v1022
      %v1119 = vunpack.c.l.b16 %v1023
      %v1120 = vunpack.c.l.b16 %v1024
      %v1121 = vunpack.c.l.b16 %v1025
      %v1122 = vunpack.c.l.b16 %v1026
      %v1123 = vunpack.c.l.b16 %v1027
      %v1124 = vunpack.c.l.b16 %v1028
      %v1125 = vunpack.c.l.b16 %v1029
      %v1126 = vunpack.c.l.b16 %v1030
      %v1127 = vunpack.c.l.b16 %v1031
      %v1128 = vunpack.c.l.b16 %v1032
      %v1129 = vunpack.c.l.b16 %v1033
      %v1130 = vunpack.c.l.b16 %v1034
      %v1131 = vunpack.c.l.b16 %v1035
      %v1132 = vunpack.c.l.b16 %v1036
      %v1133 = vunpack.c.l.b16 %v1037
      %v1134 = vunpack.c.l.b16 %v1038
      %v1135 = vunpack.c.l.b16 %v1039
      %v1136 = vunpack.c.l.b16 %v1040
      %v1137 = vpack.c.b16 %v1090, %v1089
      %v1138 = vpack.c.b16 %v1092, %v1091
      %v1139 = vpack.c.b16 %v1094, %v1093
      %v1140 = vpack.c.b16 %v1096, %v1095
      %v1141 = vpack.c.b16 %v1098, %v1097
      %v1142 = vpack.c.b16 %v1100, %v1099
      %v1143 = vpack.c.b16 %v1102, %v1101
      %v1144 = vpack.c.b16 %v1104, %v1103
      %v1145 = vpack.c.b16 %v1106, %v1105
      %v1146 = vpack.c.b16 %v1108, %v1107
      %v1147 = vpack.c.b16 %v1110, %v1109
      %v1148 = vpack.c.b16 %v1112, %v1111
      %v1149 = vpack.c.b16 %v1114, %v1113
      %v1150 = vpack.c.b16 %v1116, %v1115
      %v1151 = vpack.c.b16 %v1118, %v1117
      %v1152 = vpack.c.b16 %v1120, %v1119
      %v1153 = vpack.c.b16 %v1122, %v1121
      %v1154 = vpack.c.b16 %v1124, %v1123
      %v1155 = vpack.c.b16 %v1126, %v1125
      %v1156 = vpack.c.b16 %v1128, %v1127
      %v1157 = vpack.c.b16 %v1130, %v1129
      %v1158 = vpack.c.b16 %v1132, %v1131
      %v1159 = vpack.c.b16 %v1134, %v1133
      %v1160 = vpack.c.b16 %v1136, %v1135
      %1185 = vmatprep.subr.bf16.mxu0 0
      %1186 = vmatpush1.bf16.msra.mxu0 %v1137
      %1187 = vmatprep.subr.bf16.mxu0 0
      %1188 = vmatpush1.bf16.msra.mxu0 %v1138
      %1189 = vmatprep.subr.bf16.mxu0 0
      %1190 = vmatpush1.bf16.msra.mxu0 %v1139
      %1191 = vmatprep.subr.bf16.mxu0 0
      %1192 = vmatpush1.bf16.msra.mxu0 %v1140
      %1193 = vmatprep.subr.bf16.mxu0 0
      %1194 = vmatpush1.bf16.msra.mxu0 %v1141
      %1195 = vmatprep.subr.bf16.mxu0 0
      %1196 = vmatpush1.bf16.msra.mxu0 %v1142
      %1197 = vmatprep.subr.bf16.mxu0 0
      %1198 = vmatpush1.bf16.msra.mxu0 %v1143
      %1199 = vmatprep.subr.bf16.mxu0 0
      %1200 = vmatpush1.bf16.msra.mxu0 %v1144
      %1201 = vmatprep.subr.bf16.mxu0 0
      %1202 = vmatpush1.bf16.msra.mxu0 %v1145
      %1203 = vmatprep.subr.bf16.mxu0 0
      %1204 = vmatpush1.bf16.msra.mxu0 %v1146
      %1205 = vmatprep.subr.bf16.mxu0 0
      %1206 = vmatpush1.bf16.msra.mxu0 %v1147
      %1207 = vmatprep.subr.bf16.mxu0 0
      %1208 = vmatpush1.bf16.msra.mxu0 %v1148
      %1209 = vmatprep.subr.bf16.mxu0 0
      %1210 = vmatpush1.bf16.msra.mxu0 %v1149
      %1211 = vmatprep.subr.bf16.mxu0 0
      %1212 = vmatpush1.bf16.msra.mxu0 %v1150
      %1213 = vmatprep.subr.bf16.mxu0 0
      %1214 = vmatpush1.bf16.msra.mxu0 %v1151
      %1215 = vmatprep.subr.bf16.mxu0 0
      %1216 = vmatpush1.bf16.msra.mxu0 %v1152
      %1217 = vmatprep.mubr.bf16.mxu0 %v668
      %1218 = vmatmul.mubr.bf16.gmra.mrb[0].mxu0 %v565
      %v1219 = vpop.f32.mrb[0].mxu0
      %v1220 = vadd.f32 0.0, %v1219
      %v1221 = vpop.f32.mrb[0].mxu0
      %v1222 = vpop.f32.mrb[0].mxu0
      %v1223 = vadd.f32 0.0, %v1222
      %v1224 = vpop.f32.mrb[0].mxu0
      %1225 = vmatprep.mubr.bf16.mxu0 %v680
      %1226 = vmatmul.mubr.bf16.gmra.mrb[0].mxu0 %v566
      %v1227 = vpop.f32.mrb[0].mxu0
      %v1228 = vadd.f32 0.0, %v1227
      %v1229 = vpop.f32.mrb[0].mxu0
      %v1230 = vpop.f32.mrb[0].mxu0
      %v1231 = vadd.f32 0.0, %v1230
      %v1232 = vpop.f32.mrb[0].mxu0
      %1233 = vmatprep.mubr.bf16.mxu0 %v692
      %1234 = vmatmul.mubr.bf16.gmra.mrb[0].mxu0 %v567
      %v1235 = vpop.f32.mrb[0].mxu0
      %v1236 = vadd.f32 0.0, %v1235
      %v1237 = vpop.f32.mrb[0].mxu0
      %v1238 = vpop.f32.mrb[0].mxu0
      %v1239 = vadd.f32 0.0, %v1238
      %v1240 = vpop.f32.mrb[0].mxu0
      %1241 = vmatprep.mubr.bf16.mxu0 %v704
      %1242 = vmatmul.mubr.bf16.gmra.mrb[0].mxu0 %v568
      %v1243 = vpop.f32.mrb[0].mxu0
      %v1244 = vadd.f32 0.0, %v1243
      %v1245 = vpop.f32.mrb[0].mxu0
      %v1246 = vpop.f32.mrb[0].mxu0
      %v1247 = vadd.f32 0.0, %v1246
      %v1248 = vpop.f32.mrb[0].mxu0
      %1249 = vmatprep.mubr.bf16.mxu0 %v716
      %1250 = vmatmul.mubr.bf16.gmra.mrb[0].mxu0 %v569
      %v1251 = vpop.f32.mrb[0].mxu0
      %v1252 = vadd.f32 0.0, %v1251
      %v1253 = vpop.f32.mrb[0].mxu0
      %v1254 = vpop.f32.mrb[0].mxu0
      %v1255 = vadd.f32 0.0, %v1254
      %v1256 = vpop.f32.mrb[0].mxu0
      %1257 = vmatprep.mubr.bf16.mxu0 %v728
      %1258 = vmatmul.mubr.bf16.gmra.mrb[0].mxu0 %v570
      %v1259 = vpop.f32.mrb[0].mxu0
      %v1260 = vadd.f32 0.0, %v1259
      %v1261 = vpop.f32.mrb[0].mxu0
      %v1262 = vpop.f32.mrb[0].mxu0
      %v1263 = vadd.f32 0.0, %v1262
      %v1264 = vpop.f32.mrb[0].mxu0
      %1265 = vmatprep.mubr.bf16.mxu0 %v740
      %1266 = vmatmul.mubr.bf16.gmra.mrb[0].mxu0 %v571
      %v1267 = vpop.f32.mrb[0].mxu0
      %v1268 = vadd.f32 0.0, %v1267
      %v1269 = vpop.f32.mrb[0].mxu0
      %v1270 = vpop.f32.mrb[0].mxu0
      %v1271 = vadd.f32 0.0, %v1270
      %v1272 = vpop.f32.mrb[0].mxu0
      %1273 = vmatprep.mubr.bf16.mxu0 %v752
      %1274 = vmatmul.mubr.bf16.gmra.mrb[0].mxu0 %v572
      %v1275 = vpop.f32.mrb[0].mxu0
      %v1276 = vadd.f32 0.0, %v1275
      %v1277 = vpop.f32.mrb[0].mxu0
      %v1278 = vpop.f32.mrb[0].mxu0
      %v1279 = vadd.f32 0.0, %v1278
      %v1280 = vpop.f32.mrb[0].mxu0
      %1281 = vmatprep.mubr.bf16.mxu0 %v764
      %1282 = vmatmul.mubr.bf16.gmra.mrb[0].mxu0 %v573
      %v1283 = vpop.f32.mrb[0].mxu0
      %v1284 = vadd.f32 0.0, %v1283
      %v1285 = vpop.f32.mrb[0].mxu0
      %v1286 = vpop.f32.mrb[0].mxu0
      %v1287 = vadd.f32 0.0, %v1286
      %v1288 = vpop.f32.mrb[0].mxu0
      %1289 = vmatprep.mubr.bf16.mxu0 %v776
      %1290 = vmatmul.mubr.bf16.gmra.mrb[0].mxu0 %v574
      %v1291 = vpop.f32.mrb[0].mxu0
      %v1292 = vadd.f32 0.0, %v1291
      %v1293 = vpop.f32.mrb[0].mxu0
      %v1294 = vpop.f32.mrb[0].mxu0
      %v1295 = vadd.f32 0.0, %v1294
      %v1296 = vpop.f32.mrb[0].mxu0
      %1297 = vmatprep.mubr.bf16.mxu0 %v788
      %1298 = vmatmul.mubr.bf16.gmra.mrb[0].mxu0 %v575
      %v1299 = vpop.f32.mrb[0].mxu0
      %v1300 = vadd.f32 0.0, %v1299
      %v1301 = vpop.f32.mrb[0].mxu0
      %v1302 = vpop.f32.mrb[0].mxu0
      %v1303 = vadd.f32 0.0, %v1302
      %v1304 = vpop.f32.mrb[0].mxu0
      %1305 = vmatprep.mubr.bf16.mxu0 %v800
      %1306 = vmatmul.mubr.bf16.gmra.mrb[0].mxu0 %v576
      %v1307 = vpop.f32.mrb[0].mxu0
      %v1308 = vadd.f32 0.0, %v1307
      %v1309 = vpop.f32.mrb[0].mxu0
      %v1310 = vpop.f32.mrb[0].mxu0
      %v1311 = vadd.f32 0.0, %v1310
      %v1312 = vpop.f32.mrb[0].mxu0
      %1313 = vmatprep.mubr.bf16.mxu0 %v812
      %1314 = vmatmul.mubr.bf16.gmra.mrb[0].mxu0 %v577
      %v1315 = vpop.f32.mrb[0].mxu0
      %v1316 = vadd.f32 0.0, %v1315
      %v1317 = vpop.f32.mrb[0].mxu0
      %v1318 = vpop.f32.mrb[0].mxu0
      %v1319 = vadd.f32 0.0, %v1318
      %v1320 = vpop.f32.mrb[0].mxu0
      %1321 = vmatprep.mubr.bf16.mxu0 %v824
      %1322 = vmatmul.mubr.bf16.gmra.mrb[0].mxu0 %v578
      %v1323 = vpop.f32.mrb[0].mxu0
      %v1324 = vadd.f32 0.0, %v1323
      %v1325 = vpop.f32.mrb[0].mxu0
      %v1326 = vpop.f32.mrb[0].mxu0
      %v1327 = vadd.f32 0.0, %v1326
      %v1328 = vpop.f32.mrb[0].mxu0
      %1329 = vmatprep.mubr.bf16.mxu0 %v836
      %1330 = vmatmul.mubr.bf16.gmra.mrb[0].mxu0 %v579
      %v1331 = vpop.f32.mrb[0].mxu0
      %v1332 = vadd.f32 0.0, %v1331
      %v1333 = vpop.f32.mrb[0].mxu0
      %v1334 = vpop.f32.mrb[0].mxu0
      %v1335 = vadd.f32 0.0, %v1334
      %v1336 = vpop.f32.mrb[0].mxu0
      %1337 = vmatprep.mubr.bf16.mxu0 %v986
      %1338 = vmatmul.mubr.bf16.gmra.mrb[0].mxu0 %v970
      %v1339 = vpop.f32.mrb[0].mxu0
      %v1340 = vadd.f32 0.0, %v1339
      %v1341 = vpop.f32.mrb[0].mxu0
      %v1342 = vpop.f32.mrb[0].mxu0
      %v1343 = vadd.f32 0.0, %v1342
      %v1344 = vpop.f32.mrb[0].mxu0
      %1345 = vdwg.mxu0
      %1346 = vmatprep.subr.bf16.mxu0 0
      %1347 = vmatpush1.bf16.msra.mxu0 %v1153
      %1348 = vmatprep.subr.bf16.mxu0 0
      %1349 = vmatpush1.bf16.msra.mxu0 %v1154
      %1350 = vmatprep.subr.bf16.mxu0 0
      %1351 = vmatpush1.bf16.msra.mxu0 %v1155
      %1352 = vmatprep.subr.bf16.mxu0 0
      %1353 = vmatpush1.bf16.msra.mxu0 %v1156
      %1354 = vmatprep.subr.bf16.mxu0 0
      %1355 = vmatpush1.bf16.msra.mxu0 %v1157
      %1356 = vmatprep.subr.bf16.mxu0 0
      %1357 = vmatpush1.bf16.msra.mxu0 %v1158
      %1358 = vmatprep.subr.bf16.mxu0 0
      %1359 = vmatpush1.bf16.msra.mxu0 %v1159
      %1360 = vmatprep.subr.bf16.mxu0 0
      %1361 = vmatpush1.bf16.msra.mxu0 %v1160
      %1362 = vmatprep.subr.bf16.mxu0 0
      %1363 = vmatpush1.bf16.msra.mxu0 0
      %1364 = vmatprep.subr.bf16.mxu0 0
      %1365 = vmatpush1.bf16.msra.mxu0 0
      %1366 = vmatprep.subr.bf16.mxu0 0
      %1367 = vmatpush1.bf16.msra.mxu0 0
      %1368 = vmatprep.subr.bf16.mxu0 0
      %1369 = vmatpush1.bf16.msra.mxu0 0
      %1370 = vmatprep.subr.bf16.mxu0 0
      %1371 = vmatpush1.bf16.msra.mxu0 0
      %1372 = vmatprep.subr.bf16.mxu0 0
      %1373 = vmatpush1.bf16.msra.mxu0 0
      %1374 = vmatprep.subr.bf16.mxu0 0
      %1375 = vmatpush1.bf16.msra.mxu0 0
      %1376 = vmatprep.subr.bf16.mxu0 0
      %1377 = vmatpush1.bf16.msra.mxu0 0
      %1378 = vmatprep.mubr.bf16.mxu0 0
      %1379 = vmatmul.mubr.bf16.gmra.mrb[0].mxu0 %v859
      %v1380 = vpop.f32.mrb[0].mxu0
      %v1381 = vadd.f32 %v1220, %v1380
      %v1382 = vpop.f32.mrb[0].mxu0
      %v1383 = vpop.f32.mrb[0].mxu0
      %v1384 = vadd.f32 %v1223, %v1383
      %v1385 = vpop.f32.mrb[0].mxu0
      %1386 = vmatprep.mubr.bf16.mxu0 0
      %1387 = vmatmul.mubr.bf16.gmra.mrb[0].mxu0 %v862
      %v1388 = vpop.f32.mrb[0].mxu0
      %v1389 = vadd.f32 %v1228, %v1388
      %v1390 = vpop.f32.mrb[0].mxu0
      %v1391 = vpop.f32.mrb[0].mxu0
      %v1392 = vadd.f32 %v1231, %v1391
      %v1393 = vpop.f32.mrb[0].mxu0
      %1394 = vmatprep.mubr.bf16.mxu0 0
      %1395 = vmatmul.mubr.bf16.gmra.mrb[0].mxu0 %v865
      %v1396 = vpop.f32.mrb[0].mxu0
      %v1397 = vadd.f32 %v1236, %v1396
      %v1398 = vpop.f32.mrb[0].mxu0
      %v1399 = vpop.f32.mrb[0].mxu0
      %v1400 = vadd.f32 %v1239, %v1399
      %v1401 = vpop.f32.mrb[0].mxu0
      %1402 = vmatprep.mubr.bf16.mxu0 0
      %1403 = vmatmul.mubr.bf16.gmra.mrb[0].mxu0 %v868
      %v1404 = vpop.f32.mrb[0].mxu0
      %v1405 = vadd.f32 %v1244, %v1404
      %v1406 = vpop.f32.mrb[0].mxu0
      %v1407 = vpop.f32.mrb[0].mxu0
      %v1408 = vadd.f32 %v1247, %v1407
      %v1409 = vpop.f32.mrb[0].mxu0
      %1410 = vmatprep.mubr.bf16.mxu0 0
      %1411 = vmatmul.mubr.bf16.gmra.mrb[0].mxu0 %v871
      %v1412 = vpop.f32.mrb[0].mxu0
      %v1413 = vadd.f32 %v1252, %v1412
      %v1414 = vpop.f32.mrb[0].mxu0
      %v1415 = vpop.f32.mrb[0].mxu0
      %v1416 = vadd.f32 %v1255, %v1415
      %v1417 = vpop.f32.mrb[0].mxu0
      %1418 = vmatprep.mubr.bf16.mxu0 0
      %1419 = vmatmul.mubr.bf16.gmra.mrb[0].mxu0 %v874
      %v1420 = vpop.f32.mrb[0].mxu0
      %v1421 = vadd.f32 %v1260, %v1420
      %v1422 = vpop.f32.mrb[0].mxu0
      %v1423 = vpop.f32.mrb[0].mxu0
      %v1424 = vadd.f32 %v1263, %v1423
      %v1425 = vpop.f32.mrb[0].mxu0
      %1426 = vmatprep.mubr.bf16.mxu0 0
      %1427 = vmatmul.mubr.bf16.gmra.mrb[0].mxu0 %v877
      %v1428 = vpop.f32.mrb[0].mxu0
      %v1429 = vadd.f32 %v1268, %v1428
      %v1430 = vpop.f32.mrb[0].mxu0
      %v1431 = vpop.f32.mrb[0].mxu0
      %v1432 = vadd.f32 %v1271, %v1431
      %v1433 = vpop.f32.mrb[0].mxu0
      %1434 = vmatprep.mubr.bf16.mxu0 0
      %1435 = vmatmul.mubr.bf16.gmra.mrb[0].mxu0 %v880
      %v1436 = vpop.f32.mrb[0].mxu0
      %v1437 = vadd.f32 %v1276, %v1436
      %v1438 = vpop.f32.mrb[0].mxu0
      %v1439 = vpop.f32.mrb[0].mxu0
      %v1440 = vadd.f32 %v1279, %v1439
      %v1441 = vpop.f32.mrb[0].mxu0
      %1442 = vmatprep.mubr.bf16.mxu0 0
      %1443 = vmatmul.mubr.bf16.gmra.mrb[0].mxu0 %v883
      %v1444 = vpop.f32.mrb[0].mxu0
      %v1445 = vadd.f32 %v1284, %v1444
      %v1446 = vpop.f32.mrb[0].mxu0
      %v1447 = vpop.f32.mrb[0].mxu0
      %v1448 = vadd.f32 %v1287, %v1447
      %v1449 = vpop.f32.mrb[0].mxu0
      %1450 = vmatprep.mubr.bf16.mxu0 0
      %1451 = vmatmul.mubr.bf16.gmra.mrb[0].mxu0 %v886
      %v1452 = vpop.f32.mrb[0].mxu0
      %v1453 = vadd.f32 %v1292, %v1452
      %v1454 = vpop.f32.mrb[0].mxu0
      %v1455 = vpop.f32.mrb[0].mxu0
      %v1456 = vadd.f32 %v1295, %v1455
      %v1457 = vpop.f32.mrb[0].mxu0
      %1458 = vmatprep.mubr.bf16.mxu0 0
      %1459 = vmatmul.mubr.bf16.gmra.mrb[0].mxu0 %v889
      %v1460 = vpop.f32.mrb[0].mxu0
      %v1461 = vadd.f32 %v1300, %v1460
      %v1462 = vpop.f32.mrb[0].mxu0
      %v1463 = vpop.f32.mrb[0].mxu0
      %v1464 = vadd.f32 %v1303, %v1463
      %v1465 = vpop.f32.mrb[0].mxu0
      %1466 = vmatprep.mubr.bf16.mxu0 0
      %1467 = vmatmul.mubr.bf16.gmra.mrb[0].mxu0 %v892
      %v1468 = vpop.f32.mrb[0].mxu0
      %v1469 = vadd.f32 %v1308, %v1468
      %v1470 = vpop.f32.mrb[0].mxu0
      %v1471 = vpop.f32.mrb[0].mxu0
      %v1472 = vadd.f32 %v1311, %v1471
      %v1473 = vpop.f32.mrb[0].mxu0
      %1474 = vmatprep.mubr.bf16.mxu0 0
      %1475 = vmatmul.mubr.bf16.gmra.mrb[0].mxu0 %v895
      %v1476 = vpop.f32.mrb[0].mxu0
      %v1477 = vadd.f32 %v1316, %v1476
      %v1478 = vpop.f32.mrb[0].mxu0
      %v1479 = vpop.f32.mrb[0].mxu0
      %v1480 = vadd.f32 %v1319, %v1479
      %v1481 = vpop.f32.mrb[0].mxu0
      %1482 = vmatprep.mubr.bf16.mxu0 0
      %1483 = vmatmul.mubr.bf16.gmra.mrb[0].mxu0 %v898
      %v1484 = vpop.f32.mrb[0].mxu0
      %v1485 = vadd.f32 %v1324, %v1484
      %v1486 = vpop.f32.mrb[0].mxu0
      %v1487 = vpop.f32.mrb[0].mxu0
      %v1488 = vadd.f32 %v1327, %v1487
      %v1489 = vpop.f32.mrb[0].mxu0
      %1490 = vmatprep.mubr.bf16.mxu0 0
      %1491 = vmatmul.mubr.bf16.gmra.mrb[0].mxu0 %v901
      %v1492 = vpop.f32.mrb[0].mxu0
      %v1493 = vadd.f32 %v1332, %v1492
      %v1494 = vpop.f32.mrb[0].mxu0
      %v1495 = vpop.f32.mrb[0].mxu0
      %v1496 = vadd.f32 %v1335, %v1495
      %v1497 = vpop.f32.mrb[0].mxu0
      %1498 = vmatprep.mubr.bf16.mxu0 0
      %1499 = vmatmul.mubr.bf16.gmra.mrb[0].mxu0 %v990
      %v1500 = vpop.f32.mrb[0].mxu0
      %v1501 = vadd.f32 %v1340, %v1500
      %v1502 = vpop.f32.mrb[0].mxu0
      %v1503 = vpop.f32.mrb[0].mxu0
      %v1504 = vadd.f32 %v1343, %v1503
      %v1505 = vpop.f32.mrb[0].mxu0
      %1506 = vdwg.mxu0
      %v1555 = vunpack.c.l.b16 %v918
      %v1556 = vunpack.c.l.b16 %v919
      %v1557 = vunpack.c.l.b16 %v920
      %v1558 = vunpack.c.l.b16 %v921
      %v1559 = vunpack.c.l.b16 %v922
      %v1560 = vunpack.c.l.b16 %v923
      %v1561 = vunpack.c.l.b16 %v924
      %v1562 = vunpack.c.l.b16 %v925
      %v1563 = vunpack.c.l.b16 %v926
      %v1564 = vunpack.c.l.b16 %v927
      %v1565 = vunpack.c.l.b16 %v928
      %v1566 = vunpack.c.l.b16 %v929
      %v1567 = vunpack.c.l.b16 %v930
      %v1568 = vunpack.c.l.b16 %v931
      %v1569 = vunpack.c.l.b16 %v932
      %v1570 = vunpack.c.l.b16 %v933
      %v1571 = vunpack.c.l.b16 %v934
      %v1572 = vunpack.c.l.b16 %v935
      %v1573 = vunpack.c.l.b16 %v936
      %v1574 = vunpack.c.l.b16 %v937
      %v1575 = vunpack.c.l.b16 %v938
      %v1576 = vunpack.c.l.b16 %v939
      %v1577 = vunpack.c.l.b16 %v940
      %v1578 = vunpack.c.l.b16 %v941
      %v1579 = vunpack.c.l.b16 %v942
      %v1580 = vunpack.c.l.b16 %v943
      %v1581 = vunpack.c.l.b16 %v944
      %v1582 = vunpack.c.l.b16 %v945
      %v1583 = vunpack.c.l.b16 %v946
      %v1584 = vunpack.c.l.b16 %v947
      %v1585 = vunpack.c.l.b16 %v948
      %v1586 = vunpack.c.l.b16 %v949
      %v1587 = vunpack.c.l.b16 %v950
      %v1588 = vunpack.c.l.b16 %v951
      %v1589 = vunpack.c.l.b16 %v952
      %v1590 = vunpack.c.l.b16 %v953
      %v1591 = vunpack.c.l.b16 %v954
      %v1592 = vunpack.c.l.b16 %v955
      %v1593 = vunpack.c.l.b16 %v956
      %v1594 = vunpack.c.l.b16 %v957
      %v1595 = vunpack.c.l.b16 %v958
      %v1596 = vunpack.c.l.b16 %v959
      %v1597 = vunpack.c.l.b16 %v960
      %v1598 = vunpack.c.l.b16 %v961
      %v1599 = vunpack.c.l.b16 %v962
      %v1600 = vunpack.c.l.b16 %v963
      %v1601 = vunpack.c.l.b16 %v964
      %v1602 = vunpack.c.l.b16 %v965
      %v1603 = vpack.c.b16 %v1556, %v1555
      %v1604 = vpack.c.b16 %v1558, %v1557
      %v1605 = vpack.c.b16 %v1560, %v1559
      %v1606 = vpack.c.b16 %v1562, %v1561
      %v1607 = vpack.c.b16 %v1564, %v1563
      %v1608 = vpack.c.b16 %v1566, %v1565
      %v1609 = vpack.c.b16 %v1568, %v1567
      %v1610 = vpack.c.b16 %v1570, %v1569
      %v1611 = vpack.c.b16 %v1572, %v1571
      %v1612 = vpack.c.b16 %v1574, %v1573
      %v1613 = vpack.c.b16 %v1576, %v1575
      %v1614 = vpack.c.b16 %v1578, %v1577
      %v1615 = vpack.c.b16 %v1580, %v1579
      %v1616 = vpack.c.b16 %v1582, %v1581
      %v1617 = vpack.c.b16 %v1584, %v1583
      %v1618 = vpack.c.b16 %v1586, %v1585
      %v1619 = vpack.c.b16 %v1588, %v1587
      %v1620 = vpack.c.b16 %v1590, %v1589
      %v1621 = vpack.c.b16 %v1592, %v1591
      %v1622 = vpack.c.b16 %v1594, %v1593
      %v1623 = vpack.c.b16 %v1596, %v1595
      %v1624 = vpack.c.b16 %v1598, %v1597
      %v1625 = vpack.c.b16 %v1600, %v1599
      %v1626 = vpack.c.b16 %v1602, %v1601
      %1651 = vmatprep.subr.bf16.mxu0 0
      %1652 = vmatpush1.bf16.msra.mxu0 %v1603
      %1653 = vmatprep.subr.bf16.mxu0 0
      %1654 = vmatpush1.bf16.msra.mxu0 %v1604
      %1655 = vmatprep.subr.bf16.mxu0 0
      %1656 = vmatpush1.bf16.msra.mxu0 %v1605
      %1657 = vmatprep.subr.bf16.mxu0 0
      %1658 = vmatpush1.bf16.msra.mxu0 %v1606
      %1659 = vmatprep.subr.bf16.mxu0 0
      %1660 = vmatpush1.bf16.msra.mxu0 %v1607
      %1661 = vmatprep.subr.bf16.mxu0 0
      %1662 = vmatpush1.bf16.msra.mxu0 %v1608
      %1663 = vmatprep.subr.bf16.mxu0 0
      %1664 = vmatpush1.bf16.msra.mxu0 %v1609
      %1665 = vmatprep.subr.bf16.mxu0 0
      %1666 = vmatpush1.bf16.msra.mxu0 %v1610
      %1667 = vmatprep.subr.bf16.mxu0 0
      %1668 = vmatpush1.bf16.msra.mxu0 %v1611
      %1669 = vmatprep.subr.bf16.mxu0 0
      %1670 = vmatpush1.bf16.msra.mxu0 %v1612
      %1671 = vmatprep.subr.bf16.mxu0 0
      %1672 = vmatpush1.bf16.msra.mxu0 %v1613
      %1673 = vmatprep.subr.bf16.mxu0 0
      %1674 = vmatpush1.bf16.msra.mxu0 %v1614
      %1675 = vmatprep.subr.bf16.mxu0 0
      %1676 = vmatpush1.bf16.msra.mxu0 %v1615
      %1677 = vmatprep.subr.bf16.mxu0 0
      %1678 = vmatpush1.bf16.msra.mxu0 %v1616
      %1679 = vmatprep.subr.bf16.mxu0 0
      %1680 = vmatpush1.bf16.msra.mxu0 %v1617
      %1681 = vmatprep.subr.bf16.mxu0 0
      %1682 = vmatpush1.bf16.msra.mxu0 %v1618
      %1683 = vmatprep.mubr.bf16.mxu0 %v656
      %1684 = vmatmul.mubr.bf16.gmra.mrb[0].mxu0 %v564
      %v1685 = vpop.f32.mrb[0].mxu0
      %v1686 = vadd.f32 %v1381, %v1685
      %v1687 = vpop.f32.mrb[0].mxu0
      %v1688 = vpop.f32.mrb[0].mxu0
      %v1689 = vadd.f32 %v1384, %v1688
      %v1690 = vpop.f32.mrb[0].mxu0
      %1691 = vmatprep.mubr.bf16.mxu0 %v668
      %1692 = vmatmul.mubr.bf16.gmra.mrb[0].mxu0 %v565
      %v1693 = vpop.f32.mrb[0].mxu0
      %v1694 = vadd.f32 %v1389, %v1693
      %v1695 = vpop.f32.mrb[0].mxu0
      %v1696 = vpop.f32.mrb[0].mxu0
      %v1697 = vadd.f32 %v1392, %v1696
      %v1698 = vpop.f32.mrb[0].mxu0
      %1699 = vmatprep.mubr.bf16.mxu0 %v680
      %1700 = vmatmul.mubr.bf16.gmra.mrb[0].mxu0 %v566
      %v1701 = vpop.f32.mrb[0].mxu0
      %v1702 = vadd.f32 %v1397, %v1701
      %v1703 = vpop.f32.mrb[0].mxu0
      %v1704 = vpop.f32.mrb[0].mxu0
      %v1705 = vadd.f32 %v1400, %v1704
      %v1706 = vpop.f32.mrb[0].mxu0
      %1707 = vmatprep.mubr.bf16.mxu0 %v692
      %1708 = vmatmul.mubr.bf16.gmra.mrb[0].mxu0 %v567
      %v1709 = vpop.f32.mrb[0].mxu0
      %v1710 = vadd.f32 %v1405, %v1709
      %v1711 = vpop.f32.mrb[0].mxu0
      %v1712 = vpop.f32.mrb[0].mxu0
      %v1713 = vadd.f32 %v1408, %v1712
      %v1714 = vpop.f32.mrb[0].mxu0
      %1715 = vmatprep.mubr.bf16.mxu0 %v704
      %1716 = vmatmul.mubr.bf16.gmra.mrb[0].mxu0 %v568
      %v1717 = vpop.f32.mrb[0].mxu0
      %v1718 = vadd.f32 %v1413, %v1717
      %v1719 = vpop.f32.mrb[0].mxu0
      %v1720 = vpop.f32.mrb[0].mxu0
      %v1721 = vadd.f32 %v1416, %v1720
      %v1722 = vpop.f32.mrb[0].mxu0
      %1723 = vmatprep.mubr.bf16.mxu0 %v716
      %1724 = vmatmul.mubr.bf16.gmra.mrb[0].mxu0 %v569
      %v1725 = vpop.f32.mrb[0].mxu0
      %v1726 = vadd.f32 %v1421, %v1725
      %v1727 = vpop.f32.mrb[0].mxu0
      %v1728 = vpop.f32.mrb[0].mxu0
      %v1729 = vadd.f32 %v1424, %v1728
      %v1730 = vpop.f32.mrb[0].mxu0
      %1731 = vmatprep.mubr.bf16.mxu0 %v728
      %1732 = vmatmul.mubr.bf16.gmra.mrb[0].mxu0 %v570
      %v1733 = vpop.f32.mrb[0].mxu0
      %v1734 = vadd.f32 %v1429, %v1733
      %v1735 = vpop.f32.mrb[0].mxu0
      %v1736 = vpop.f32.mrb[0].mxu0
      %v1737 = vadd.f32 %v1432, %v1736
      %v1738 = vpop.f32.mrb[0].mxu0
      %1739 = vmatprep.mubr.bf16.mxu0 %v740
      %1740 = vmatmul.mubr.bf16.gmra.mrb[0].mxu0 %v571
      %v1741 = vpop.f32.mrb[0].mxu0
      %v1742 = vadd.f32 %v1437, %v1741
      %v1743 = vpop.f32.mrb[0].mxu0
      %v1744 = vpop.f32.mrb[0].mxu0
      %v1745 = vadd.f32 %v1440, %v1744
      %v1746 = vpop.f32.mrb[0].mxu0
      %1747 = vmatprep.mubr.bf16.mxu0 %v752
      %1748 = vmatmul.mubr.bf16.gmra.mrb[0].mxu0 %v572
      %v1749 = vpop.f32.mrb[0].mxu0
      %v1750 = vadd.f32 %v1445, %v1749
      %v1751 = vpop.f32.mrb[0].mxu0
      %v1752 = vpop.f32.mrb[0].mxu0
      %v1753 = vadd.f32 %v1448, %v1752
      %v1754 = vpop.f32.mrb[0].mxu0
      %1755 = vmatprep.mubr.bf16.mxu0 %v764
      %1756 = vmatmul.mubr.bf16.gmra.mrb[0].mxu0 %v573
      %v1757 = vpop.f32.mrb[0].mxu0
      %v1758 = vadd.f32 %v1453, %v1757
      %v1759 = vpop.f32.mrb[0].mxu0
      %v1760 = vpop.f32.mrb[0].mxu0
      %v1761 = vadd.f32 %v1456, %v1760
      %v1762 = vpop.f32.mrb[0].mxu0
      %1763 = vmatprep.mubr.bf16.mxu0 %v776
      %1764 = vmatmul.mubr.bf16.gmra.mrb[0].mxu0 %v574
      %v1765 = vpop.f32.mrb[0].mxu0
      %v1766 = vadd.f32 %v1461, %v1765
      %v1767 = vpop.f32.mrb[0].mxu0
      %v1768 = vpop.f32.mrb[0].mxu0
      %v1769 = vadd.f32 %v1464, %v1768
      %v1770 = vpop.f32.mrb[0].mxu0
      %1771 = vmatprep.mubr.bf16.mxu0 %v788
      %1772 = vmatmul.mubr.bf16.gmra.mrb[0].mxu0 %v575
      %v1773 = vpop.f32.mrb[0].mxu0
      %v1774 = vadd.f32 %v1469, %v1773
      %v1775 = vpop.f32.mrb[0].mxu0
      %v1776 = vpop.f32.mrb[0].mxu0
      %v1777 = vadd.f32 %v1472, %v1776
      %v1778 = vpop.f32.mrb[0].mxu0
      %1779 = vmatprep.mubr.bf16.mxu0 %v800
      %1780 = vmatmul.mubr.bf16.gmra.mrb[0].mxu0 %v576
      %v1781 = vpop.f32.mrb[0].mxu0
      %v1782 = vadd.f32 %v1477, %v1781
      %v1783 = vpop.f32.mrb[0].mxu0
      %v1784 = vpop.f32.mrb[0].mxu0
      %v1785 = vadd.f32 %v1480, %v1784
      %v1786 = vpop.f32.mrb[0].mxu0
      %1787 = vmatprep.mubr.bf16.mxu0 %v812
      %1788 = vmatmul.mubr.bf16.gmra.mrb[0].mxu0 %v577
      %v1789 = vpop.f32.mrb[0].mxu0
      %v1790 = vadd.f32 %v1485, %v1789
      %v1791 = vpop.f32.mrb[0].mxu0
      %v1792 = vpop.f32.mrb[0].mxu0
      %v1793 = vadd.f32 %v1488, %v1792
      %v1794 = vpop.f32.mrb[0].mxu0
      %1795 = vmatprep.mubr.bf16.mxu0 %v824
      %1796 = vmatmul.mubr.bf16.gmra.mrb[0].mxu0 %v578
      %v1797 = vpop.f32.mrb[0].mxu0
      %v1798 = vadd.f32 %v1493, %v1797
      %v1799 = vpop.f32.mrb[0].mxu0
      %v1800 = vpop.f32.mrb[0].mxu0
      %v1801 = vadd.f32 %v1496, %v1800
      %v1802 = vpop.f32.mrb[0].mxu0
      %1803 = vmatprep.mubr.bf16.mxu0 %v836
      %1804 = vmatmul.mubr.bf16.gmra.mrb[0].mxu0 %v579
      %v1805 = vpop.f32.mrb[0].mxu0
      %v1806 = vadd.f32 %v1501, %v1805
      %v1807 = vpop.f32.mrb[0].mxu0
      %v1808 = vpop.f32.mrb[0].mxu0
      %v1809 = vadd.f32 %v1504, %v1808
      %v1810 = vpop.f32.mrb[0].mxu0
      %1811 = vdwg.mxu0
      %1812 = vmatprep.subr.bf16.mxu0 0
      %1813 = vmatpush1.bf16.msra.mxu0 %v1619
      %1814 = vmatprep.subr.bf16.mxu0 0
      %1815 = vmatpush1.bf16.msra.mxu0 %v1620
      %1816 = vmatprep.subr.bf16.mxu0 0
      %1817 = vmatpush1.bf16.msra.mxu0 %v1621
      %1818 = vmatprep.subr.bf16.mxu0 0
      %1819 = vmatpush1.bf16.msra.mxu0 %v1622
      %1820 = vmatprep.subr.bf16.mxu0 0
      %1821 = vmatpush1.bf16.msra.mxu0 %v1623
      %1822 = vmatprep.subr.bf16.mxu0 0
      %1823 = vmatpush1.bf16.msra.mxu0 %v1624
      %1824 = vmatprep.subr.bf16.mxu0 0
      %1825 = vmatpush1.bf16.msra.mxu0 %v1625
      %1826 = vmatprep.subr.bf16.mxu0 0
      %1827 = vmatpush1.bf16.msra.mxu0 %v1626
      %1828 = vmatprep.subr.bf16.mxu0 0
      %1829 = vmatpush1.bf16.msra.mxu0 0
      %1830 = vmatprep.subr.bf16.mxu0 0
      %1831 = vmatpush1.bf16.msra.mxu0 0
      %1832 = vmatprep.subr.bf16.mxu0 0
      %1833 = vmatpush1.bf16.msra.mxu0 0
      %1834 = vmatprep.subr.bf16.mxu0 0
      %1835 = vmatpush1.bf16.msra.mxu0 0
      %1836 = vmatprep.subr.bf16.mxu0 0
      %1837 = vmatpush1.bf16.msra.mxu0 0
      %1838 = vmatprep.subr.bf16.mxu0 0
      %1839 = vmatpush1.bf16.msra.mxu0 0
      %1840 = vmatprep.subr.bf16.mxu0 0
      %1841 = vmatpush1.bf16.msra.mxu0 0
      %1842 = vmatprep.subr.bf16.mxu0 0
      %1843 = vmatpush1.bf16.msra.mxu0 0
      %1844 = vmatprep.mubr.bf16.mxu0 0
      %1845 = vmatmul.mubr.bf16.gmra.mrb[0].mxu0 %v856
      %v1846 = vpop.f32.mrb[0].mxu0
      %v1847 = vadd.f32 %v1686, %v1846
      %v1848 = vpop.f32.mrb[0].mxu0
      %v1849 = vpop.f32.mrb[0].mxu0
      %v1850 = vadd.f32 %v1689, %v1849
      %v1851 = vpop.f32.mrb[0].mxu0
      %1852 = vmatprep.mubr.bf16.mxu0 0
      %1853 = vmatmul.mubr.bf16.gmra.mrb[0].mxu0 %v859
      %v1854 = vpop.f32.mrb[0].mxu0
      %v1855 = vadd.f32 %v1694, %v1854
      %v1856 = vpop.f32.mrb[0].mxu0
      %v1857 = vpop.f32.mrb[0].mxu0
      %v1858 = vadd.f32 %v1697, %v1857
      %v1859 = vpop.f32.mrb[0].mxu0
      %1860 = vmatprep.mubr.bf16.mxu0 0
      %1861 = vmatmul.mubr.bf16.gmra.mrb[0].mxu0 %v862
      %v1862 = vpop.f32.mrb[0].mxu0
      %v1863 = vadd.f32 %v1702, %v1862
      %v1864 = vpop.f32.mrb[0].mxu0
      %v1865 = vpop.f32.mrb[0].mxu0
      %v1866 = vadd.f32 %v1705, %v1865
      %v1867 = vpop.f32.mrb[0].mxu0
      %1868 = vmatprep.mubr.bf16.mxu0 0
      %1869 = vmatmul.mubr.bf16.gmra.mrb[0].mxu0 %v865
      %v1870 = vpop.f32.mrb[0].mxu0
      %v1871 = vadd.f32 %v1710, %v1870
      %v1872 = vpop.f32.mrb[0].mxu0
      %v1873 = vpop.f32.mrb[0].mxu0
      %v1874 = vadd.f32 %v1713, %v1873
      %v1875 = vpop.f32.mrb[0].mxu0
      %1876 = vmatprep.mubr.bf16.mxu0 0
      %1877 = vmatmul.mubr.bf16.gmra.mrb[0].mxu0 %v868
      %v1878 = vpop.f32.mrb[0].mxu0
      %v1879 = vadd.f32 %v1718, %v1878
      %v1880 = vpop.f32.mrb[0].mxu0
      %v1881 = vpop.f32.mrb[0].mxu0
      %v1882 = vadd.f32 %v1721, %v1881
      %v1883 = vpop.f32.mrb[0].mxu0
      %1884 = vmatprep.mubr.bf16.mxu0 0
      %1885 = vmatmul.mubr.bf16.gmra.mrb[0].mxu0 %v871
      %v1886 = vpop.f32.mrb[0].mxu0
      %v1887 = vadd.f32 %v1726, %v1886
      %v1888 = vpop.f32.mrb[0].mxu0
      %v1889 = vpop.f32.mrb[0].mxu0
      %v1890 = vadd.f32 %v1729, %v1889
      %v1891 = vpop.f32.mrb[0].mxu0
      %1892 = vmatprep.mubr.bf16.mxu0 0
      %1893 = vmatmul.mubr.bf16.gmra.mrb[0].mxu0 %v874
      %v1894 = vpop.f32.mrb[0].mxu0
      %v1895 = vadd.f32 %v1734, %v1894
      %v1896 = vpop.f32.mrb[0].mxu0
      %v1897 = vpop.f32.mrb[0].mxu0
      %v1898 = vadd.f32 %v1737, %v1897
      %v1899 = vpop.f32.mrb[0].mxu0
      %1900 = vmatprep.mubr.bf16.mxu0 0
      %1901 = vmatmul.mubr.bf16.gmra.mrb[0].mxu0 %v877
      %v1902 = vpop.f32.mrb[0].mxu0
      %v1903 = vadd.f32 %v1742, %v1902
      %v1904 = vpop.f32.mrb[0].mxu0
      %v1905 = vpop.f32.mrb[0].mxu0
      %v1906 = vadd.f32 %v1745, %v1905
      %v1907 = vpop.f32.mrb[0].mxu0
      %1908 = vmatprep.mubr.bf16.mxu0 0
      %1909 = vmatmul.mubr.bf16.gmra.mrb[0].mxu0 %v880
      %v1910 = vpop.f32.mrb[0].mxu0
      %v1911 = vadd.f32 %v1750, %v1910
      %v1912 = vpop.f32.mrb[0].mxu0
      %v1913 = vpop.f32.mrb[0].mxu0
      %v1914 = vadd.f32 %v1753, %v1913
      %v1915 = vpop.f32.mrb[0].mxu0
      %1916 = vmatprep.mubr.bf16.mxu0 0
      %1917 = vmatmul.mubr.bf16.gmra.mrb[0].mxu0 %v883
      %v1918 = vpop.f32.mrb[0].mxu0
      %v1919 = vadd.f32 %v1758, %v1918
      %v1920 = vpop.f32.mrb[0].mxu0
      %v1921 = vpop.f32.mrb[0].mxu0
      %v1922 = vadd.f32 %v1761, %v1921
      %v1923 = vpop.f32.mrb[0].mxu0
      %1924 = vmatprep.mubr.bf16.mxu0 0
      %1925 = vmatmul.mubr.bf16.gmra.mrb[0].mxu0 %v886
      %v1926 = vpop.f32.mrb[0].mxu0
      %v1927 = vadd.f32 %v1766, %v1926
      %v1928 = vpop.f32.mrb[0].mxu0
      %v1929 = vpop.f32.mrb[0].mxu0
      %v1930 = vadd.f32 %v1769, %v1929
      %v1931 = vpop.f32.mrb[0].mxu0
      %1932 = vmatprep.mubr.bf16.mxu0 0
      %1933 = vmatmul.mubr.bf16.gmra.mrb[0].mxu0 %v889
      %v1934 = vpop.f32.mrb[0].mxu0
      %v1935 = vadd.f32 %v1774, %v1934
      %v1936 = vpop.f32.mrb[0].mxu0
      %v1937 = vpop.f32.mrb[0].mxu0
      %v1938 = vadd.f32 %v1777, %v1937
      %v1939 = vpop.f32.mrb[0].mxu0
      %1940 = vmatprep.mubr.bf16.mxu0 0
      %1941 = vmatmul.mubr.bf16.gmra.mrb[0].mxu0 %v892
      %v1942 = vpop.f32.mrb[0].mxu0
      %v1943 = vadd.f32 %v1782, %v1942
      %v1944 = vpop.f32.mrb[0].mxu0
      %v1945 = vpop.f32.mrb[0].mxu0
      %v1946 = vadd.f32 %v1785, %v1945
      %v1947 = vpop.f32.mrb[0].mxu0
      %1948 = vmatprep.mubr.bf16.mxu0 0
      %1949 = vmatmul.mubr.bf16.gmra.mrb[0].mxu0 %v895
      %v1950 = vpop.f32.mrb[0].mxu0
      %v1951 = vadd.f32 %v1790, %v1950
      %v1952 = vpop.f32.mrb[0].mxu0
      %v1953 = vpop.f32.mrb[0].mxu0
      %v1954 = vadd.f32 %v1793, %v1953
      %v1955 = vpop.f32.mrb[0].mxu0
      %1956 = vmatprep.mubr.bf16.mxu0 0
      %1957 = vmatmul.mubr.bf16.gmra.mrb[0].mxu0 %v898
      %v1958 = vpop.f32.mrb[0].mxu0
      %v1959 = vadd.f32 %v1798, %v1958
      %v1960 = vpop.f32.mrb[0].mxu0
      %v1961 = vpop.f32.mrb[0].mxu0
      %v1962 = vadd.f32 %v1801, %v1961
      %v1963 = vpop.f32.mrb[0].mxu0
      %1964 = vmatprep.mubr.bf16.mxu0 0
      %1965 = vmatmul.mubr.bf16.gmra.mrb[0].mxu0 %v901
      %v1966 = vpop.f32.mrb[0].mxu0
      %v1967 = vadd.f32 %v1806, %v1966
      %v1968 = vpop.f32.mrb[0].mxu0
      %v1969 = vpop.f32.mrb[0].mxu0
      %v1970 = vadd.f32 %v1809, %v1969
      %v1971 = vpop.f32.mrb[0].mxu0
      %1972 = vdwg.mxu0
      %v1975 = vunpack.c.l.b16 %v497
      %v1976 = vunpack.c.l.b16 %v498
      %v1977 = vpack.c.b16 %v1976, %v1975
      %v1980 = vunpack.c.l.b16 %v499
      %v1981 = vpack.c.b16 %v1980, %v1980
      %v1983 = vshrl.u32 %v1977, 16
      %v1985 = vshll.u32 %v1977, 16
      %v1987 = vrot.slane %v1985, 1
      %v1988 = vor.u32 %v1983, %v1987
      %v1990 = vshll.u32 %v1981, 16
      %v1992 = vrot.slane %v1990, 1
      %v1993 = vsel %vm644, %v1988, %v1992
      %v1995 = vrot.slane %v1977, 1
      %v1996 = vrot.slane %v1981, 1
      %v1997 = vsel %vm853, %v1995, %v1996
      %s1999 = scalar_lea.vmem %s3, 384
      %v2000 = vld [vmem:[%s1999] sm:$0xf]
      %v2001 = vld [vmem:[%s1999 + $0x4] sm:$0xf]
      %v2002 = vld [vmem:[%s1999 + $0x8] sm:$0xf]
      %v2003 = vld [vmem:[%s1999 + $0xc] sm:$0xf]
      %v2004 = vld [vmem:[%s1999 + $0x10] sm:$0xf]
      %v2005 = vld [vmem:[%s1999 + $0x14] sm:$0xf]
      %v2006 = vld [vmem:[%s1999 + $0x18] sm:$0xf]
      %v2007 = vld [vmem:[%s1999 + $0x1c] sm:$0xf]
      %v2008 = vld [vmem:[%s1999 + $0x20] sm:$0xf]
      %v2009 = vld [vmem:[%s1999 + $0x24] sm:$0xf]
      %v2010 = vld [vmem:[%s1999 + $0x28] sm:$0xf]
      %v2011 = vld [vmem:[%s1999 + $0x2c] sm:$0xf]
      %v2012 = vld [vmem:[%s1999 + $0x30] sm:$0xf]
      %v2013 = vld [vmem:[%s1999 + $0x34] sm:$0xf]
      %v2014 = vld [vmem:[%s1999 + $0x38] sm:$0xf]
      %v2015 = vld [vmem:[%s1999 + $0x3c] sm:$0xf]
      %v2016 = vld [vmem:[%s1999 + $0x40] sm:$0xf]
      %v2017 = vld [vmem:[%s1999 + $0x44] sm:$0xf]
      %v2018 = vld [vmem:[%s1999 + $0x48] sm:$0xf]
      %v2019 = vld [vmem:[%s1999 + $0x4c] sm:$0xf]
      %v2020 = vld [vmem:[%s1999 + $0x50] sm:$0xf]
      %v2021 = vld [vmem:[%s1999 + $0x54] sm:$0xf]
      %v2022 = vld [vmem:[%s1999 + $0x58] sm:$0xf]
      %v2023 = vld [vmem:[%s1999 + $0x5c] sm:$0xf]
      %v2024 = vld [vmem:[%s1999 + $0x60] sm:$0xf]
      %v2025 = vld [vmem:[%s1999 + $0x64] sm:$0xf]
      %v2026 = vld [vmem:[%s1999 + $0x68] sm:$0xf]
      %v2027 = vld [vmem:[%s1999 + $0x6c] sm:$0xf]
      %v2028 = vld [vmem:[%s1999 + $0x70] sm:$0xf]
      %v2029 = vld [vmem:[%s1999 + $0x74] sm:$0xf]
      %v2030 = vld [vmem:[%s1999 + $0x78] sm:$0xf]
      %v2031 = vld [vmem:[%s1999 + $0x7c] sm:$0xf]
      %v2032 = vld [vmem:[%s1999 + $0x80] sm:$0xf]
      %v2033 = vld [vmem:[%s1999 + $0x84] sm:$0xf]
      %v2034 = vld [vmem:[%s1999 + $0x88] sm:$0xf]
      %v2035 = vld [vmem:[%s1999 + $0x8c] sm:$0xf]
      %v2036 = vld [vmem:[%s1999 + $0x90] sm:$0xf]
      %v2037 = vld [vmem:[%s1999 + $0x94] sm:$0xf]
      %v2038 = vld [vmem:[%s1999 + $0x98] sm:$0xf]
      %v2039 = vld [vmem:[%s1999 + $0x9c] sm:$0xf]
      %v2040 = vld [vmem:[%s1999 + $0xa0] sm:$0xf]
      %v2041 = vld [vmem:[%s1999 + $0xa4] sm:$0xf]
      %v2042 = vld [vmem:[%s1999 + $0xa8] sm:$0xf]
      %v2043 = vld [vmem:[%s1999 + $0xac] sm:$0xf]
      %v2044 = vld [vmem:[%s1999 + $0xb0] sm:$0xf]
      %v2045 = vld [vmem:[%s1999 + $0xb4] sm:$0xf]
      %v2046 = vld [vmem:[%s1999 + $0xb8] sm:$0xf]
      %v2047 = vld [vmem:[%s1999 + $0xbc] sm:$0xf]
      %v2096 = vunpack.c.l.b16 %v2000
      %v2097 = vunpack.c.l.b16 %v2001
      %v2098 = vunpack.c.l.b16 %v2002
      %v2099 = vunpack.c.l.b16 %v2003
      %v2100 = vunpack.c.l.b16 %v2004
      %v2101 = vunpack.c.l.b16 %v2005
      %v2102 = vunpack.c.l.b16 %v2006
      %v2103 = vunpack.c.l.b16 %v2007
      %v2104 = vunpack.c.l.b16 %v2008
      %v2105 = vunpack.c.l.b16 %v2009
      %v2106 = vunpack.c.l.b16 %v2010
      %v2107 = vunpack.c.l.b16 %v2011
      %v2108 = vunpack.c.l.b16 %v2012
      %v2109 = vunpack.c.l.b16 %v2013
      %v2110 = vunpack.c.l.b16 %v2014
      %v2111 = vunpack.c.l.b16 %v2015
      %v2112 = vunpack.c.l.b16 %v2016
      %v2113 = vunpack.c.l.b16 %v2017
      %v2114 = vunpack.c.l.b16 %v2018
      %v2115 = vunpack.c.l.b16 %v2019
      %v2116 = vunpack.c.l.b16 %v2020
      %v2117 = vunpack.c.l.b16 %v2021
      %v2118 = vunpack.c.l.b16 %v2022
      %v2119 = vunpack.c.l.b16 %v2023
      %v2120 = vunpack.c.l.b16 %v2024
      %v2121 = vunpack.c.l.b16 %v2025
      %v2122 = vunpack.c.l.b16 %v2026
      %v2123 = vunpack.c.l.b16 %v2027
      %v2124 = vunpack.c.l.b16 %v2028
      %v2125 = vunpack.c.l.b16 %v2029
      %v2126 = vunpack.c.l.b16 %v2030
      %v2127 = vunpack.c.l.b16 %v2031
      %v2128 = vunpack.c.l.b16 %v2032
      %v2129 = vunpack.c.l.b16 %v2033
      %v2130 = vunpack.c.l.b16 %v2034
      %v2131 = vunpack.c.l.b16 %v2035
      %v2132 = vunpack.c.l.b16 %v2036
      %v2133 = vunpack.c.l.b16 %v2037
      %v2134 = vunpack.c.l.b16 %v2038
      %v2135 = vunpack.c.l.b16 %v2039
      %v2136 = vunpack.c.l.b16 %v2040
      %v2137 = vunpack.c.l.b16 %v2041
      %v2138 = vunpack.c.l.b16 %v2042
      %v2139 = vunpack.c.l.b16 %v2043
      %v2140 = vunpack.c.l.b16 %v2044
      %v2141 = vunpack.c.l.b16 %v2045
      %v2142 = vunpack.c.l.b16 %v2046
      %v2143 = vunpack.c.l.b16 %v2047
      %v2144 = vpack.c.b16 %v2097, %v2096
      %v2145 = vpack.c.b16 %v2099, %v2098
      %v2146 = vpack.c.b16 %v2101, %v2100
      %v2147 = vpack.c.b16 %v2103, %v2102
      %v2148 = vpack.c.b16 %v2105, %v2104
      %v2149 = vpack.c.b16 %v2107, %v2106
      %v2150 = vpack.c.b16 %v2109, %v2108
      %v2151 = vpack.c.b16 %v2111, %v2110
      %v2152 = vpack.c.b16 %v2113, %v2112
      %v2153 = vpack.c.b16 %v2115, %v2114
      %v2154 = vpack.c.b16 %v2117, %v2116
      %v2155 = vpack.c.b16 %v2119, %v2118
      %v2156 = vpack.c.b16 %v2121, %v2120
      %v2157 = vpack.c.b16 %v2123, %v2122
      %v2158 = vpack.c.b16 %v2125, %v2124
      %v2159 = vpack.c.b16 %v2127, %v2126
      %v2160 = vpack.c.b16 %v2129, %v2128
      %v2161 = vpack.c.b16 %v2131, %v2130
      %v2162 = vpack.c.b16 %v2133, %v2132
      %v2163 = vpack.c.b16 %v2135, %v2134
      %v2164 = vpack.c.b16 %v2137, %v2136
      %v2165 = vpack.c.b16 %v2139, %v2138
      %v2166 = vpack.c.b16 %v2141, %v2140
      %v2167 = vpack.c.b16 %v2143, %v2142
      %2192 = vmatprep.subr.bf16.mxu0 0
      %2193 = vmatpush1.bf16.msra.mxu0 %v2144
      %2194 = vmatprep.subr.bf16.mxu0 0
      %2195 = vmatpush1.bf16.msra.mxu0 %v2145
      %2196 = vmatprep.subr.bf16.mxu0 0
      %2197 = vmatpush1.bf16.msra.mxu0 %v2146
      %2198 = vmatprep.subr.bf16.mxu0 0
      %2199 = vmatpush1.bf16.msra.mxu0 %v2147
      %2200 = vmatprep.subr.bf16.mxu0 0
      %2201 = vmatpush1.bf16.msra.mxu0 %v2148
      %2202 = vmatprep.subr.bf16.mxu0 0
      %2203 = vmatpush1.bf16.msra.mxu0 %v2149
      %2204 = vmatprep.subr.bf16.mxu0 0
      %2205 = vmatpush1.bf16.msra.mxu0 %v2150
      %2206 = vmatprep.subr.bf16.mxu0 0
      %2207 = vmatpush1.bf16.msra.mxu0 %v2151
      %2208 = vmatprep.subr.bf16.mxu0 0
      %2209 = vmatpush1.bf16.msra.mxu0 %v2152
      %2210 = vmatprep.subr.bf16.mxu0 0
      %2211 = vmatpush1.bf16.msra.mxu0 %v2153
      %2212 = vmatprep.subr.bf16.mxu0 0
      %2213 = vmatpush1.bf16.msra.mxu0 %v2154
      %2214 = vmatprep.subr.bf16.mxu0 0
      %2215 = vmatpush1.bf16.msra.mxu0 %v2155
      %2216 = vmatprep.subr.bf16.mxu0 0
      %2217 = vmatpush1.bf16.msra.mxu0 %v2156
      %2218 = vmatprep.subr.bf16.mxu0 0
      %2219 = vmatpush1.bf16.msra.mxu0 %v2157
      %2220 = vmatprep.subr.bf16.mxu0 0
      %2221 = vmatpush1.bf16.msra.mxu0 %v2158
      %2222 = vmatprep.subr.bf16.mxu0 0
      %2223 = vmatpush1.bf16.msra.mxu0 %v2159
      %2224 = vmatprep.mubr.bf16.mxu0 %v680
      %2225 = vmatmul.mubr.bf16.gmra.mrb[0].mxu0 %v566
      %v2226 = vpop.f32.mrb[0].mxu0
      %v2227 = vadd.f32 0.0, %v2226
      %v2228 = vpop.f32.mrb[0].mxu0
      %v2229 = vpop.f32.mrb[0].mxu0
      %v2230 = vadd.f32 0.0, %v2229
      %v2231 = vpop.f32.mrb[0].mxu0
      %2232 = vmatprep.mubr.bf16.mxu0 %v692
      %2233 = vmatmul.mubr.bf16.gmra.mrb[0].mxu0 %v567
      %v2234 = vpop.f32.mrb[0].mxu0
      %v2235 = vadd.f32 0.0, %v2234
      %v2236 = vpop.f32.mrb[0].mxu0
      %v2237 = vpop.f32.mrb[0].mxu0
      %v2238 = vadd.f32 0.0, %v2237
      %v2239 = vpop.f32.mrb[0].mxu0
      %2240 = vmatprep.mubr.bf16.mxu0 %v704
      %2241 = vmatmul.mubr.bf16.gmra.mrb[0].mxu0 %v568
      %v2242 = vpop.f32.mrb[0].mxu0
      %v2243 = vadd.f32 0.0, %v2242
      %v2244 = vpop.f32.mrb[0].mxu0
      %v2245 = vpop.f32.mrb[0].mxu0
      %v2246 = vadd.f32 0.0, %v2245
      %v2247 = vpop.f32.mrb[0].mxu0
      %2248 = vmatprep.mubr.bf16.mxu0 %v716
      %2249 = vmatmul.mubr.bf16.gmra.mrb[0].mxu0 %v569
      %v2250 = vpop.f32.mrb[0].mxu0
      %v2251 = vadd.f32 0.0, %v2250
      %v2252 = vpop.f32.mrb[0].mxu0
      %v2253 = vpop.f32.mrb[0].mxu0
      %v2254 = vadd.f32 0.0, %v2253
      %v2255 = vpop.f32.mrb[0].mxu0
      %2256 = vmatprep.mubr.bf16.mxu0 %v728
      %2257 = vmatmul.mubr.bf16.gmra.mrb[0].mxu0 %v570
      %v2258 = vpop.f32.mrb[0].mxu0
      %v2259 = vadd.f32 0.0, %v2258
      %v2260 = vpop.f32.mrb[0].mxu0
      %v2261 = vpop.f32.mrb[0].mxu0
      %v2262 = vadd.f32 0.0, %v2261
      %v2263 = vpop.f32.mrb[0].mxu0
      %2264 = vmatprep.mubr.bf16.mxu0 %v740
      %2265 = vmatmul.mubr.bf16.gmra.mrb[0].mxu0 %v571
      %v2266 = vpop.f32.mrb[0].mxu0
      %v2267 = vadd.f32 0.0, %v2266
      %v2268 = vpop.f32.mrb[0].mxu0
      %v2269 = vpop.f32.mrb[0].mxu0
      %v2270 = vadd.f32 0.0, %v2269
      %v2271 = vpop.f32.mrb[0].mxu0
      %2272 = vmatprep.mubr.bf16.mxu0 %v752
      %2273 = vmatmul.mubr.bf16.gmra.mrb[0].mxu0 %v572
      %v2274 = vpop.f32.mrb[0].mxu0
      %v2275 = vadd.f32 0.0, %v2274
      %v2276 = vpop.f32.mrb[0].mxu0
      %v2277 = vpop.f32.mrb[0].mxu0
      %v2278 = vadd.f32 0.0, %v2277
      %v2279 = vpop.f32.mrb[0].mxu0
      %2280 = vmatprep.mubr.bf16.mxu0 %v764
      %2281 = vmatmul.mubr.bf16.gmra.mrb[0].mxu0 %v573
      %v2282 = vpop.f32.mrb[0].mxu0
      %v2283 = vadd.f32 0.0, %v2282
      %v2284 = vpop.f32.mrb[0].mxu0
      %v2285 = vpop.f32.mrb[0].mxu0
      %v2286 = vadd.f32 0.0, %v2285
      %v2287 = vpop.f32.mrb[0].mxu0
      %2288 = vmatprep.mubr.bf16.mxu0 %v776
      %2289 = vmatmul.mubr.bf16.gmra.mrb[0].mxu0 %v574
      %v2290 = vpop.f32.mrb[0].mxu0
      %v2291 = vadd.f32 0.0, %v2290
      %v2292 = vpop.f32.mrb[0].mxu0
      %v2293 = vpop.f32.mrb[0].mxu0
      %v2294 = vadd.f32 0.0, %v2293
      %v2295 = vpop.f32.mrb[0].mxu0
      %2296 = vmatprep.mubr.bf16.mxu0 %v788
      %2297 = vmatmul.mubr.bf16.gmra.mrb[0].mxu0 %v575
      %v2298 = vpop.f32.mrb[0].mxu0
      %v2299 = vadd.f32 0.0, %v2298
      %v2300 = vpop.f32.mrb[0].mxu0
      %v2301 = vpop.f32.mrb[0].mxu0
      %v2302 = vadd.f32 0.0, %v2301
      %v2303 = vpop.f32.mrb[0].mxu0
      %2304 = vmatprep.mubr.bf16.mxu0 %v800
      %2305 = vmatmul.mubr.bf16.gmra.mrb[0].mxu0 %v576
      %v2306 = vpop.f32.mrb[0].mxu0
      %v2307 = vadd.f32 0.0, %v2306
      %v2308 = vpop.f32.mrb[0].mxu0
      %v2309 = vpop.f32.mrb[0].mxu0
      %v2310 = vadd.f32 0.0, %v2309
      %v2311 = vpop.f32.mrb[0].mxu0
      %2312 = vmatprep.mubr.bf16.mxu0 %v812
      %2313 = vmatmul.mubr.bf16.gmra.mrb[0].mxu0 %v577
      %v2314 = vpop.f32.mrb[0].mxu0
      %v2315 = vadd.f32 0.0, %v2314
      %v2316 = vpop.f32.mrb[0].mxu0
      %v2317 = vpop.f32.mrb[0].mxu0
      %v2318 = vadd.f32 0.0, %v2317
      %v2319 = vpop.f32.mrb[0].mxu0
      %2320 = vmatprep.mubr.bf16.mxu0 %v824
      %2321 = vmatmul.mubr.bf16.gmra.mrb[0].mxu0 %v578
      %v2322 = vpop.f32.mrb[0].mxu0
      %v2323 = vadd.f32 0.0, %v2322
      %v2324 = vpop.f32.mrb[0].mxu0
      %v2325 = vpop.f32.mrb[0].mxu0
      %v2326 = vadd.f32 0.0, %v2325
      %v2327 = vpop.f32.mrb[0].mxu0
      %2328 = vmatprep.mubr.bf16.mxu0 %v836
      %2329 = vmatmul.mubr.bf16.gmra.mrb[0].mxu0 %v579
      %v2330 = vpop.f32.mrb[0].mxu0
      %v2331 = vadd.f32 0.0, %v2330
      %v2332 = vpop.f32.mrb[0].mxu0
      %v2333 = vpop.f32.mrb[0].mxu0
      %v2334 = vadd.f32 0.0, %v2333
      %v2335 = vpop.f32.mrb[0].mxu0
      %2336 = vmatprep.mubr.bf16.mxu0 %v986
      %2337 = vmatmul.mubr.bf16.gmra.mrb[0].mxu0 %v970
      %v2338 = vpop.f32.mrb[0].mxu0
      %v2339 = vadd.f32 0.0, %v2338
      %v2340 = vpop.f32.mrb[0].mxu0
      %v2341 = vpop.f32.mrb[0].mxu0
      %v2342 = vadd.f32 0.0, %v2341
      %v2343 = vpop.f32.mrb[0].mxu0
      %2344 = vmatprep.mubr.bf16.mxu0 %v1993
      %2345 = vmatmul.mubr.bf16.gmra.mrb[0].mxu0 %v1977
      %v2346 = vpop.f32.mrb[0].mxu0
      %v2347 = vadd.f32 0.0, %v2346
      %v2348 = vpop.f32.mrb[0].mxu0
      %v2349 = vpop.f32.mrb[0].mxu0
      %v2350 = vadd.f32 0.0, %v2349
      %v2351 = vpop.f32.mrb[0].mxu0
      %2352 = vdwg.mxu0
      %2353 = vmatprep.subr.bf16.mxu0 0
      %2354 = vmatpush1.bf16.msra.mxu0 %v2160
      %2355 = vmatprep.subr.bf16.mxu0 0
      %2356 = vmatpush1.bf16.msra.mxu0 %v2161
      %2357 = vmatprep.subr.bf16.mxu0 0
      %2358 = vmatpush1.bf16.msra.mxu0 %v2162
      %2359 = vmatprep.subr.bf16.mxu0 0
      %2360 = vmatpush1.bf16.msra.mxu0 %v2163
      %2361 = vmatprep.subr.bf16.mxu0 0
      %2362 = vmatpush1.bf16.msra.mxu0 %v2164
      %2363 = vmatprep.subr.bf16.mxu0 0
      %2364 = vmatpush1.bf16.msra.mxu0 %v2165
      %2365 = vmatprep.subr.bf16.mxu0 0
      %2366 = vmatpush1.bf16.msra.mxu0 %v2166
      %2367 = vmatprep.subr.bf16.mxu0 0
      %2368 = vmatpush1.bf16.msra.mxu0 %v2167
      %2369 = vmatprep.subr.bf16.mxu0 0
      %2370 = vmatpush1.bf16.msra.mxu0 0
      %2371 = vmatprep.subr.bf16.mxu0 0
      %2372 = vmatpush1.bf16.msra.mxu0 0
      %2373 = vmatprep.subr.bf16.mxu0 0
      %2374 = vmatpush1.bf16.msra.mxu0 0
      %2375 = vmatprep.subr.bf16.mxu0 0
      %2376 = vmatpush1.bf16.msra.mxu0 0
      %2377 = vmatprep.subr.bf16.mxu0 0
      %2378 = vmatpush1.bf16.msra.mxu0 0
      %2379 = vmatprep.subr.bf16.mxu0 0
      %2380 = vmatpush1.bf16.msra.mxu0 0
      %2381 = vmatprep.subr.bf16.mxu0 0
      %2382 = vmatpush1.bf16.msra.mxu0 0
      %2383 = vmatprep.subr.bf16.mxu0 0
      %2384 = vmatpush1.bf16.msra.mxu0 0
      %2385 = vmatprep.mubr.bf16.mxu0 0
      %2386 = vmatmul.mubr.bf16.gmra.mrb[0].mxu0 %v862
      %v2387 = vpop.f32.mrb[0].mxu0
      %v2388 = vadd.f32 %v2227, %v2387
      %v2389 = vpop.f32.mrb[0].mxu0
      %v2390 = vpop.f32.mrb[0].mxu0
      %v2391 = vadd.f32 %v2230, %v2390
      %v2392 = vpop.f32.mrb[0].mxu0
      %2393 = vmatprep.mubr.bf16.mxu0 0
      %2394 = vmatmul.mubr.bf16.gmra.mrb[0].mxu0 %v865
      %v2395 = vpop.f32.mrb[0].mxu0
      %v2396 = vadd.f32 %v2235, %v2395
      %v2397 = vpop.f32.mrb[0].mxu0
      %v2398 = vpop.f32.mrb[0].mxu0
      %v2399 = vadd.f32 %v2238, %v2398
      %v2400 = vpop.f32.mrb[0].mxu0
      %2401 = vmatprep.mubr.bf16.mxu0 0
      %2402 = vmatmul.mubr.bf16.gmra.mrb[0].mxu0 %v868
      %v2403 = vpop.f32.mrb[0].mxu0
      %v2404 = vadd.f32 %v2243, %v2403
      %v2405 = vpop.f32.mrb[0].mxu0
      %v2406 = vpop.f32.mrb[0].mxu0
      %v2407 = vadd.f32 %v2246, %v2406
      %v2408 = vpop.f32.mrb[0].mxu0
      %2409 = vmatprep.mubr.bf16.mxu0 0
      %2410 = vmatmul.mubr.bf16.gmra.mrb[0].mxu0 %v871
      %v2411 = vpop.f32.mrb[0].mxu0
      %v2412 = vadd.f32 %v2251, %v2411
      %v2413 = vpop.f32.mrb[0].mxu0
      %v2414 = vpop.f32.mrb[0].mxu0
      %v2415 = vadd.f32 %v2254, %v2414
      %v2416 = vpop.f32.mrb[0].mxu0
      %2417 = vmatprep.mubr.bf16.mxu0 0
      %2418 = vmatmul.mubr.bf16.gmra.mrb[0].mxu0 %v874
      %v2419 = vpop.f32.mrb[0].mxu0
      %v2420 = vadd.f32 %v2259, %v2419
      %v2421 = vpop.f32.mrb[0].mxu0
      %v2422 = vpop.f32.mrb[0].mxu0
      %v2423 = vadd.f32 %v2262, %v2422
      %v2424 = vpop.f32.mrb[0].mxu0
      %2425 = vmatprep.mubr.bf16.mxu0 0
      %2426 = vmatmul.mubr.bf16.gmra.mrb[0].mxu0 %v877
      %v2427 = vpop.f32.mrb[0].mxu0
      %v2428 = vadd.f32 %v2267, %v2427
      %v2429 = vpop.f32.mrb[0].mxu0
      %v2430 = vpop.f32.mrb[0].mxu0
      %v2431 = vadd.f32 %v2270, %v2430
      %v2432 = vpop.f32.mrb[0].mxu0
      %2433 = vmatprep.mubr.bf16.mxu0 0
      %2434 = vmatmul.mubr.bf16.gmra.mrb[0].mxu0 %v880
      %v2435 = vpop.f32.mrb[0].mxu0
      %v2436 = vadd.f32 %v2275, %v2435
      %v2437 = vpop.f32.mrb[0].mxu0
      %v2438 = vpop.f32.mrb[0].mxu0
      %v2439 = vadd.f32 %v2278, %v2438
      %v2440 = vpop.f32.mrb[0].mxu0
      %2441 = vmatprep.mubr.bf16.mxu0 0
      %2442 = vmatmul.mubr.bf16.gmra.mrb[0].mxu0 %v883
      %v2443 = vpop.f32.mrb[0].mxu0
      %v2444 = vadd.f32 %v2283, %v2443
      %v2445 = vpop.f32.mrb[0].mxu0
      %v2446 = vpop.f32.mrb[0].mxu0
      %v2447 = vadd.f32 %v2286, %v2446
      %v2448 = vpop.f32.mrb[0].mxu0
      %2449 = vmatprep.mubr.bf16.mxu0 0
      %2450 = vmatmul.mubr.bf16.gmra.mrb[0].mxu0 %v886
      %v2451 = vpop.f32.mrb[0].mxu0
      %v2452 = vadd.f32 %v2291, %v2451
      %v2453 = vpop.f32.mrb[0].mxu0
      %v2454 = vpop.f32.mrb[0].mxu0
      %v2455 = vadd.f32 %v2294, %v2454
      %v2456 = vpop.f32.mrb[0].mxu0
      %2457 = vmatprep.mubr.bf16.mxu0 0
      %2458 = vmatmul.mubr.bf16.gmra.mrb[0].mxu0 %v889
      %v2459 = vpop.f32.mrb[0].mxu0
      %v2460 = vadd.f32 %v2299, %v2459
      %v2461 = vpop.f32.mrb[0].mxu0
      %v2462 = vpop.f32.mrb[0].mxu0
      %v2463 = vadd.f32 %v2302, %v2462
      %v2464 = vpop.f32.mrb[0].mxu0
      %2465 = vmatprep.mubr.bf16.mxu0 0
      %2466 = vmatmul.mubr.bf16.gmra.mrb[0].mxu0 %v892
      %v2467 = vpop.f32.mrb[0].mxu0
      %v2468 = vadd.f32 %v2307, %v2467
      %v2469 = vpop.f32.mrb[0].mxu0
      %v2470 = vpop.f32.mrb[0].mxu0
      %v2471 = vadd.f32 %v2310, %v2470
      %v2472 = vpop.f32.mrb[0].mxu0
      %2473 = vmatprep.mubr.bf16.mxu0 0
      %2474 = vmatmul.mubr.bf16.gmra.mrb[0].mxu0 %v895
      %v2475 = vpop.f32.mrb[0].mxu0
      %v2476 = vadd.f32 %v2315, %v2475
      %v2477 = vpop.f32.mrb[0].mxu0
      %v2478 = vpop.f32.mrb[0].mxu0
      %v2479 = vadd.f32 %v2318, %v2478
      %v2480 = vpop.f32.mrb[0].mxu0
      %2481 = vmatprep.mubr.bf16.mxu0 0
      %2482 = vmatmul.mubr.bf16.gmra.mrb[0].mxu0 %v898
      %v2483 = vpop.f32.mrb[0].mxu0
      %v2484 = vadd.f32 %v2323, %v2483
      %v2485 = vpop.f32.mrb[0].mxu0
      %v2486 = vpop.f32.mrb[0].mxu0
      %v2487 = vadd.f32 %v2326, %v2486
      %v2488 = vpop.f32.mrb[0].mxu0
      %2489 = vmatprep.mubr.bf16.mxu0 0
      %2490 = vmatmul.mubr.bf16.gmra.mrb[0].mxu0 %v901
      %v2491 = vpop.f32.mrb[0].mxu0
      %v2492 = vadd.f32 %v2331, %v2491
      %v2493 = vpop.f32.mrb[0].mxu0
      %v2494 = vpop.f32.mrb[0].mxu0
      %v2495 = vadd.f32 %v2334, %v2494
      %v2496 = vpop.f32.mrb[0].mxu0
      %2497 = vmatprep.mubr.bf16.mxu0 0
      %2498 = vmatmul.mubr.bf16.gmra.mrb[0].mxu0 %v990
      %v2499 = vpop.f32.mrb[0].mxu0
      %v2500 = vadd.f32 %v2339, %v2499
      %v2501 = vpop.f32.mrb[0].mxu0
      %v2502 = vpop.f32.mrb[0].mxu0
      %v2503 = vadd.f32 %v2342, %v2502
      %v2504 = vpop.f32.mrb[0].mxu0
      %2505 = vmatprep.mubr.bf16.mxu0 0
      %2506 = vmatmul.mubr.bf16.gmra.mrb[0].mxu0 %v1997
      %v2507 = vpop.f32.mrb[0].mxu0
      %v2508 = vadd.f32 %v2347, %v2507
      %v2509 = vpop.f32.mrb[0].mxu0
      %v2510 = vpop.f32.mrb[0].mxu0
      %v2511 = vadd.f32 %v2350, %v2510
      %v2512 = vpop.f32.mrb[0].mxu0
      %2513 = vdwg.mxu0
      %v2514 = vadd.f32 %v1847, %v2388
      %v2515 = vadd.f32 %v1850, %v2391
      %v2516 = vadd.f32 %v1855, %v2396
      %v2517 = vadd.f32 %v1858, %v2399
      %v2518 = vadd.f32 %v1863, %v2404
      %v2519 = vadd.f32 %v1866, %v2407
      %v2520 = vadd.f32 %v1871, %v2412
      %v2521 = vadd.f32 %v1874, %v2415
      %v2522 = vadd.f32 %v1879, %v2420
      %v2523 = vadd.f32 %v1882, %v2423
      %v2524 = vadd.f32 %v1887, %v2428
      %v2525 = vadd.f32 %v1890, %v2431
      %v2526 = vadd.f32 %v1895, %v2436
      %v2527 = vadd.f32 %v1898, %v2439
      %v2528 = vadd.f32 %v1903, %v2444
      %v2529 = vadd.f32 %v1906, %v2447
      %v2530 = vadd.f32 %v1911, %v2452
      %v2531 = vadd.f32 %v1914, %v2455
      %v2532 = vadd.f32 %v1919, %v2460
      %v2533 = vadd.f32 %v1922, %v2463
      %v2534 = vadd.f32 %v1927, %v2468
      %v2535 = vadd.f32 %v1930, %v2471
      %v2536 = vadd.f32 %v1935, %v2476
      %v2537 = vadd.f32 %v1938, %v2479
      %v2538 = vadd.f32 %v1943, %v2484
      %v2539 = vadd.f32 %v1946, %v2487
      %v2540 = vadd.f32 %v1951, %v2492
      %v2541 = vadd.f32 %v1954, %v2495
      %v2542 = vadd.f32 %v1959, %v2500
      %v2543 = vadd.f32 %v1962, %v2503
      %v2544 = vadd.f32 %v1967, %v2508
      %v2545 = vadd.f32 %v1970, %v2511
      %v2546 = vpack.c.bf16 %v2515, %v2514
      %v2547 = vpack.c.bf16 %v2517, %v2516
      %v2548 = vpack.c.bf16 %v2519, %v2518
      %v2549 = vpack.c.bf16 %v2521, %v2520
      %v2550 = vpack.c.bf16 %v2523, %v2522
      %v2551 = vpack.c.bf16 %v2525, %v2524
      %v2552 = vpack.c.bf16 %v2527, %v2526
      %v2553 = vpack.c.bf16 %v2529, %v2528
      %v2554 = vpack.c.bf16 %v2531, %v2530
      %v2555 = vpack.c.bf16 %v2533, %v2532
      %v2556 = vpack.c.bf16 %v2535, %v2534
      %v2557 = vpack.c.bf16 %v2537, %v2536
      %v2558 = vpack.c.bf16 %v2539, %v2538
      %v2559 = vpack.c.bf16 %v2541, %v2540
      %v2560 = vpack.c.bf16 %v2543, %v2542
      %v2561 = vpack.c.bf16 %v2545, %v2544
      %v2578 = vunpack.c.l.b16 %v2546
      %v2579 = vunpack.c.h.b16 %v2546
      %v2580 = vunpack.c.l.b16 %v2547
      %v2581 = vunpack.c.h.b16 %v2547
      %v2582 = vunpack.c.l.b16 %v2548
      %v2583 = vunpack.c.h.b16 %v2548
      %v2584 = vunpack.c.l.b16 %v2549
      %v2585 = vunpack.c.h.b16 %v2549
      %v2586 = vunpack.c.l.b16 %v2550
      %v2587 = vunpack.c.h.b16 %v2550
      %v2588 = vunpack.c.l.b16 %v2551
      %v2589 = vunpack.c.h.b16 %v2551
      %v2590 = vunpack.c.l.b16 %v2552
      %v2591 = vunpack.c.h.b16 %v2552
      %v2592 = vunpack.c.l.b16 %v2553
      %v2593 = vunpack.c.h.b16 %v2553
      %v2594 = vunpack.c.l.b16 %v2554
      %v2595 = vunpack.c.h.b16 %v2554
      %v2596 = vunpack.c.l.b16 %v2555
      %v2597 = vunpack.c.h.b16 %v2555
      %v2598 = vunpack.c.l.b16 %v2556
      %v2599 = vunpack.c.h.b16 %v2556
      %v2600 = vunpack.c.l.b16 %v2557
      %v2601 = vunpack.c.h.b16 %v2557
      %v2602 = vunpack.c.l.b16 %v2558
      %v2603 = vunpack.c.h.b16 %v2558
      %v2604 = vunpack.c.l.b16 %v2559
      %v2605 = vunpack.c.h.b16 %v2559
      %v2606 = vunpack.c.l.b16 %v2560
      %v2607 = vunpack.c.h.b16 %v2560
      %v2608 = vunpack.c.l.b16 %v2561
      %v2609 = vunpack.c.h.b16 %v2561
      %v2610 = vpack.c.b16 %v2578, %v2578
      %v2611 = vpack.c.b16 %v2579, %v2579
      %v2612 = vpack.c.b16 %v2580, %v2580
      %v2613 = vpack.c.b16 %v2581, %v2581
      %v2614 = vpack.c.b16 %v2582, %v2582
      %v2615 = vpack.c.b16 %v2583, %v2583
      %v2616 = vpack.c.b16 %v2584, %v2584
      %v2617 = vpack.c.b16 %v2585, %v2585
      %v2618 = vpack.c.b16 %v2586, %v2586
      %v2619 = vpack.c.b16 %v2587, %v2587
      %v2620 = vpack.c.b16 %v2588, %v2588
      %v2621 = vpack.c.b16 %v2589, %v2589
      %v2622 = vpack.c.b16 %v2590, %v2590
      %v2623 = vpack.c.b16 %v2591, %v2591
      %v2624 = vpack.c.b16 %v2592, %v2592
      %v2625 = vpack.c.b16 %v2593, %v2593
      %v2626 = vpack.c.b16 %v2594, %v2594
      %v2627 = vpack.c.b16 %v2595, %v2595
      %v2628 = vpack.c.b16 %v2596, %v2596
      %v2629 = vpack.c.b16 %v2597, %v2597
      %v2630 = vpack.c.b16 %v2598, %v2598
      %v2631 = vpack.c.b16 %v2599, %v2599
      %v2632 = vpack.c.b16 %v2600, %v2600
      %v2633 = vpack.c.b16 %v2601, %v2601
      %v2634 = vpack.c.b16 %v2602, %v2602
      %v2635 = vpack.c.b16 %v2603, %v2603
      %v2636 = vpack.c.b16 %v2604, %v2604
      %v2637 = vpack.c.b16 %v2605, %v2605
      %v2638 = vpack.c.b16 %v2606, %v2606
      %v2639 = vpack.c.b16 %v2607, %v2607
      %v2640 = vpack.c.b16 %v2608, %v2608
      %v2641 = vpack.c.b16 %v2609, %v2609
      %2674 = vst [vmem:[%s413] sm:$0xf] %v2610
      %2675 = vst [vmem:[%s413 + $0x4] sm:$0xf] %v2611
      %2676 = vst [vmem:[%s413 + $0x8] sm:$0xf] %v2612
      %2677 = vst [vmem:[%s413 + $0xc] sm:$0xf] %v2613
      %2678 = vst [vmem:[%s413 + $0x10] sm:$0xf] %v2614
      %2679 = vst [vmem:[%s413 + $0x14] sm:$0xf] %v2615
      %2680 = vst [vmem:[%s413 + $0x18] sm:$0xf] %v2616
      %2681 = vst [vmem:[%s413 + $0x1c] sm:$0xf] %v2617
      %2682 = vst [vmem:[%s413 + $0x20] sm:$0xf] %v2618
      %2683 = vst [vmem:[%s413 + $0x24] sm:$0xf] %v2619
      %2684 = vst [vmem:[%s413 + $0x28] sm:$0xf] %v2620
      %2685 = vst [vmem:[%s413 + $0x2c] sm:$0xf] %v2621
      %2686 = vst [vmem:[%s413 + $0x30] sm:$0xf] %v2622
      %2687 = vst [vmem:[%s413 + $0x34] sm:$0xf] %v2623
      %2688 = vst [vmem:[%s413 + $0x38] sm:$0xf] %v2624
      %2689 = vst [vmem:[%s413 + $0x3c] sm:$0xf] %v2625
      %2690 = vst [vmem:[%s413 + $0x40] sm:$0xf] %v2626
      %2691 = vst [vmem:[%s413 + $0x44] sm:$0xf] %v2627
      %2692 = vst [vmem:[%s413 + $0x48] sm:$0xf] %v2628
      %2693 = vst [vmem:[%s413 + $0x4c] sm:$0xf] %v2629
      %2694 = vst [vmem:[%s413 + $0x50] sm:$0xf] %v2630
      %2695 = vst [vmem:[%s413 + $0x54] sm:$0xf] %v2631
      %2696 = vst [vmem:[%s413 + $0x58] sm:$0xf] %v2632
      %2697 = vst [vmem:[%s413 + $0x5c] sm:$0xf] %v2633
      %2698 = vst [vmem:[%s413 + $0x60] sm:$0xf] %v2634
      %2699 = vst [vmem:[%s413 + $0x64] sm:$0xf] %v2635
      %2700 = vst [vmem:[%s413 + $0x68] sm:$0xf] %v2636
      %2701 = vst [vmem:[%s413 + $0x6c] sm:$0xf] %v2637
      %2702 = vst [vmem:[%s413 + $0x70] sm:$0xf] %v2638
      %2703 = vst [vmem:[%s413 + $0x74] sm:$0xf] %v2639
      %2704 = vst [vmem:[%s413 + $0x78] sm:$0xf] %v2640
      %2705 = vst [vmem:[%s413 + $0x7c] sm:$0xf] %v2641
      %v2706 = vadd.f32 %v2514, %v2515
      %v2707 = vadd.f32 %v2706, %v2516
      %v2708 = vadd.f32 %v2707, %v2517
      %v2709 = vadd.f32 %v2708, %v2518
      %v2710 = vadd.f32 %v2709, %v2519
      %v2711 = vadd.f32 %v2710, %v2520
      %v2712 = vadd.f32 %v2711, %v2521
      %v2713 = vadd.f32 %v2712, %v2522
      %v2714 = vadd.f32 %v2713, %v2523
      %v2715 = vadd.f32 %v2714, %v2524
      %v2716 = vadd.f32 %v2715, %v2525
      %v2717 = vadd.f32 %v2716, %v2526
      %v2718 = vadd.f32 %v2717, %v2527
      %v2719 = vadd.f32 %v2718, %v2528
      %v2720 = vadd.f32 %v2719, %v2529
      %v2721 = vadd.f32 %v2720, %v2530
      %v2722 = vadd.f32 %v2721, %v2531
      %v2723 = vadd.f32 %v2722, %v2532
      %v2724 = vadd.f32 %v2723, %v2533
      %v2725 = vadd.f32 %v2724, %v2534
      %v2726 = vadd.f32 %v2725, %v2535
      %v2727 = vadd.f32 %v2726, %v2536
      %v2728 = vadd.f32 %v2727, %v2537
      %v2729 = vadd.f32 %v2728, %v2538
      %v2730 = vadd.f32 %v2729, %v2539
      %v2731 = vadd.f32 %v2730, %v2540
      %v2732 = vadd.f32 %v2731, %v2541
      %v2733 = vadd.f32 %v2732, %v2542
      %v2734 = vadd.f32 %v2733, %v2543
      %v2735 = vadd.f32 %v2734, %v2544
      %v2736 = vadd.f32 %v2735, %v2545
      %v2737 = vrot.slane %v2736, 4
      %v2738 = vadd.f32 %v2736, %v2737
      %v2739 = vrot.slane %v2738, 2
      %v2740 = vadd.f32 %v2738, %v2739
      %v2741 = vrot.slane %v2740, 1
      %v2742 = vadd.f32 %v2740, %v2741
      %v2743 = vmul.f32 %v2514, %v2514
      %v2744 = vmul.f32 %v2515, %v2515
      %v2745 = vmul.f32 %v2516, %v2516
      %v2746 = vmul.f32 %v2517, %v2517
      %v2747 = vmul.f32 %v2518, %v2518
      %v2748 = vmul.f32 %v2519, %v2519
      %v2749 = vmul.f32 %v2520, %v2520
      %v2750 = vmul.f32 %v2521, %v2521
      %v2751 = vmul.f32 %v2522, %v2522
      %v2752 = vmul.f32 %v2523, %v2523
      %v2753 = vmul.f32 %v2524, %v2524
      %v2754 = vmul.f32 %v2525, %v2525
      %v2755 = vmul.f32 %v2526, %v2526
      %v2756 = vmul.f32 %v2527, %v2527
      %v2757 = vmul.f32 %v2528, %v2528
      %v2758 = vmul.f32 %v2529, %v2529
      %v2759 = vmul.f32 %v2530, %v2530
      %v2760 = vmul.f32 %v2531, %v2531
      %v2761 = vmul.f32 %v2532, %v2532
      %v2762 = vmul.f32 %v2533, %v2533
      %v2763 = vmul.f32 %v2534, %v2534
      %v2764 = vmul.f32 %v2535, %v2535
      %v2765 = vmul.f32 %v2536, %v2536
      %v2766 = vmul.f32 %v2537, %v2537
      %v2767 = vmul.f32 %v2538, %v2538
      %v2768 = vmul.f32 %v2539, %v2539
      %v2769 = vmul.f32 %v2540, %v2540
      %v2770 = vmul.f32 %v2541, %v2541
      %v2771 = vmul.f32 %v2542, %v2542
      %v2772 = vmul.f32 %v2543, %v2543
      %v2773 = vmul.f32 %v2544, %v2544
      %v2774 = vmul.f32 %v2545, %v2545
      %v2775 = vadd.f32 %v2743, %v2744
      %v2776 = vadd.f32 %v2775, %v2745
      %v2777 = vadd.f32 %v2776, %v2746
      %v2778 = vadd.f32 %v2777, %v2747
      %v2779 = vadd.f32 %v2778, %v2748
      %v2780 = vadd.f32 %v2779, %v2749
      %v2781 = vadd.f32 %v2780, %v2750
      %v2782 = vadd.f32 %v2781, %v2751
      %v2783 = vadd.f32 %v2782, %v2752
      %v2784 = vadd.f32 %v2783, %v2753
      %v2785 = vadd.f32 %v2784, %v2754
      %v2786 = vadd.f32 %v2785, %v2755
      %v2787 = vadd.f32 %v2786, %v2756
      %v2788 = vadd.f32 %v2787, %v2757
      %v2789 = vadd.f32 %v2788, %v2758
      %v2790 = vadd.f32 %v2789, %v2759
      %v2791 = vadd.f32 %v2790, %v2760
      %v2792 = vadd.f32 %v2791, %v2761
      %v2793 = vadd.f32 %v2792, %v2762
      %v2794 = vadd.f32 %v2793, %v2763
      %v2795 = vadd.f32 %v2794, %v2764
      %v2796 = vadd.f32 %v2795, %v2765
      %v2797 = vadd.f32 %v2796, %v2766
      %v2798 = vadd.f32 %v2797, %v2767
      %v2799 = vadd.f32 %v2798, %v2768
      %v2800 = vadd.f32 %v2799, %v2769
      %v2801 = vadd.f32 %v2800, %v2770
      %v2802 = vadd.f32 %v2801, %v2771
      %v2803 = vadd.f32 %v2802, %v2772
      %v2804 = vadd.f32 %v2803, %v2773
      %v2805 = vadd.f32 %v2804, %v2774
      %v2806 = vrot.slane %v2805, 4
      %v2807 = vadd.f32 %v2805, %v2806
      %v2808 = vrot.slane %v2807, 2
      %v2809 = vadd.f32 %v2807, %v2808
      %v2810 = vrot.slane %v2809, 1
      %v2811 = vadd.f32 %v2809, %v2810
      %vm2812 = vcmask 1040384
      %v2813 = vsel %vm2812, %v2742, %v2811
      %vm2814 = vcmask 1041408
      %v2815 = vsel %vm2814, %v2813, 0.0
      %2816 = vst [vmem:[%s421] sm:$0xff] %v2815
      %s2817 = smul.u32 16, %s22
      %p2818 = scmp.lt.s32.totalorder %s21, 1
      %s2819 = scalar_select %p2818, %s21, 1
      %p2820 = scmp.lt.s32.totalorder %s2817, 15
      %s2821 = scalar_select %p2820, %s2817, 15
      %s2822 = smul.addr %s2821, 2
      %s2823 = smul.addr %s2819, 32
      %s2824 = sadd.s32 %s2822, %s2823
      %s2825 = smul.addr %s2824, 4
      %s2826 = scalar_lea.vmem %s4, %s2825
      %p2827 = scmp.lt.s32.totalorder %s21, 1
      %s2828 = scalar_select %p2827, %s21, 1
      %p2829 = scmp.lt.s32.totalorder %s22, 0
      %s2830 = scalar_select %p2829, %s22, 0
      %s2831 = sadd.s32 %s2830, %s2828
      %s2832 = smul.addr %s2831, 8
      %s2833 = scalar_lea.vmem %s5, %s2832
      // Predicated region
      $region37: #{double_conv_forward.4} parent=35 // pred_check
        %p2834 = pneg %p170
      $region38: #{double_conv_forward.4} parent=35 // pred_check_branch
        %2836 = sbr.rel (%p2834) target = $region40
      $region39: #{double_conv_forward.4} parent=35 // pred_region
        %s2837 = smul.u32 16, %s22
      $region40: #{double_conv_forward.4} parent=35 // pred_fallthru
        _
      // Predicated region
      $region41: #{double_conv_forward.4} parent=35 // pred_check
        %p2838 = pneg %p198
      $region42: #{double_conv_forward.4} parent=35 // pred_check_branch
        %2840 = sbr.rel (%p2838) target = $region44
      $region43: #{double_conv_forward.4} parent=35 // pred_region
        _
      $region44: #{double_conv_forward.4} parent=35 // pred_fallthru
        _
    $region36: #{double_conv_forward.4} parent=5 // pred_fallthru
      _
    %p2841 = scmp.le.s32.totalorder 2, %s12
    // Predicated region
    $region45: #{double_conv_forward.4} parent=5 // pred_check
      %p2842 = pneg %p2841
    $region46: #{double_conv_forward.4} parent=5 // pred_check_branch
      %2844 = sbr.rel (%p2842) target = $region48
    $region47: #{double_conv_forward.4} parent=5 // pred_region
      %s2845 = ssub.s32 %s12, 2
      // Predicated region
      $region49: #{double_conv_forward.4} parent=47 // pred_check
        %p2846 = pneg %p176
      $region50: #{double_conv_forward.4} parent=47 // pred_check_branch
        %2848 = sbr.rel (%p2846) target = $region52
      $region51: #{double_conv_forward.4} parent=47 // pred_region
        %s2849 = smul.u32 16, %s24
        %p2850 = scmp.lt.s32.totalorder %s23, 1
        %s2851 = scalar_select %p2850, %s23, 1
        %p2852 = scmp.lt.s32.totalorder %s2849, 15
        %s2853 = scalar_select %p2852, %s2849, 15
        %s2854 = smul.addr %s2853, 2
        %s2855 = smul.addr %s2851, 32
        %s2856 = sadd.s32 %s2854, %s2855
        %s2857 = smul.addr %s2856, 4
        %s2858 = scalar_lea.vmem %s4, %s2857
      $region52: #{double_conv_forward.4} parent=47 // pred_fallthru
        _
      // Predicated region
      $region53: #{double_conv_forward.4} parent=47 // pred_check
        %p2859 = pneg %p204
      $region54: #{double_conv_forward.4} parent=47 // pred_check_branch
        %2861 = sbr.rel (%p2859) target = $region56
      $region55: #{double_conv_forward.4} parent=47 // pred_region
        %p2862 = scmp.lt.s32.totalorder %s23, 1
        %s2863 = scalar_select %p2862, %s23, 1
        %p2864 = scmp.lt.s32.totalorder %s24, 0
        %s2865 = scalar_select %p2864, %s24, 0
        %s2866 = sadd.s32 %s2865, %s2863
        %s2867 = smul.addr %s2866, 8
        %s2868 = scalar_lea.vmem %s5, %s2867
      $region56: #{double_conv_forward.4} parent=47 // pred_fallthru
        _
    $region48: #{double_conv_forward.4} parent=5 // pred_fallthru
      _
  $region6: #{double_conv_forward.4} parent=0 // loop_footer
    %s16 = sadd.s32 1, %s12
  $region7: #{double_conv_forward.4} parent=0 // loop_footer_branch
    %11 = sbr.rel target = $region3
  $region8: #{double_conv_forward.4} parent=0 // loop_exit
    _

</llo_original>
